<compile_context>
chip_gen: v6e
topology: v6e:2x2x1
jax: 0.10.0
libtpu: 0.0.40
codegen_flags: <defaults>
</compile_context>

<pallas_src>
import math

import jax
import jax.numpy as jnp
from jax.experimental import pallas as pl
from jax.experimental.pallas import tpu as pltpu

# ---------------- config (small, consistent with the module) ----------------
NUM_LAYERS = 2
EMBED_DIM = 32
NUM_HEADS = 2
HEAD_DIM = 16
HD = NUM_HEADS * HEAD_DIM          # 32 (== EMBED_DIM)
BATCH = 2
SEQ = 8
ENC_SEQ = 8
MAX_LEN = 100
EPS = 1e-6

# rows inside the per-layer small-parameter slab (lane-dense, 128 columns)
ROW_BSELF = 0          # self-attn packed bias  [bq|bk|bv|bo]          (128 lanes)
ROW_BCROSS = 1         # cross-attn packed bias                         (128 lanes)
ROW_FFB = 2            # feed-forward bias                              (cols 0:32)
ROW_LNG = 3            # LN gammas, rows 3..5                           (cols 0:32)
ROW_LNB = 6            # LN betas,  rows 6..8                           (cols 0:32)
P_ROWS = 16            # padded to a sublane multiple

_VMEM_SPEC = pl.BlockSpec(memory_space=pltpu.MemorySpace.VMEM)


# ---------------- in-kernel helpers (traced inside the Pallas kernel) ----------------
def _softmax_last(s):
    m = jnp.max(s, axis=-1, keepdims=True)
    p = jnp.exp(s - m)
    return p * pl.reciprocal(jnp.sum(p, axis=-1, keepdims=True), approx=True)


def _split_heads(t2, s):
    """(B*s, H*Dh) -> (B*H, s, Dh) using lane slices + leading-axis concat.

    Batch order on axis 0 is [b0h0, b1h0, b0h1, b1h1]; _merge_heads uses the same order.
    (Avoids a 4-D transpose; the 16-lane slices are the same pattern the previous
    version lowered cleanly.)"""
    t3 = t2.reshape(BATCH, s, HD)
    return jnp.concatenate([t3[:, :, :HEAD_DIM], t3[:, :, HEAD_DIM:]], axis=0)


def _merge_heads(ctx):
    """(B*H, Sq, Dh) -> (B*Sq, H*Dh), head-major columns (matches Wo row order)."""
    return jnp.concatenate([ctx[:BATCH], ctx[BATCH:]], axis=-1).reshape(BATCH * SEQ, HD)


def _attention(xq2, xkv2, w, b, s_kv):
    """Multi-head attention on flattened (B*Sq, E) activations.

    w: (E, 4*HD) packed [Wq | Wk | Wv | Wo], 1/sqrt(Dh) already folded into the Wq columns.
    b: (1, 4*HD) packed [bq | bk | bv | bo] (bq likewise pre-scaled).
    xkv2 is None  -> self-attention: one fused QKV matmul.
    xkv2 not None -> cross-attention: Q rows and K/V rows stacked along sublanes so the
                     whole projection is still ONE matmul; unused quadrants are discarded.
    """
    nq = BATCH * SEQ
    if xkv2 is None:
        qkv = jnp.dot(xq2, w[:, :3 * HD], preferred_element_type=jnp.float32) + b[:, :3 * HD]
        q2 = qkv[:, :HD]
        k2 = qkv[:, HD:2 * HD]
        v2 = qkv[:, 2 * HD:3 * HD]
    else:
        stacked = jnp.concatenate([xq2, xkv2], axis=0)                       # (B*Sq+B*Skv, E)
        qkv = jnp.dot(stacked, w[:, :3 * HD], preferred_element_type=jnp.float32) + b[:, :3 * HD]
        q2 = qkv[:nq, :HD]                # decoder rows -> Q columns
        k2 = qkv[nq:, HD:2 * HD]          # encoder rows -> K columns
        v2 = qkv[nq:, 2 * HD:3 * HD]      # encoder rows -> V columns

    q = _split_heads(q2, SEQ)             # (B*H, Sq, Dh)
    k = _split_heads(k2, s_kv)            # (B*H, Skv, Dh)
    v = _split_heads(v2, s_kv)

    # one batched einsum for scores, one for context (batch dim = B*H = 4)
    sc = jnp.einsum('bqd,bkd->bqk', q, k, preferred_element_type=jnp.float32)
    ctx = jnp.einsum('bqk,bkd->bqd', _softmax_last(sc), v,
                     preferred_element_type=jnp.float32)

    # single output projection over both heads
    return jnp.dot(_merge_heads(ctx), w[:, 3 * HD:],
                   preferred_element_type=jnp.float32) + b[:, 3 * HD:]


def _global_layer_norm(y, gamma, beta):
    """Reference LayerNormalization: scalar mean / unbiased std over the WHOLE tensor,
    eps added to std, per-feature gamma/beta. Single-pass statistics; the vector divide
    is replaced by one scalar reciprocal + a vector multiply."""
    n = float(y.size)
    s1 = jnp.sum(y)
    s2 = jnp.sum(y * y)
    mean = s1 / n
    var = jnp.maximum((s2 - s1 * mean) / (n - 1.0), 0.0)
    inv = 1.0 / (jnp.sqrt(var) + EPS)          # single scalar op; exact (no approx error)
    return gamma * ((y - mean) * inv) + beta


# ---------------- the single fused Pallas kernel ----------------
def fused_decoder_kernel(x_ref, enc_ref, pe_ref, w_ref, p_ref, out_ref):
    # --- PositionalEncoding.forward: x = x + pe[:S] (broadcast over batch, no tile) ---
    x = (x_ref[...].reshape(BATCH, SEQ, EMBED_DIM) + pe_ref[...]).reshape(
        BATCH * SEQ, EMBED_DIM)
    enc = enc_ref[...]                                          # (B*Se, E)

    for l in range(NUM_LAYERS):                                 # static unroll over layers
        b_self = p_ref[l, ROW_BSELF:ROW_BSELF + 1, :]           # (1, 128)
        b_cross = p_ref[l, ROW_BCROSS:ROW_BCROSS + 1, :]        # (1, 128)
        ffb = p_ref[l, ROW_FFB:ROW_FFB + 1, :EMBED_DIM]         # (1, 32)

        def ln(j, y, _l=l):
            g = p_ref[_l, ROW_LNG + j:ROW_LNG + j + 1, :EMBED_DIM]
            bt = p_ref[_l, ROW_LNB + j:ROW_LNB + j + 1, :EMBED_DIM]
            return _global_layer_norm(y, g, bt)

        # 1) self-attention (mask path in reference is dead -> plain attention)
        a1 = _attention(x, None, w_ref[l, 0], b_self, SEQ)
        x = ln(0, x + a1)
        # 2) encoder-decoder cross-attention (fused Q+KV projection)
        a2 = _attention(x, enc, w_ref[l, 1], b_cross, ENC_SEQ)
        x = ln(1, x + a2)
        # 3) feed-forward — applied to the cross-attention output (as written in reference)
        ff = jnp.dot(a2, w_ref[l, 2, :, :EMBED_DIM],
                     preferred_element_type=jnp.float32) + ffb
        x = ln(2, x + ff)

    out_ref[...] = x


# ---------------- parameter setup (deterministic, identical init to previous version) ----------------
def _linear_init(key, in_dim, out_dim):
    kw, kb = jax.random.split(key)
    bound = 1.0 / math.sqrt(in_dim)
    w = jax.random.uniform(kw, (in_dim, out_dim), jnp.float32, -bound, bound)
    b = jax.random.uniform(kb, (1, out_dim), jnp.float32, -bound, bound)
    return w, b


def _mha_init(key):
    keys = jax.random.split(key, NUM_HEADS * 3 + 1)
    wq, wk, wv, bq, bk, bv = [], [], [], [], [], []
    for h in range(NUM_HEADS):
        w, b = _linear_init(keys[3 * h + 0], EMBED_DIM, HEAD_DIM); wq.append(w); bq.append(b)
        w, b = _linear_init(keys[3 * h + 1], EMBED_DIM, HEAD_DIM); wk.append(w); bk.append(b)
        w, b = _linear_init(keys[3 * h + 2], EMBED_DIM, HEAD_DIM); wv.append(w); bv.append(b)
    wo, bo = _linear_init(keys[-1], NUM_HEADS * HEAD_DIM, EMBED_DIM)
    return (jnp.stack(wq), jnp.stack(wk), jnp.stack(wv),
            jnp.stack(bq), jnp.stack(bk), jnp.stack(bv), wo, bo)


def init_params(key):
    params = []
    for _ in range(NUM_LAYERS):
        key, k_self, k_cross, k_ff = jax.random.split(key, 4)
        self_attn = _mha_init(k_self)
        cross_attn = _mha_init(k_cross)
        wff, bff = _linear_init(k_ff, EMBED_DIM, EMBED_DIM)
        ones = jnp.ones((1, EMBED_DIM), jnp.float32)
        zeros = jnp.zeros((1, EMBED_DIM), jnp.float32)
        params.append(self_attn + cross_attn +
                      (wff, bff, ones, zeros, ones, zeros, ones, zeros))
    return params


def _pack_attn(attn):
    """(per-head wq/wk/wv, biases, wo, bo) -> lane-dense (E,128) weight + (1,128) bias slab.
    The 1/sqrt(HEAD_DIM) score scale is folded into the Wq / bq columns here."""
    wq, wk, wv, bq, bk, bv, wo, bo = attn
    scale = 1.0 / math.sqrt(HEAD_DIM)

    def pack_w(w):            # (H, E, Dh) -> (E, H*Dh), head-major columns
        return jnp.moveaxis(w, 0, 1).reshape(EMBED_DIM, HD)

    def pack_b(b):            # (H, 1, Dh) -> (1, H*Dh)
        return b.reshape(1, HD)

    w_slab = jnp.concatenate(
        [pack_w(wq) * scale, pack_w(wk), pack_w(wv), wo], axis=1)   # (32, 128)
    b_slab = jnp.concatenate(
        [pack_b(bq) * scale, pack_b(bk), pack_b(bv), bo], axis=1)   # (1, 128)
    return w_slab, b_slab


def pack_params(params):
    """Consolidate all parameters into two packed slabs:
       w_packed: (L, 3, E, 128)  -> [self attn | cross attn | ff weight (cols 0:E)]
       p_packed: (L, 16, 128)    -> attn biases, ff bias, LN gamma/beta rows."""
    w_all, p_all = [], []
    for layer in params:
        ws, bs = _pack_attn(layer[:8])
        wc, bc = _pack_attn(layer[8:16])
        wff, bff, g1, b1, g2, b2, g3, b3 = layer[16:]

        ff_slab = jnp.zeros((EMBED_DIM, 4 * HD), jnp.float32).at[:, :EMBED_DIM].set(wff)
        w_all.append(jnp.stack([ws, wc, ff_slab]))                  # (3, 32, 128)

        p = jnp.zeros((P_ROWS, 4 * HD), jnp.float32)
        p = p.at[ROW_BSELF, :].set(bs[0])
        p = p.at[ROW_BCROSS, :].set(bc[0])
        p = p.at[ROW_FFB, :EMBED_DIM].set(bff[0])
        for i, (g, b) in enumerate(((g1, b1), (g2, b2), (g3, b3))):
            p = p.at[ROW_LNG + i, :EMBED_DIM].set(g[0])
            p = p.at[ROW_LNB + i, :EMBED_DIM].set(b[0])
        p_all.append(p)                                             # (16, 128)
    return jnp.stack(w_all), jnp.stack(p_all)


def make_positional_encoding():
    pos = jnp.arange(MAX_LEN, dtype=jnp.float32)[:, None]
    i = jnp.arange(0, EMBED_DIM, 2, dtype=jnp.float32)[None, :]
    arg = (pos / 10000.0) ** (i / EMBED_DIM)
    pe = jnp.zeros((MAX_LEN, EMBED_DIM), jnp.float32)
    pe = pe.at[:, 0::2].set(jnp.sin(arg))
    pe = pe.at[:, 1::2].set(jnp.cos(arg))
    return pe


# ---------------- wrapper: ONE pallas_call for the whole forward ----------------
@jax.jit
def transformer_decoder_forward(x, encoder_hidden, packed_params, pe):
    B, S, E = x.shape
    Se = encoder_hidden.shape[1]
    w_packed, p_packed = packed_params

    out = pl.pallas_call(
        fused_decoder_kernel,
        out_shape=jax.ShapeDtypeStruct((B * S, E), jnp.float32),
        in_specs=[_VMEM_SPEC] * 5,
        out_specs=_VMEM_SPEC,
    )(x.reshape(B * S, E), encoder_hidden.reshape(B * Se, E), pe[:S, :],
      w_packed, p_packed)
    return out.reshape(B, S, E)


if __name__ == "__main__":
    root = jax.random.PRNGKey(0)
    kx, kenc, kparams = jax.random.split(root, 3)
    x = jax.random.normal(kx, (BATCH, SEQ, EMBED_DIM), jnp.float32)
    encoder_hidden = jax.random.normal(kenc, (BATCH, ENC_SEQ, EMBED_DIM), jnp.float32)

    params = init_params(kparams)
    packed = pack_params(params)
    pe = make_positional_encoding()

    out = transformer_decoder_forward(x, encoder_hidden, packed, pe)
    out = jax.block_until_ready(out)

    assert out.shape == (BATCH, SEQ, EMBED_DIM)
    assert bool(jnp.all(jnp.isfinite(out)))
    print("KERNEL_OK")
</pallas_src>

<mosaic_0001>
module attributes {stable_mosaic.version = 11 : i64} {
  func.func @fused_decoder_kernel(%arg0: memref<16x32xf32, #tpu.memory_space<vmem>>, %arg1: memref<16x32xf32, #tpu.memory_space<vmem>>, %arg2: memref<8x32xf32, #tpu.memory_space<vmem>>, %arg3: memref<2x3x32x128xf32, #tpu.memory_space<vmem>>, %arg4: memref<2x16x128xf32, #tpu.memory_space<vmem>>, %arg5: memref<16x32xf32, #tpu.memory_space<vmem>>) attributes {dimension_semantics = [], scalar_prefetch = 0 : i64, scratch_operands = 0 : i64, tpu.core_type = #tpu.core_type<tc>} {
    %c0 = arith.constant 0 : index
    %c0_0 = arith.constant 0 : index
    %0 = vector.load %arg0[%c0, %c0_0] : memref<16x32xf32, #tpu.memory_space<vmem>>, vector<16x32xf32>
    %1 = vector.shape_cast %0 : vector<16x32xf32> to vector<2x8x32xf32>
    %c0_1 = arith.constant 0 : index
    %c0_2 = arith.constant 0 : index
    %2 = vector.load %arg2[%c0_1, %c0_2] : memref<8x32xf32, #tpu.memory_space<vmem>>, vector<8x32xf32>
    %3 = vector.shape_cast %2 : vector<8x32xf32> to vector<1x8x32xf32>
    %4 = vector.broadcast %3 : vector<1x8x32xf32> to vector<2x8x32xf32>
    %5 = arith.addf %1, %4 : vector<2x8x32xf32>
    %6 = vector.shape_cast %5 : vector<2x8x32xf32> to vector<16x32xf32>
    %c0_3 = arith.constant 0 : index
    %c0_4 = arith.constant 0 : index
    %7 = vector.load %arg1[%c0_3, %c0_4] : memref<16x32xf32, #tpu.memory_space<vmem>>, vector<16x32xf32>
    %c0_5 = arith.constant 0 : index
    %c0_6 = arith.constant 0 : index
    %c0_7 = arith.constant 0 : index
    %8 = vector.load %arg4[%c0_5, %c0_6, %c0_7] : memref<2x16x128xf32, #tpu.memory_space<vmem>>, vector<1x1x128xf32>
    %9 = vector.shape_cast %8 : vector<1x1x128xf32> to vector<1x128xf32>
    %c0_8 = arith.constant 0 : index
    %c1 = arith.constant 1 : index
    %c0_9 = arith.constant 0 : index
    %10 = vector.load %arg4[%c0_8, %c1, %c0_9] : memref<2x16x128xf32, #tpu.memory_space<vmem>>, vector<1x1x128xf32>
    %11 = vector.shape_cast %10 : vector<1x1x128xf32> to vector<1x128xf32>
    %c0_10 = arith.constant 0 : index
    %c2 = arith.constant 2 : index
    %c0_11 = arith.constant 0 : index
    %12 = vector.load %arg4[%c0_10, %c2, %c0_11] : memref<2x16x128xf32, #tpu.memory_space<vmem>>, vector<1x1x32xf32>
    %13 = vector.shape_cast %12 : vector<1x1x32xf32> to vector<1x32xf32>
    %c0_12 = arith.constant 0 : index
    %c0_13 = arith.constant 0 : index
    %c0_14 = arith.constant 0 : index
    %c0_15 = arith.constant 0 : index
    %14 = vector.load %arg3[%c0_12, %c0_13, %c0_14, %c0_15] : memref<2x3x32x128xf32, #tpu.memory_space<vmem>>, vector<1x1x32x128xf32>
    %15 = vector.shape_cast %14 : vector<1x1x32x128xf32> to vector<32x128xf32>
    %16 = vector.extract_strided_slice %15 {offsets = [0, 0], sizes = [32, 96], strides = [1, 1]} : vector<32x128xf32> to vector<32x96xf32>
    %cst = arith.constant dense<0.000000e+00> : vector<16x96xf32>
    %17 = tpu.matmul %6, %16, %cst {dimension_numbers = #tpu.dot_dimension_numbers<[1], [0], [0], [1], [0, 0, 1, 1], [], []>} : vector<16x32xf32>, vector<32x96xf32>, vector<16x96xf32> -> vector<16x96xf32>
    %18 = vector.extract_strided_slice %9 {offsets = [0, 0], sizes = [1, 96], strides = [1, 1]} : vector<1x128xf32> to vector<1x96xf32>
    %19 = vector.broadcast %18 : vector<1x96xf32> to vector<16x96xf32>
    %20 = arith.addf %17, %19 : vector<16x96xf32>
    %21 = vector.extract_strided_slice %20 {offsets = [0, 0], sizes = [16, 32], strides = [1, 1]} : vector<16x96xf32> to vector<16x32xf32>
    %22 = vector.extract_strided_slice %20 {offsets = [0, 32], sizes = [16, 32], strides = [1, 1]} : vector<16x96xf32> to vector<16x32xf32>
    %23 = vector.extract_strided_slice %20 {offsets = [0, 64], sizes = [16, 32], strides = [1, 1]} : vector<16x96xf32> to vector<16x32xf32>
    %24 = vector.shape_cast %21 : vector<16x32xf32> to vector<2x8x32xf32>
    %25 = vector.extract_strided_slice %24 {offsets = [0, 0, 0], sizes = [2, 8, 16], strides = [1, 1, 1]} : vector<2x8x32xf32> to vector<2x8x16xf32>
    %26 = vector.extract_strided_slice %24 {offsets = [0, 0, 16], sizes = [2, 8, 16], strides = [1, 1, 1]} : vector<2x8x32xf32> to vector<2x8x16xf32>
    %27 = tpu.concatenate %25, %26 in 0 : vector<2x8x16xf32>, vector<2x8x16xf32> -> vector<4x8x16xf32>
    %28 = vector.shape_cast %22 : vector<16x32xf32> to vector<2x8x32xf32>
    %29 = vector.extract_strided_slice %28 {offsets = [0, 0, 0], sizes = [2, 8, 16], strides = [1, 1, 1]} : vector<2x8x32xf32> to vector<2x8x16xf32>
    %30 = vector.extract_strided_slice %28 {offsets = [0, 0, 16], sizes = [2, 8, 16], strides = [1, 1, 1]} : vector<2x8x32xf32> to vector<2x8x16xf32>
    %31 = tpu.concatenate %29, %30 in 0 : vector<2x8x16xf32>, vector<2x8x16xf32> -> vector<4x8x16xf32>
    %32 = vector.shape_cast %23 : vector<16x32xf32> to vector<2x8x32xf32>
    %33 = vector.extract_strided_slice %32 {offsets = [0, 0, 0], sizes = [2, 8, 16], strides = [1, 1, 1]} : vector<2x8x32xf32> to vector<2x8x16xf32>
    %34 = vector.extract_strided_slice %32 {offsets = [0, 0, 16], sizes = [2, 8, 16], strides = [1, 1, 1]} : vector<2x8x32xf32> to vector<2x8x16xf32>
    %35 = tpu.concatenate %33, %34 in 0 : vector<2x8x16xf32>, vector<2x8x16xf32> -> vector<4x8x16xf32>
    "tpu.trace_start"() <{level = 10 : i32, message = "bqd,bkd->bqk"}> : () -> ()
    %cst_16 = arith.constant dense<0.000000e+00> : vector<4x8x8xf32>
    %36 = tpu.matmul %27, %31, %cst_16 {dimension_numbers = #tpu.dot_dimension_numbers<[2], [2], [1], [1], [0, 0, 0, 1, 1, 1], [0], [0]>} : vector<4x8x16xf32>, vector<4x8x16xf32>, vector<4x8x8xf32> -> vector<4x8x8xf32>
    "tpu.trace_stop"() : () -> ()
    %cst_17 = arith.constant dense<0xFF800000> : vector<4x8xf32>
    %37 = vector.multi_reduction <maximumf>, %36, %cst_17 [2] : vector<4x8x8xf32> to vector<4x8xf32>
    %38 = vector.shape_cast %37 : vector<4x8xf32> to vector<4x8x1xf32>
    %39 = vector.broadcast %38 : vector<4x8x1xf32> to vector<4x8x8xf32>
    %40 = arith.subf %36, %39 : vector<4x8x8xf32>
    %41 = math.exp %40 : vector<4x8x8xf32>
    %cst_18 = arith.constant dense<0.000000e+00> : vector<4x8xf32>
    %42 = vector.multi_reduction <add>, %41, %cst_18 [2] : vector<4x8x8xf32> to vector<4x8xf32>
    %43 = vector.shape_cast %42 : vector<4x8xf32> to vector<4x8x1xf32>
    %44 = tpu.reciprocal %43 {approx = true} : vector<4x8x1xf32> -> vector<4x8x1xf32>
    %45 = vector.broadcast %44 : vector<4x8x1xf32> to vector<4x8x8xf32>
    %46 = arith.mulf %41, %45 : vector<4x8x8xf32>
    "tpu.trace_start"() <{level = 10 : i32, message = "bqk,bkd->bqd"}> : () -> ()
    %cst_19 = arith.constant dense<0.000000e+00> : vector<4x8x16xf32>
    %47 = tpu.matmul %46, %35, %cst_19 {dimension_numbers = #tpu.dot_dimension_numbers<[2], [1], [1], [2], [0, 0, 0, 1, 1, 2], [0], [0]>} : vector<4x8x8xf32>, vector<4x8x16xf32>, vector<4x8x16xf32> -> vector<4x8x16xf32>
    "tpu.trace_stop"() : () -> ()
    %48 = vector.extract_strided_slice %47 {offsets = [0, 0, 0], sizes = [2, 8, 16], strides = [1, 1, 1]} : vector<4x8x16xf32> to vector<2x8x16xf32>
    %49 = vector.extract_strided_slice %47 {offsets = [2, 0, 0], sizes = [2, 8, 16], strides = [1, 1, 1]} : vector<4x8x16xf32> to vector<2x8x16xf32>
    %50 = tpu.concatenate %48, %49 in 2 : vector<2x8x16xf32>, vector<2x8x16xf32> -> vector<2x8x32xf32>
    %51 = vector.shape_cast %50 : vector<2x8x32xf32> to vector<16x32xf32>
    %52 = vector.extract_strided_slice %15 {offsets = [0, 96], sizes = [32, 32], strides = [1, 1]} : vector<32x128xf32> to vector<32x32xf32>
    %cst_20 = arith.constant dense<0.000000e+00> : vector<16x32xf32>
    %53 = tpu.matmul %51, %52, %cst_20 {dimension_numbers = #tpu.dot_dimension_numbers<[1], [0], [0], [1], [0, 0, 1, 1], [], []>} : vector<16x32xf32>, vector<32x32xf32>, vector<16x32xf32> -> vector<16x32xf32>
    %54 = vector.extract_strided_slice %9 {offsets = [0, 96], sizes = [1, 32], strides = [1, 1]} : vector<1x128xf32> to vector<1x32xf32>
    %55 = vector.broadcast %54 : vector<1x32xf32> to vector<16x32xf32>
    %56 = arith.addf %53, %55 : vector<16x32xf32>
    %57 = arith.addf %6, %56 : vector<16x32xf32>
    %c0_21 = arith.constant 0 : index
    %c3 = arith.constant 3 : index
    %c0_22 = arith.constant 0 : index
    %58 = vector.load %arg4[%c0_21, %c3, %c0_22] : memref<2x16x128xf32, #tpu.memory_space<vmem>>, vector<1x1x32xf32>
    %59 = vector.shape_cast %58 : vector<1x1x32xf32> to vector<1x32xf32>
    %c0_23 = arith.constant 0 : index
    %c6 = arith.constant 6 : index
    %c0_24 = arith.constant 0 : index
    %60 = vector.load %arg4[%c0_23, %c6, %c0_24] : memref<2x16x128xf32, #tpu.memory_space<vmem>>, vector<1x1x32xf32>
    %61 = vector.shape_cast %60 : vector<1x1x32xf32> to vector<1x32xf32>
    %62 = vector.shape_cast %57 : vector<16x32xf32> to vector<1x16x32xf32>
    %cst_25 = arith.constant dense<0.000000e+00> : vector<1xf32>
    %63 = vector.multi_reduction <add>, %62, %cst_25 [1, 2] : vector<1x16x32xf32> to vector<1xf32>
    %64 = vector.shape_cast %63 : vector<1xf32> to vector<1x1x1xf32>
    %65 = vector.extract %64[0, 0, 0] : f32 from vector<1x1x1xf32>
    %66 = arith.mulf %57, %57 : vector<16x32xf32>
    %67 = vector.shape_cast %66 : vector<16x32xf32> to vector<1x16x32xf32>
    %cst_26 = arith.constant dense<0.000000e+00> : vector<1xf32>
    %68 = vector.multi_reduction <add>, %67, %cst_26 [1, 2] : vector<1x16x32xf32> to vector<1xf32>
    %69 = vector.shape_cast %68 : vector<1xf32> to vector<1x1x1xf32>
    %70 = vector.extract %69[0, 0, 0] : f32 from vector<1x1x1xf32>
    %cst_27 = arith.constant 5.120000e+02 : f32
    %71 = arith.divf %65, %cst_27 : f32
    %72 = arith.mulf %65, %71 : f32
    %73 = arith.subf %70, %72 : f32
    %cst_28 = arith.constant 5.110000e+02 : f32
    %74 = arith.divf %73, %cst_28 : f32
    %cst_29 = arith.constant 0.000000e+00 : f32
    %75 = arith.maximumf %74, %cst_29 : f32
    %76 = math.sqrt %75 : f32
    %cst_30 = arith.constant 9.99999997E-7 : f32
    %77 = arith.addf %76, %cst_30 : f32
    %cst_31 = arith.constant 1.000000e+00 : f32
    %78 = arith.divf %cst_31, %77 : f32
    %79 = vector.broadcast %71 : f32 to vector<16x32xf32>
    %80 = arith.subf %57, %79 : vector<16x32xf32>
    %81 = vector.broadcast %78 : f32 to vector<16x32xf32>
    %82 = arith.mulf %80, %81 : vector<16x32xf32>
    %83 = vector.broadcast %59 : vector<1x32xf32> to vector<16x32xf32>
    %84 = arith.mulf %83, %82 : vector<16x32xf32>
    %85 = vector.broadcast %61 : vector<1x32xf32> to vector<16x32xf32>
    %86 = arith.addf %84, %85 : vector<16x32xf32>
    %c0_32 = arith.constant 0 : index
    %c1_33 = arith.constant 1 : index
    %c0_34 = arith.constant 0 : index
    %c0_35 = arith.constant 0 : index
    %87 = vector.load %arg3[%c0_32, %c1_33, %c0_34, %c0_35] : memref<2x3x32x128xf32, #tpu.memory_space<vmem>>, vector<1x1x32x128xf32>
    %88 = vector.shape_cast %87 : vector<1x1x32x128xf32> to vector<32x128xf32>
    %89 = tpu.concatenate %86, %7 in 0 : vector<16x32xf32>, vector<16x32xf32> -> vector<32x32xf32>
    %90 = vector.extract_strided_slice %88 {offsets = [0, 0], sizes = [32, 96], strides = [1, 1]} : vector<32x128xf32> to vector<32x96xf32>
    %cst_36 = arith.constant dense<0.000000e+00> : vector<32x96xf32>
    %91 = tpu.matmul %89, %90, %cst_36 {dimension_numbers = #tpu.dot_dimension_numbers<[1], [0], [0], [1], [0, 0, 1, 1], [], []>} : vector<32x32xf32>, vector<32x96xf32>, vector<32x96xf32> -> vector<32x96xf32>
    %92 = vector.extract_strided_slice %11 {offsets = [0, 0], sizes = [1, 96], strides = [1, 1]} : vector<1x128xf32> to vector<1x96xf32>
    %93 = vector.broadcast %92 : vector<1x96xf32> to vector<32x96xf32>
    %94 = arith.addf %91, %93 : vector<32x96xf32>
    %95 = vector.extract_strided_slice %94 {offsets = [0, 0], sizes = [16, 32], strides = [1, 1]} : vector<32x96xf32> to vector<16x32xf32>
    %96 = vector.extract_strided_slice %94 {offsets = [16, 32], sizes = [16, 32], strides = [1, 1]} : vector<32x96xf32> to vector<16x32xf32>
    %97 = vector.extract_strided_slice %94 {offsets = [16, 64], sizes = [16, 32], strides = [1, 1]} : vector<32x96xf32> to vector<16x32xf32>
    %98 = vector.shape_cast %95 : vector<16x32xf32> to vector<2x8x32xf32>
    %99 = vector.extract_strided_slice %98 {offsets = [0, 0, 0], sizes = [2, 8, 16], strides = [1, 1, 1]} : vector<2x8x32xf32> to vector<2x8x16xf32>
    %100 = vector.extract_strided_slice %98 {offsets = [0, 0, 16], sizes = [2, 8, 16], strides = [1, 1, 1]} : vector<2x8x32xf32> to vector<2x8x16xf32>
    %101 = tpu.concatenate %99, %100 in 0 : vector<2x8x16xf32>, vector<2x8x16xf32> -> vector<4x8x16xf32>
    %102 = vector.shape_cast %96 : vector<16x32xf32> to vector<2x8x32xf32>
    %103 = vector.extract_strided_slice %102 {offsets = [0, 0, 0], sizes = [2, 8, 16], strides = [1, 1, 1]} : vector<2x8x32xf32> to vector<2x8x16xf32>
    %104 = vector.extract_strided_slice %102 {offsets = [0, 0, 16], sizes = [2, 8, 16], strides = [1, 1, 1]} : vector<2x8x32xf32> to vector<2x8x16xf32>
    %105 = tpu.concatenate %103, %104 in 0 : vector<2x8x16xf32>, vector<2x8x16xf32> -> vector<4x8x16xf32>
    %106 = vector.shape_cast %97 : vector<16x32xf32> to vector<2x8x32xf32>
    %107 = vector.extract_strided_slice %106 {offsets = [0, 0, 0], sizes = [2, 8, 16], strides = [1, 1, 1]} : vector<2x8x32xf32> to vector<2x8x16xf32>
    %108 = vector.extract_strided_slice %106 {offsets = [0, 0, 16], sizes = [2, 8, 16], strides = [1, 1, 1]} : vector<2x8x32xf32> to vector<2x8x16xf32>
    %109 = tpu.concatenate %107, %108 in 0 : vector<2x8x16xf32>, vector<2x8x16xf32> -> vector<4x8x16xf32>
    "tpu.trace_start"() <{level = 10 : i32, message = "bqd,bkd->bqk"}> : () -> ()
    %cst_37 = arith.constant dense<0.000000e+00> : vector<4x8x8xf32>
    %110 = tpu.matmul %101, %105, %cst_37 {dimension_numbers = #tpu.dot_dimension_numbers<[2], [2], [1], [1], [0, 0, 0, 1, 1, 1], [0], [0]>} : vector<4x8x16xf32>, vector<4x8x16xf32>, vector<4x8x8xf32> -> vector<4x8x8xf32>
    "tpu.trace_stop"() : () -> ()
    %cst_38 = arith.constant dense<0xFF800000> : vector<4x8xf32>
    %111 = vector.multi_reduction <maximumf>, %110, %cst_38 [2] : vector<4x8x8xf32> to vector<4x8xf32>
    %112 = vector.shape_cast %111 : vector<4x8xf32> to vector<4x8x1xf32>
    %113 = vector.broadcast %112 : vector<4x8x1xf32> to vector<4x8x8xf32>
    %114 = arith.subf %110, %113 : vector<4x8x8xf32>
    %115 = math.exp %114 : vector<4x8x8xf32>
    %cst_39 = arith.constant dense<0.000000e+00> : vector<4x8xf32>
    %116 = vector.multi_reduction <add>, %115, %cst_39 [2] : vector<4x8x8xf32> to vector<4x8xf32>
    %117 = vector.shape_cast %116 : vector<4x8xf32> to vector<4x8x1xf32>
    %118 = tpu.reciprocal %117 {approx = true} : vector<4x8x1xf32> -> vector<4x8x1xf32>
    %119 = vector.broadcast %118 : vector<4x8x1xf32> to vector<4x8x8xf32>
    %120 = arith.mulf %115, %119 : vector<4x8x8xf32>
    "tpu.trace_start"() <{level = 10 : i32, message = "bqk,bkd->bqd"}> : () -> ()
    %cst_40 = arith.constant dense<0.000000e+00> : vector<4x8x16xf32>
    %121 = tpu.matmul %120, %109, %cst_40 {dimension_numbers = #tpu.dot_dimension_numbers<[2], [1], [1], [2], [0, 0, 0, 1, 1, 2], [0], [0]>} : vector<4x8x8xf32>, vector<4x8x16xf32>, vector<4x8x16xf32> -> vector<4x8x16xf32>
    "tpu.trace_stop"() : () -> ()
    %122 = vector.extract_strided_slice %121 {offsets = [0, 0, 0], sizes = [2, 8, 16], strides = [1, 1, 1]} : vector<4x8x16xf32> to vector<2x8x16xf32>
    %123 = vector.extract_strided_slice %121 {offsets = [2, 0, 0], sizes = [2, 8, 16], strides = [1, 1, 1]} : vector<4x8x16xf32> to vector<2x8x16xf32>
    %124 = tpu.concatenate %122, %123 in 2 : vector<2x8x16xf32>, vector<2x8x16xf32> -> vector<2x8x32xf32>
    %125 = vector.shape_cast %124 : vector<2x8x32xf32> to vector<16x32xf32>
    %126 = vector.extract_strided_slice %88 {offsets = [0, 96], sizes = [32, 32], strides = [1, 1]} : vector<32x128xf32> to vector<32x32xf32>
    %cst_41 = arith.constant dense<0.000000e+00> : vector<16x32xf32>
    %127 = tpu.matmul %125, %126, %cst_41 {dimension_numbers = #tpu.dot_dimension_numbers<[1], [0], [0], [1], [0, 0, 1, 1], [], []>} : vector<16x32xf32>, vector<32x32xf32>, vector<16x32xf32> -> vector<16x32xf32>
    %128 = vector.extract_strided_slice %11 {offsets = [0, 96], sizes = [1, 32], strides = [1, 1]} : vector<1x128xf32> to vector<1x32xf32>
    %129 = vector.broadcast %128 : vector<1x32xf32> to vector<16x32xf32>
    %130 = arith.addf %127, %129 : vector<16x32xf32>
    %131 = arith.addf %86, %130 : vector<16x32xf32>
    %c0_42 = arith.constant 0 : index
    %c4 = arith.constant 4 : index
    %c0_43 = arith.constant 0 : index
    %132 = vector.load %arg4[%c0_42, %c4, %c0_43] : memref<2x16x128xf32, #tpu.memory_space<vmem>>, vector<1x1x32xf32>
    %133 = vector.shape_cast %132 : vector<1x1x32xf32> to vector<1x32xf32>
    %c0_44 = arith.constant 0 : index
    %c7 = arith.constant 7 : index
    %c0_45 = arith.constant 0 : index
    %134 = vector.load %arg4[%c0_44, %c7, %c0_45] : memref<2x16x128xf32, #tpu.memory_space<vmem>>, vector<1x1x32xf32>
    %135 = vector.shape_cast %134 : vector<1x1x32xf32> to vector<1x32xf32>
    %136 = vector.shape_cast %131 : vector<16x32xf32> to vector<1x16x32xf32>
    %cst_46 = arith.constant dense<0.000000e+00> : vector<1xf32>
    %137 = vector.multi_reduction <add>, %136, %cst_46 [1, 2] : vector<1x16x32xf32> to vector<1xf32>
    %138 = vector.shape_cast %137 : vector<1xf32> to vector<1x1x1xf32>
    %139 = vector.extract %138[0, 0, 0] : f32 from vector<1x1x1xf32>
    %140 = arith.mulf %131, %131 : vector<16x32xf32>
    %141 = vector.shape_cast %140 : vector<16x32xf32> to vector<1x16x32xf32>
    %cst_47 = arith.constant dense<0.000000e+00> : vector<1xf32>
    %142 = vector.multi_reduction <add>, %141, %cst_47 [1, 2] : vector<1x16x32xf32> to vector<1xf32>
    %143 = vector.shape_cast %142 : vector<1xf32> to vector<1x1x1xf32>
    %144 = vector.extract %143[0, 0, 0] : f32 from vector<1x1x1xf32>
    %cst_48 = arith.constant 5.120000e+02 : f32
    %145 = arith.divf %139, %cst_48 : f32
    %146 = arith.mulf %139, %145 : f32
    %147 = arith.subf %144, %146 : f32
    %cst_49 = arith.constant 5.110000e+02 : f32
    %148 = arith.divf %147, %cst_49 : f32
    %cst_50 = arith.constant 0.000000e+00 : f32
    %149 = arith.maximumf %148, %cst_50 : f32
    %150 = math.sqrt %149 : f32
    %cst_51 = arith.constant 9.99999997E-7 : f32
    %151 = arith.addf %150, %cst_51 : f32
    %cst_52 = arith.constant 1.000000e+00 : f32
    %152 = arith.divf %cst_52, %151 : f32
    %153 = vector.broadcast %145 : f32 to vector<16x32xf32>
    %154 = arith.subf %131, %153 : vector<16x32xf32>
    %155 = vector.broadcast %152 : f32 to vector<16x32xf32>
    %156 = arith.mulf %154, %155 : vector<16x32xf32>
    %157 = vector.broadcast %133 : vector<1x32xf32> to vector<16x32xf32>
    %158 = arith.mulf %157, %156 : vector<16x32xf32>
    %159 = vector.broadcast %135 : vector<1x32xf32> to vector<16x32xf32>
    %160 = arith.addf %158, %159 : vector<16x32xf32>
    %c0_53 = arith.constant 0 : index
    %c2_54 = arith.constant 2 : index
    %c0_55 = arith.constant 0 : index
    %c0_56 = arith.constant 0 : index
    %161 = vector.load %arg3[%c0_53, %c2_54, %c0_55, %c0_56] : memref<2x3x32x128xf32, #tpu.memory_space<vmem>>, vector<1x1x32x32xf32>
    %162 = vector.shape_cast %161 : vector<1x1x32x32xf32> to vector<32x32xf32>
    %cst_57 = arith.constant dense<0.000000e+00> : vector<16x32xf32>
    %163 = tpu.matmul %130, %162, %cst_57 {dimension_numbers = #tpu.dot_dimension_numbers<[1], [0], [0], [1], [0, 0, 1, 1], [], []>} : vector<16x32xf32>, vector<32x32xf32>, vector<16x32xf32> -> vector<16x32xf32>
    %164 = vector.broadcast %13 : vector<1x32xf32> to vector<16x32xf32>
    %165 = arith.addf %163, %164 : vector<16x32xf32>
    %166 = arith.addf %160, %165 : vector<16x32xf32>
    %c0_58 = arith.constant 0 : index
    %c5 = arith.constant 5 : index
    %c0_59 = arith.constant 0 : index
    %167 = vector.load %arg4[%c0_58, %c5, %c0_59] : memref<2x16x128xf32, #tpu.memory_space<vmem>>, vector<1x1x32xf32>
    %168 = vector.shape_cast %167 : vector<1x1x32xf32> to vector<1x32xf32>
    %c0_60 = arith.constant 0 : index
    %c8 = arith.constant 8 : index
    %c0_61 = arith.constant 0 : index
    %169 = vector.load %arg4[%c0_60, %c8, %c0_61] : memref<2x16x128xf32, #tpu.memory_space<vmem>>, vector<1x1x32xf32>
    %170 = vector.shape_cast %169 : vector<1x1x32xf32> to vector<1x32xf32>
    %171 = vector.shape_cast %166 : vector<16x32xf32> to vector<1x16x32xf32>
    %cst_62 = arith.constant dense<0.000000e+00> : vector<1xf32>
    %172 = vector.multi_reduction <add>, %171, %cst_62 [1, 2] : vector<1x16x32xf32> to vector<1xf32>
    %173 = vector.shape_cast %172 : vector<1xf32> to vector<1x1x1xf32>
    %174 = vector.extract %173[0, 0, 0] : f32 from vector<1x1x1xf32>
    %175 = arith.mulf %166, %166 : vector<16x32xf32>
    %176 = vector.shape_cast %175 : vector<16x32xf32> to vector<1x16x32xf32>
    %cst_63 = arith.constant dense<0.000000e+00> : vector<1xf32>
    %177 = vector.multi_reduction <add>, %176, %cst_63 [1, 2] : vector<1x16x32xf32> to vector<1xf32>
    %178 = vector.shape_cast %177 : vector<1xf32> to vector<1x1x1xf32>
    %179 = vector.extract %178[0, 0, 0] : f32 from vector<1x1x1xf32>
    %cst_64 = arith.constant 5.120000e+02 : f32
    %180 = arith.divf %174, %cst_64 : f32
    %181 = arith.mulf %174, %180 : f32
    %182 = arith.subf %179, %181 : f32
    %cst_65 = arith.constant 5.110000e+02 : f32
    %183 = arith.divf %182, %cst_65 : f32
    %cst_66 = arith.constant 0.000000e+00 : f32
    %184 = arith.maximumf %183, %cst_66 : f32
    %185 = math.sqrt %184 : f32
    %cst_67 = arith.constant 9.99999997E-7 : f32
    %186 = arith.addf %185, %cst_67 : f32
    %cst_68 = arith.constant 1.000000e+00 : f32
    %187 = arith.divf %cst_68, %186 : f32
    %188 = vector.broadcast %180 : f32 to vector<16x32xf32>
    %189 = arith.subf %166, %188 : vector<16x32xf32>
    %190 = vector.broadcast %187 : f32 to vector<16x32xf32>
    %191 = arith.mulf %189, %190 : vector<16x32xf32>
    %192 = vector.broadcast %168 : vector<1x32xf32> to vector<16x32xf32>
    %193 = arith.mulf %192, %191 : vector<16x32xf32>
    %194 = vector.broadcast %170 : vector<1x32xf32> to vector<16x32xf32>
    %195 = arith.addf %193, %194 : vector<16x32xf32>
    %c1_69 = arith.constant 1 : index
    %c0_70 = arith.constant 0 : index
    %c0_71 = arith.constant 0 : index
    %196 = vector.load %arg4[%c1_69, %c0_70, %c0_71] : memref<2x16x128xf32, #tpu.memory_space<vmem>>, vector<1x1x128xf32>
    %197 = vector.shape_cast %196 : vector<1x1x128xf32> to vector<1x128xf32>
    %c1_72 = arith.constant 1 : index
    %c1_73 = arith.constant 1 : index
    %c0_74 = arith.constant 0 : index
    %198 = vector.load %arg4[%c1_72, %c1_73, %c0_74] : memref<2x16x128xf32, #tpu.memory_space<vmem>>, vector<1x1x128xf32>
    %199 = vector.shape_cast %198 : vector<1x1x128xf32> to vector<1x128xf32>
    %c1_75 = arith.constant 1 : index
    %c2_76 = arith.constant 2 : index
    %c0_77 = arith.constant 0 : index
    %200 = vector.load %arg4[%c1_75, %c2_76, %c0_77] : memref<2x16x128xf32, #tpu.memory_space<vmem>>, vector<1x1x32xf32>
    %201 = vector.shape_cast %200 : vector<1x1x32xf32> to vector<1x32xf32>
    %c1_78 = arith.constant 1 : index
    %c0_79 = arith.constant 0 : index
    %c0_80 = arith.constant 0 : index
    %c0_81 = arith.constant 0 : index
    %202 = vector.load %arg3[%c1_78, %c0_79, %c0_80, %c0_81] : memref<2x3x32x128xf32, #tpu.memory_space<vmem>>, vector<1x1x32x128xf32>
    %203 = vector.shape_cast %202 : vector<1x1x32x128xf32> to vector<32x128xf32>
    %204 = vector.extract_strided_slice %203 {offsets = [0, 0], sizes = [32, 96], strides = [1, 1]} : vector<32x128xf32> to vector<32x96xf32>
    %cst_82 = arith.constant dense<0.000000e+00> : vector<16x96xf32>
    %205 = tpu.matmul %195, %204, %cst_82 {dimension_numbers = #tpu.dot_dimension_numbers<[1], [0], [0], [1], [0, 0, 1, 1], [], []>} : vector<16x32xf32>, vector<32x96xf32>, vector<16x96xf32> -> vector<16x96xf32>
    %206 = vector.extract_strided_slice %197 {offsets = [0, 0], sizes = [1, 96], strides = [1, 1]} : vector<1x128xf32> to vector<1x96xf32>
    %207 = vector.broadcast %206 : vector<1x96xf32> to vector<16x96xf32>
    %208 = arith.addf %205, %207 : vector<16x96xf32>
    %209 = vector.extract_strided_slice %208 {offsets = [0, 0], sizes = [16, 32], strides = [1, 1]} : vector<16x96xf32> to vector<16x32xf32>
    %210 = vector.extract_strided_slice %208 {offsets = [0, 32], sizes = [16, 32], strides = [1, 1]} : vector<16x96xf32> to vector<16x32xf32>
    %211 = vector.extract_strided_slice %208 {offsets = [0, 64], sizes = [16, 32], strides = [1, 1]} : vector<16x96xf32> to vector<16x32xf32>
    %212 = vector.shape_cast %209 : vector<16x32xf32> to vector<2x8x32xf32>
    %213 = vector.extract_strided_slice %212 {offsets = [0, 0, 0], sizes = [2, 8, 16], strides = [1, 1, 1]} : vector<2x8x32xf32> to vector<2x8x16xf32>
    %214 = vector.extract_strided_slice %212 {offsets = [0, 0, 16], sizes = [2, 8, 16], strides = [1, 1, 1]} : vector<2x8x32xf32> to vector<2x8x16xf32>
    %215 = tpu.concatenate %213, %214 in 0 : vector<2x8x16xf32>, vector<2x8x16xf32> -> vector<4x8x16xf32>
    %216 = vector.shape_cast %210 : vector<16x32xf32> to vector<2x8x32xf32>
    %217 = vector.extract_strided_slice %216 {offsets = [0, 0, 0], sizes = [2, 8, 16], strides = [1, 1, 1]} : vector<2x8x32xf32> to vector<2x8x16xf32>
    %218 = vector.extract_strided_slice %216 {offsets = [0, 0, 16], sizes = [2, 8, 16], strides = [1, 1, 1]} : vector<2x8x32xf32> to vector<2x8x16xf32>
    %219 = tpu.concatenate %217, %218 in 0 : vector<2x8x16xf32>, vector<2x8x16xf32> -> vector<4x8x16xf32>
    %220 = vector.shape_cast %211 : vector<16x32xf32> to vector<2x8x32xf32>
    %221 = vector.extract_strided_slice %220 {offsets = [0, 0, 0], sizes = [2, 8, 16], strides = [1, 1, 1]} : vector<2x8x32xf32> to vector<2x8x16xf32>
    %222 = vector.extract_strided_slice %220 {offsets = [0, 0, 16], sizes = [2, 8, 16], strides = [1, 1, 1]} : vector<2x8x32xf32> to vector<2x8x16xf32>
    %223 = tpu.concatenate %221, %222 in 0 : vector<2x8x16xf32>, vector<2x8x16xf32> -> vector<4x8x16xf32>
    "tpu.trace_start"() <{level = 10 : i32, message = "bqd,bkd->bqk"}> : () -> ()
    %cst_83 = arith.constant dense<0.000000e+00> : vector<4x8x8xf32>
    %224 = tpu.matmul %215, %219, %cst_83 {dimension_numbers = #tpu.dot_dimension_numbers<[2], [2], [1], [1], [0, 0, 0, 1, 1, 1], [0], [0]>} : vector<4x8x16xf32>, vector<4x8x16xf32>, vector<4x8x8xf32> -> vector<4x8x8xf32>
    "tpu.trace_stop"() : () -> ()
    %cst_84 = arith.constant dense<0xFF800000> : vector<4x8xf32>
    %225 = vector.multi_reduction <maximumf>, %224, %cst_84 [2] : vector<4x8x8xf32> to vector<4x8xf32>
    %226 = vector.shape_cast %225 : vector<4x8xf32> to vector<4x8x1xf32>
    %227 = vector.broadcast %226 : vector<4x8x1xf32> to vector<4x8x8xf32>
    %228 = arith.subf %224, %227 : vector<4x8x8xf32>
    %229 = math.exp %228 : vector<4x8x8xf32>
    %cst_85 = arith.constant dense<0.000000e+00> : vector<4x8xf32>
    %230 = vector.multi_reduction <add>, %229, %cst_85 [2] : vector<4x8x8xf32> to vector<4x8xf32>
    %231 = vector.shape_cast %230 : vector<4x8xf32> to vector<4x8x1xf32>
    %232 = tpu.reciprocal %231 {approx = true} : vector<4x8x1xf32> -> vector<4x8x1xf32>
    %233 = vector.broadcast %232 : vector<4x8x1xf32> to vector<4x8x8xf32>
    %234 = arith.mulf %229, %233 : vector<4x8x8xf32>
    "tpu.trace_start"() <{level = 10 : i32, message = "bqk,bkd->bqd"}> : () -> ()
    %cst_86 = arith.constant dense<0.000000e+00> : vector<4x8x16xf32>
    %235 = tpu.matmul %234, %223, %cst_86 {dimension_numbers = #tpu.dot_dimension_numbers<[2], [1], [1], [2], [0, 0, 0, 1, 1, 2], [0], [0]>} : vector<4x8x8xf32>, vector<4x8x16xf32>, vector<4x8x16xf32> -> vector<4x8x16xf32>
    "tpu.trace_stop"() : () -> ()
    %236 = vector.extract_strided_slice %235 {offsets = [0, 0, 0], sizes = [2, 8, 16], strides = [1, 1, 1]} : vector<4x8x16xf32> to vector<2x8x16xf32>
    %237 = vector.extract_strided_slice %235 {offsets = [2, 0, 0], sizes = [2, 8, 16], strides = [1, 1, 1]} : vector<4x8x16xf32> to vector<2x8x16xf32>
    %238 = tpu.concatenate %236, %237 in 2 : vector<2x8x16xf32>, vector<2x8x16xf32> -> vector<2x8x32xf32>
    %239 = vector.shape_cast %238 : vector<2x8x32xf32> to vector<16x32xf32>
    %240 = vector.extract_strided_slice %203 {offsets = [0, 96], sizes = [32, 32], strides = [1, 1]} : vector<32x128xf32> to vector<32x32xf32>
    %cst_87 = arith.constant dense<0.000000e+00> : vector<16x32xf32>
    %241 = tpu.matmul %239, %240, %cst_87 {dimension_numbers = #tpu.dot_dimension_numbers<[1], [0], [0], [1], [0, 0, 1, 1], [], []>} : vector<16x32xf32>, vector<32x32xf32>, vector<16x32xf32> -> vector<16x32xf32>
    %242 = vector.extract_strided_slice %197 {offsets = [0, 96], sizes = [1, 32], strides = [1, 1]} : vector<1x128xf32> to vector<1x32xf32>
    %243 = vector.broadcast %242 : vector<1x32xf32> to vector<16x32xf32>
    %244 = arith.addf %241, %243 : vector<16x32xf32>
    %245 = arith.addf %195, %244 : vector<16x32xf32>
    %c1_88 = arith.constant 1 : index
    %c3_89 = arith.constant 3 : index
    %c0_90 = arith.constant 0 : index
    %246 = vector.load %arg4[%c1_88, %c3_89, %c0_90] : memref<2x16x128xf32, #tpu.memory_space<vmem>>, vector<1x1x32xf32>
    %247 = vector.shape_cast %246 : vector<1x1x32xf32> to vector<1x32xf32>
    %c1_91 = arith.constant 1 : index
    %c6_92 = arith.constant 6 : index
    %c0_93 = arith.constant 0 : index
    %248 = vector.load %arg4[%c1_91, %c6_92, %c0_93] : memref<2x16x128xf32, #tpu.memory_space<vmem>>, vector<1x1x32xf32>
    %249 = vector.shape_cast %248 : vector<1x1x32xf32> to vector<1x32xf32>
    %250 = vector.shape_cast %245 : vector<16x32xf32> to vector<1x16x32xf32>
    %cst_94 = arith.constant dense<0.000000e+00> : vector<1xf32>
    %251 = vector.multi_reduction <add>, %250, %cst_94 [1, 2] : vector<1x16x32xf32> to vector<1xf32>
    %252 = vector.shape_cast %251 : vector<1xf32> to vector<1x1x1xf32>
    %253 = vector.extract %252[0, 0, 0] : f32 from vector<1x1x1xf32>
    %254 = arith.mulf %245, %245 : vector<16x32xf32>
    %255 = vector.shape_cast %254 : vector<16x32xf32> to vector<1x16x32xf32>
    %cst_95 = arith.constant dense<0.000000e+00> : vector<1xf32>
    %256 = vector.multi_reduction <add>, %255, %cst_95 [1, 2] : vector<1x16x32xf32> to vector<1xf32>
    %257 = vector.shape_cast %256 : vector<1xf32> to vector<1x1x1xf32>
    %258 = vector.extract %257[0, 0, 0] : f32 from vector<1x1x1xf32>
    %cst_96 = arith.constant 5.120000e+02 : f32
    %259 = arith.divf %253, %cst_96 : f32
    %260 = arith.mulf %253, %259 : f32
    %261 = arith.subf %258, %260 : f32
    %cst_97 = arith.constant 5.110000e+02 : f32
    %262 = arith.divf %261, %cst_97 : f32
    %cst_98 = arith.constant 0.000000e+00 : f32
    %263 = arith.maximumf %262, %cst_98 : f32
    %264 = math.sqrt %263 : f32
    %cst_99 = arith.constant 9.99999997E-7 : f32
    %265 = arith.addf %264, %cst_99 : f32
    %cst_100 = arith.constant 1.000000e+00 : f32
    %266 = arith.divf %cst_100, %265 : f32
    %267 = vector.broadcast %259 : f32 to vector<16x32xf32>
    %268 = arith.subf %245, %267 : vector<16x32xf32>
    %269 = vector.broadcast %266 : f32 to vector<16x32xf32>
    %270 = arith.mulf %268, %269 : vector<16x32xf32>
    %271 = vector.broadcast %247 : vector<1x32xf32> to vector<16x32xf32>
    %272 = arith.mulf %271, %270 : vector<16x32xf32>
    %273 = vector.broadcast %249 : vector<1x32xf32> to vector<16x32xf32>
    %274 = arith.addf %272, %273 : vector<16x32xf32>
    %c1_101 = arith.constant 1 : index
    %c1_102 = arith.constant 1 : index
    %c0_103 = arith.constant 0 : index
    %c0_104 = arith.constant 0 : index
    %275 = vector.load %arg3[%c1_101, %c1_102, %c0_103, %c0_104] : memref<2x3x32x128xf32, #tpu.memory_space<vmem>>, vector<1x1x32x128xf32>
    %276 = vector.shape_cast %275 : vector<1x1x32x128xf32> to vector<32x128xf32>
    %277 = tpu.concatenate %274, %7 in 0 : vector<16x32xf32>, vector<16x32xf32> -> vector<32x32xf32>
    %278 = vector.extract_strided_slice %276 {offsets = [0, 0], sizes = [32, 96], strides = [1, 1]} : vector<32x128xf32> to vector<32x96xf32>
    %cst_105 = arith.constant dense<0.000000e+00> : vector<32x96xf32>
    %279 = tpu.matmul %277, %278, %cst_105 {dimension_numbers = #tpu.dot_dimension_numbers<[1], [0], [0], [1], [0, 0, 1, 1], [], []>} : vector<32x32xf32>, vector<32x96xf32>, vector<32x96xf32> -> vector<32x96xf32>
    %280 = vector.extract_strided_slice %199 {offsets = [0, 0], sizes = [1, 96], strides = [1, 1]} : vector<1x128xf32> to vector<1x96xf32>
    %281 = vector.broadcast %280 : vector<1x96xf32> to vector<32x96xf32>
    %282 = arith.addf %279, %281 : vector<32x96xf32>
    %283 = vector.extract_strided_slice %282 {offsets = [0, 0], sizes = [16, 32], strides = [1, 1]} : vector<32x96xf32> to vector<16x32xf32>
    %284 = vector.extract_strided_slice %282 {offsets = [16, 32], sizes = [16, 32], strides = [1, 1]} : vector<32x96xf32> to vector<16x32xf32>
    %285 = vector.extract_strided_slice %282 {offsets = [16, 64], sizes = [16, 32], strides = [1, 1]} : vector<32x96xf32> to vector<16x32xf32>
    %286 = vector.shape_cast %283 : vector<16x32xf32> to vector<2x8x32xf32>
    %287 = vector.extract_strided_slice %286 {offsets = [0, 0, 0], sizes = [2, 8, 16], strides = [1, 1, 1]} : vector<2x8x32xf32> to vector<2x8x16xf32>
    %288 = vector.extract_strided_slice %286 {offsets = [0, 0, 16], sizes = [2, 8, 16], strides = [1, 1, 1]} : vector<2x8x32xf32> to vector<2x8x16xf32>
    %289 = tpu.concatenate %287, %288 in 0 : vector<2x8x16xf32>, vector<2x8x16xf32> -> vector<4x8x16xf32>
    %290 = vector.shape_cast %284 : vector<16x32xf32> to vector<2x8x32xf32>
    %291 = vector.extract_strided_slice %290 {offsets = [0, 0, 0], sizes = [2, 8, 16], strides = [1, 1, 1]} : vector<2x8x32xf32> to vector<2x8x16xf32>
    %292 = vector.extract_strided_slice %290 {offsets = [0, 0, 16], sizes = [2, 8, 16], strides = [1, 1, 1]} : vector<2x8x32xf32> to vector<2x8x16xf32>
    %293 = tpu.concatenate %291, %292 in 0 : vector<2x8x16xf32>, vector<2x8x16xf32> -> vector<4x8x16xf32>
    %294 = vector.shape_cast %285 : vector<16x32xf32> to vector<2x8x32xf32>
    %295 = vector.extract_strided_slice %294 {offsets = [0, 0, 0], sizes = [2, 8, 16], strides = [1, 1, 1]} : vector<2x8x32xf32> to vector<2x8x16xf32>
    %296 = vector.extract_strided_slice %294 {offsets = [0, 0, 16], sizes = [2, 8, 16], strides = [1, 1, 1]} : vector<2x8x32xf32> to vector<2x8x16xf32>
    %297 = tpu.concatenate %295, %296 in 0 : vector<2x8x16xf32>, vector<2x8x16xf32> -> vector<4x8x16xf32>
    "tpu.trace_start"() <{level = 10 : i32, message = "bqd,bkd->bqk"}> : () -> ()
    %cst_106 = arith.constant dense<0.000000e+00> : vector<4x8x8xf32>
    %298 = tpu.matmul %289, %293, %cst_106 {dimension_numbers = #tpu.dot_dimension_numbers<[2], [2], [1], [1], [0, 0, 0, 1, 1, 1], [0], [0]>} : vector<4x8x16xf32>, vector<4x8x16xf32>, vector<4x8x8xf32> -> vector<4x8x8xf32>
    "tpu.trace_stop"() : () -> ()
    %cst_107 = arith.constant dense<0xFF800000> : vector<4x8xf32>
    %299 = vector.multi_reduction <maximumf>, %298, %cst_107 [2] : vector<4x8x8xf32> to vector<4x8xf32>
    %300 = vector.shape_cast %299 : vector<4x8xf32> to vector<4x8x1xf32>
    %301 = vector.broadcast %300 : vector<4x8x1xf32> to vector<4x8x8xf32>
    %302 = arith.subf %298, %301 : vector<4x8x8xf32>
    %303 = math.exp %302 : vector<4x8x8xf32>
    %cst_108 = arith.constant dense<0.000000e+00> : vector<4x8xf32>
    %304 = vector.multi_reduction <add>, %303, %cst_108 [2] : vector<4x8x8xf32> to vector<4x8xf32>
    %305 = vector.shape_cast %304 : vector<4x8xf32> to vector<4x8x1xf32>
    %306 = tpu.reciprocal %305 {approx = true} : vector<4x8x1xf32> -> vector<4x8x1xf32>
    %307 = vector.broadcast %306 : vector<4x8x1xf32> to vector<4x8x8xf32>
    %308 = arith.mulf %303, %307 : vector<4x8x8xf32>
    "tpu.trace_start"() <{level = 10 : i32, message = "bqk,bkd->bqd"}> : () -> ()
    %cst_109 = arith.constant dense<0.000000e+00> : vector<4x8x16xf32>
    %309 = tpu.matmul %308, %297, %cst_109 {dimension_numbers = #tpu.dot_dimension_numbers<[2], [1], [1], [2], [0, 0, 0, 1, 1, 2], [0], [0]>} : vector<4x8x8xf32>, vector<4x8x16xf32>, vector<4x8x16xf32> -> vector<4x8x16xf32>
    "tpu.trace_stop"() : () -> ()
    %310 = vector.extract_strided_slice %309 {offsets = [0, 0, 0], sizes = [2, 8, 16], strides = [1, 1, 1]} : vector<4x8x16xf32> to vector<2x8x16xf32>
    %311 = vector.extract_strided_slice %309 {offsets = [2, 0, 0], sizes = [2, 8, 16], strides = [1, 1, 1]} : vector<4x8x16xf32> to vector<2x8x16xf32>
    %312 = tpu.concatenate %310, %311 in 2 : vector<2x8x16xf32>, vector<2x8x16xf32> -> vector<2x8x32xf32>
    %313 = vector.shape_cast %312 : vector<2x8x32xf32> to vector<16x32xf32>
    %314 = vector.extract_strided_slice %276 {offsets = [0, 96], sizes = [32, 32], strides = [1, 1]} : vector<32x128xf32> to vector<32x32xf32>
    %cst_110 = arith.constant dense<0.000000e+00> : vector<16x32xf32>
    %315 = tpu.matmul %313, %314, %cst_110 {dimension_numbers = #tpu.dot_dimension_numbers<[1], [0], [0], [1], [0, 0, 1, 1], [], []>} : vector<16x32xf32>, vector<32x32xf32>, vector<16x32xf32> -> vector<16x32xf32>
    %316 = vector.extract_strided_slice %199 {offsets = [0, 96], sizes = [1, 32], strides = [1, 1]} : vector<1x128xf32> to vector<1x32xf32>
    %317 = vector.broadcast %316 : vector<1x32xf32> to vector<16x32xf32>
    %318 = arith.addf %315, %317 : vector<16x32xf32>
    %319 = arith.addf %274, %318 : vector<16x32xf32>
    %c1_111 = arith.constant 1 : index
    %c4_112 = arith.constant 4 : index
    %c0_113 = arith.constant 0 : index
    %320 = vector.load %arg4[%c1_111, %c4_112, %c0_113] : memref<2x16x128xf32, #tpu.memory_space<vmem>>, vector<1x1x32xf32>
    %321 = vector.shape_cast %320 : vector<1x1x32xf32> to vector<1x32xf32>
    %c1_114 = arith.constant 1 : index
    %c7_115 = arith.constant 7 : index
    %c0_116 = arith.constant 0 : index
    %322 = vector.load %arg4[%c1_114, %c7_115, %c0_116] : memref<2x16x128xf32, #tpu.memory_space<vmem>>, vector<1x1x32xf32>
    %323 = vector.shape_cast %322 : vector<1x1x32xf32> to vector<1x32xf32>
    %324 = vector.shape_cast %319 : vector<16x32xf32> to vector<1x16x32xf32>
    %cst_117 = arith.constant dense<0.000000e+00> : vector<1xf32>
    %325 = vector.multi_reduction <add>, %324, %cst_117 [1, 2] : vector<1x16x32xf32> to vector<1xf32>
    %326 = vector.shape_cast %325 : vector<1xf32> to vector<1x1x1xf32>
    %327 = vector.extract %326[0, 0, 0] : f32 from vector<1x1x1xf32>
    %328 = arith.mulf %319, %319 : vector<16x32xf32>
    %329 = vector.shape_cast %328 : vector<16x32xf32> to vector<1x16x32xf32>
    %cst_118 = arith.constant dense<0.000000e+00> : vector<1xf32>
    %330 = vector.multi_reduction <add>, %329, %cst_118 [1, 2] : vector<1x16x32xf32> to vector<1xf32>
    %331 = vector.shape_cast %330 : vector<1xf32> to vector<1x1x1xf32>
    %332 = vector.extract %331[0, 0, 0] : f32 from vector<1x1x1xf32>
    %cst_119 = arith.constant 5.120000e+02 : f32
    %333 = arith.divf %327, %cst_119 : f32
    %334 = arith.mulf %327, %333 : f32
    %335 = arith.subf %332, %334 : f32
    %cst_120 = arith.constant 5.110000e+02 : f32
    %336 = arith.divf %335, %cst_120 : f32
    %cst_121 = arith.constant 0.000000e+00 : f32
    %337 = arith.maximumf %336, %cst_121 : f32
    %338 = math.sqrt %337 : f32
    %cst_122 = arith.constant 9.99999997E-7 : f32
    %339 = arith.addf %338, %cst_122 : f32
    %cst_123 = arith.constant 1.000000e+00 : f32
    %340 = arith.divf %cst_123, %339 : f32
    %341 = vector.broadcast %333 : f32 to vector<16x32xf32>
    %342 = arith.subf %319, %341 : vector<16x32xf32>
    %343 = vector.broadcast %340 : f32 to vector<16x32xf32>
    %344 = arith.mulf %342, %343 : vector<16x32xf32>
    %345 = vector.broadcast %321 : vector<1x32xf32> to vector<16x32xf32>
    %346 = arith.mulf %345, %344 : vector<16x32xf32>
    %347 = vector.broadcast %323 : vector<1x32xf32> to vector<16x32xf32>
    %348 = arith.addf %346, %347 : vector<16x32xf32>
    %c1_124 = arith.constant 1 : index
    %c2_125 = arith.constant 2 : index
    %c0_126 = arith.constant 0 : index
    %c0_127 = arith.constant 0 : index
    %349 = vector.load %arg3[%c1_124, %c2_125, %c0_126, %c0_127] : memref<2x3x32x128xf32, #tpu.memory_space<vmem>>, vector<1x1x32x32xf32>
    %350 = vector.shape_cast %349 : vector<1x1x32x32xf32> to vector<32x32xf32>
    %cst_128 = arith.constant dense<0.000000e+00> : vector<16x32xf32>
    %351 = tpu.matmul %318, %350, %cst_128 {dimension_numbers = #tpu.dot_dimension_numbers<[1], [0], [0], [1], [0, 0, 1, 1], [], []>} : vector<16x32xf32>, vector<32x32xf32>, vector<16x32xf32> -> vector<16x32xf32>
    %352 = vector.broadcast %201 : vector<1x32xf32> to vector<16x32xf32>
    %353 = arith.addf %351, %352 : vector<16x32xf32>
    %354 = arith.addf %348, %353 : vector<16x32xf32>
    %c1_129 = arith.constant 1 : index
    %c5_130 = arith.constant 5 : index
    %c0_131 = arith.constant 0 : index
    %355 = vector.load %arg4[%c1_129, %c5_130, %c0_131] : memref<2x16x128xf32, #tpu.memory_space<vmem>>, vector<1x1x32xf32>
    %356 = vector.shape_cast %355 : vector<1x1x32xf32> to vector<1x32xf32>
    %c1_132 = arith.constant 1 : index
    %c8_133 = arith.constant 8 : index
    %c0_134 = arith.constant 0 : index
    %357 = vector.load %arg4[%c1_132, %c8_133, %c0_134] : memref<2x16x128xf32, #tpu.memory_space<vmem>>, vector<1x1x32xf32>
    %358 = vector.shape_cast %357 : vector<1x1x32xf32> to vector<1x32xf32>
    %359 = vector.shape_cast %354 : vector<16x32xf32> to vector<1x16x32xf32>
    %cst_135 = arith.constant dense<0.000000e+00> : vector<1xf32>
    %360 = vector.multi_reduction <add>, %359, %cst_135 [1, 2] : vector<1x16x32xf32> to vector<1xf32>
    %361 = vector.shape_cast %360 : vector<1xf32> to vector<1x1x1xf32>
    %362 = vector.extract %361[0, 0, 0] : f32 from vector<1x1x1xf32>
    %363 = arith.mulf %354, %354 : vector<16x32xf32>
    %364 = vector.shape_cast %363 : vector<16x32xf32> to vector<1x16x32xf32>
    %cst_136 = arith.constant dense<0.000000e+00> : vector<1xf32>
    %365 = vector.multi_reduction <add>, %364, %cst_136 [1, 2] : vector<1x16x32xf32> to vector<1xf32>
    %366 = vector.shape_cast %365 : vector<1xf32> to vector<1x1x1xf32>
    %367 = vector.extract %366[0, 0, 0] : f32 from vector<1x1x1xf32>
    %cst_137 = arith.constant 5.120000e+02 : f32
    %368 = arith.divf %362, %cst_137 : f32
    %369 = arith.mulf %362, %368 : f32
    %370 = arith.subf %367, %369 : f32
    %cst_138 = arith.constant 5.110000e+02 : f32
    %371 = arith.divf %370, %cst_138 : f32
    %cst_139 = arith.constant 0.000000e+00 : f32
    %372 = arith.maximumf %371, %cst_139 : f32
    %373 = math.sqrt %372 : f32
    %cst_140 = arith.constant 9.99999997E-7 : f32
    %374 = arith.addf %373, %cst_140 : f32
    %cst_141 = arith.constant 1.000000e+00 : f32
    %375 = arith.divf %cst_141, %374 : f32
    %376 = vector.broadcast %368 : f32 to vector<16x32xf32>
    %377 = arith.subf %354, %376 : vector<16x32xf32>
    %378 = vector.broadcast %375 : f32 to vector<16x32xf32>
    %379 = arith.mulf %377, %378 : vector<16x32xf32>
    %380 = vector.broadcast %356 : vector<1x32xf32> to vector<16x32xf32>
    %381 = arith.mulf %380, %379 : vector<16x32xf32>
    %382 = vector.broadcast %358 : vector<1x32xf32> to vector<16x32xf32>
    %383 = arith.addf %381, %382 : vector<16x32xf32>
    %c0_142 = arith.constant 0 : index
    %c0_143 = arith.constant 0 : index
    %384 = vector.load %arg5[%c0_142, %c0_143] : memref<16x32xf32, #tpu.memory_space<vmem>>, vector<16x32xf32>
    tpu.vector_store %arg5[%c0_142, %c0_143], %383 {strides = array<i32>} : memref<16x32xf32, #tpu.memory_space<vmem>>, vector<16x32xf32>,
    return
  }
}

</mosaic_0001>

<llo_original>
// kernel: transformer_decoder_forward.1
$region0: #{transformer_decoder_forward.1}
  #allocation0 [shape = 'u32[]', space=smem, size = 0x4, offset = 0x4, fixed_abs, tag = 'smem constant byte address 0x4 - core index']
  #allocation1 [shape = 'u32[144,128]{1,0:T(1,128)}', space=vmem, size = 0x12000, scoped, tag = 'internal scratch']
  %s0 = inlined_call_operand.vmem [shape: f32[16,32], index: 0, kind: input, shape index: {}]
  %s1 = inlined_call_operand.hbm [shape: f32[16,32], index: 1, kind: input, shape index: {}]
  %s2 = inlined_call_operand.vmem [shape: f32[8,32], index: 2, kind: input, shape index: {}]
  %s3 = inlined_call_operand.hbm [shape: f32[2,3,32,128], index: 3, kind: input, shape index: {}]
  %s4 = inlined_call_operand.vmem [shape: f32[2,16,128], index: 4, kind: input, shape index: {}]
  %s5 = inlined_call_operand.hbm [shape: f32[16,32], index: 5, kind: output, shape index: {}]
  %s6 = sld [smem:[#allocation0]]
  $region38: #{transformer_decoder_forward.1} parent=0
    _
  %s8 = ssub.s32 1, %s6
  %s9 = scalar_select 0, %s8, %s6
  $region1: #{transformer_decoder_forward.1} parent=0
    #allocation2 [shape = 'u8[8192]{0}', space=vmem, size = 0x2000, scoped, tag = 'input window, operand 1, single buffered']
    #allocation3 [shape = 's32[1]{0}', space=sflag, size = 0x4, scoped, tag = 'scoped memory for transformer_decoder_forward.1']
    #allocation4 [shape = 's32[1]{0}', space=sflag, size = 0x4, scoped, tag = 'scoped memory for transformer_decoder_forward.1']
    #allocation5 [shape = 'u8[98304]{0}', space=vmem, size = 0x18000, scoped, tag = 'input window, operand 3, single buffered']
    #allocation6 [shape = 's32[1]{0}', space=sflag, size = 0x4, scoped, tag = 'scoped memory for transformer_decoder_forward.1']
    #allocation7 [shape = 'u8[8192]{0}', space=vmem, size = 0x2000, scoped, tag = 'output window, operand 0, single buffered']
    %10 = vsyncpa [#allocation3], 0
    %11 = vsyncpa [#allocation6], 0
    %12 = vsyncpa [#allocation4], 0
    // Predicated region
    $region2: #{transformer_decoder_forward.1} parent=1 // pred_check
      _
    $region3: #{transformer_decoder_forward.1} parent=1 // pred_check_branch
      %14 = sbr.rel (0) target = $region5
    $region4: #{transformer_decoder_forward.1} parent=1 // pred_region
      _
    $region5: #{transformer_decoder_forward.1} parent=1 // pred_fallthru
      _
    // Predicated region
    $region6: #{transformer_decoder_forward.1} parent=1 // pred_check
      _
    $region7: #{transformer_decoder_forward.1} parent=1 // pred_check_branch
      %16 = sbr.rel (0) target = $region9
    $region8: #{transformer_decoder_forward.1} parent=1 // pred_region
      %s18 = ssub.s32 256, 256
      %19 = vsyncadd [#allocation3], %s18
      %s20 = sshll.u32 [#allocation2], 4
      %s21 = int_to_ptr.vmem [resolvable:$true] %s20
      %26 = dma.hbm_to_vmem [thread:$0]  %s1, 256, %s21, [#allocation3], 128, 128, 8
    $region9: #{transformer_decoder_forward.1} parent=1 // pred_fallthru
      _
    // Predicated region
    $region10: #{transformer_decoder_forward.1} parent=1 // pred_check
      _
    $region11: #{transformer_decoder_forward.1} parent=1 // pred_check_branch
      %28 = sbr.rel (0) target = $region13
    $region12: #{transformer_decoder_forward.1} parent=1 // pred_region
      _
    $region13: #{transformer_decoder_forward.1} parent=1 // pred_fallthru
      _
    // Predicated region
    $region14: #{transformer_decoder_forward.1} parent=1 // pred_check
      _
    $region15: #{transformer_decoder_forward.1} parent=1 // pred_check_branch
      %30 = sbr.rel (0) target = $region17
    $region16: #{transformer_decoder_forward.1} parent=1 // pred_region
      %s32 = ssub.s32 3072, 3072
      %33 = vsyncadd [#allocation6], %s32
      %s34 = sshll.u32 [#allocation5], 4
      %s35 = int_to_ptr.vmem [resolvable:$true] %s34
      %40 = dma.hbm_to_vmem [thread:$0]  %s3, 3072, %s35, [#allocation6], 128, 128, 8
    $region17: #{transformer_decoder_forward.1} parent=1 // pred_fallthru
      _
    // Predicated region
    $region18: #{transformer_decoder_forward.1} parent=1 // pred_check
      _
    $region19: #{transformer_decoder_forward.1} parent=1 // pred_check_branch
      %42 = sbr.rel (0) target = $region21
    $region20: #{transformer_decoder_forward.1} parent=1 // pred_region
      _
    $region21: #{transformer_decoder_forward.1} parent=1 // pred_fallthru
      _
    // Predicated region
    $region22: #{transformer_decoder_forward.1} parent=1 // pred_check
      _
    $region23: #{transformer_decoder_forward.1} parent=1 // pred_check_branch
      %44 = sbr.rel (0) target = $region25
    $region24: #{transformer_decoder_forward.1} parent=1 // pred_region
      %45 = dma.done [#allocation3], 256
    $region25: #{transformer_decoder_forward.1} parent=1 // pred_fallthru
      _
    // Predicated region
    $region26: #{transformer_decoder_forward.1} parent=1 // pred_check
      _
    $region27: #{transformer_decoder_forward.1} parent=1 // pred_check_branch
      %47 = sbr.rel (0) target = $region29
    $region28: #{transformer_decoder_forward.1} parent=1 // pred_region
      %48 = dma.done [#allocation6], 3072
    $region29: #{transformer_decoder_forward.1} parent=1 // pred_fallthru
      _
    %v49 = vld [vmem:[%s0] sm:$0xff]
    %v50 = vld [vmem:[%s0 + $0x8] sm:$0xff]
    %v51 = vld [vmem:[%s2] sm:$0xff]
    %v52 = vadd.f32 %v49, %v51
    %v53 = vadd.f32 %v50, %v51
    %v54 = vld [vmem:[#allocation2] sm:$0xff]
    %v55 = vld [vmem:[#allocation2 + $0x8] sm:$0xff]
    %v56 = vld [vmem:[%s4] sm:$0x1]
    %v57 = vld [vmem:[%s4 + $0x1] sm:$0x1]
    %v58 = vld [vmem:[%s4 + $0x2] sm:$0x1]
    %v59 = vld [vmem:[#allocation5] sm:$0xff]
    %v60 = vld [vmem:[#allocation5 + $0x8] sm:$0xff]
    %v61 = vld [vmem:[#allocation5 + $0x10] sm:$0xff]
    %v62 = vld [vmem:[#allocation5 + $0x18] sm:$0xff]
    %v63 = vlaneseq
    %v64 = vshrl.u32 %v63, 7
    %v65 = vsub.s32 0, %v64
    %v66 = vrot.slane %v56, %v65
    %vm67 = vcmask 261120
    %v69 = vsel %vm67, %v52, 0
    %v72 = vsel %vm67, %v53, 0
    %74 = vmatprep.subr.mxu0 0.0
    %75 = vmatpush1.msra.mxu0 0.0
    %76 = vmatprep.subr.mxu0 0.0
    %77 = vmatpush1.msra.mxu0 0.0
    %78 = vmatprep.subr.mxu0 0.0
    %79 = vmatpush1.msra.mxu0 0.0
    %80 = vmatprep.subr.mxu0 0.0
    %81 = vmatpush1.msra.mxu0 0.0
    %82 = vmatprep.subr.mxu0 0.0
    %83 = vmatpush1.msra.mxu0 0.0
    %84 = vmatprep.subr.mxu0 0.0
    %85 = vmatpush1.msra.mxu0 0.0
    %86 = vmatprep.subr.mxu0 0.0
    %87 = vmatpush1.msra.mxu0 0.0
    %88 = vmatprep.subr.mxu0 0.0
    %89 = vmatpush1.msra.mxu0 0.0
    %90 = vmatprep.subr.mxu0 0.0
    %91 = vmatpush1.msra.mxu0 0.0
    %92 = vmatprep.subr.mxu0 0.0
    %93 = vmatpush1.msra.mxu0 0.0
    %94 = vmatprep.subr.mxu0 0.0
    %95 = vmatpush1.msra.mxu0 0.0
    %96 = vmatprep.subr.mxu0 0.0
    %97 = vmatpush1.msra.mxu0 0.0
    %98 = vmatprep.subr.mxu0 0.0
    %99 = vmatpush1.msra.mxu0 %v62
    %100 = vmatprep.subr.mxu0 0.0
    %101 = vmatpush1.msra.mxu0 %v61
    %102 = vmatprep.subr.mxu0 0.0
    %103 = vmatpush1.msra.mxu0 %v60
    %104 = vmatprep.subr.mxu0 0.0
    %105 = vmatpush1.msra.mxu0 %v59
    %106 = vmatprep.subr.mxu0 0.0
    %107 = vmatpush2.msra.mxu0 0.0
    %108 = vmatprep.subr.mxu0 0.0
    %109 = vmatpush2.msra.mxu0 0.0
    %110 = vmatprep.subr.mxu0 0.0
    %111 = vmatpush2.msra.mxu0 0.0
    %112 = vmatprep.subr.mxu0 0.0
    %113 = vmatpush2.msra.mxu0 0.0
    %114 = vmatprep.subr.mxu0 0.0
    %115 = vmatpush2.msra.mxu0 0.0
    %116 = vmatprep.subr.mxu0 0.0
    %117 = vmatpush2.msra.mxu0 0.0
    %118 = vmatprep.subr.mxu0 0.0
    %119 = vmatpush2.msra.mxu0 0.0
    %120 = vmatprep.subr.mxu0 0.0
    %121 = vmatpush2.msra.mxu0 0.0
    %122 = vmatprep.subr.mxu0 0.0
    %123 = vmatpush2.msra.mxu0 0.0
    %124 = vmatprep.subr.mxu0 0.0
    %125 = vmatpush2.msra.mxu0 0.0
    %126 = vmatprep.subr.mxu0 0.0
    %127 = vmatpush2.msra.mxu0 0.0
    %128 = vmatprep.subr.mxu0 0.0
    %129 = vmatpush2.msra.mxu0 0.0
    %130 = vmatprep.subr.mxu0 0.0
    %131 = vmatpush2.msra.mxu0 0.0
    %132 = vmatprep.subr.mxu0 0.0
    %133 = vmatpush2.msra.mxu0 0.0
    %134 = vmatprep.subr.mxu0 0.0
    %135 = vmatpush2.msra.mxu0 0.0
    %136 = vmatprep.subr.mxu0 0.0
    %137 = vmatpush2.msra.mxu0 0.0
    %138 = vmatprep.mubr.f32.mxu0 0.0
    %139 = vmatmul.mubr.f32.gmra.mxu0 %v69
    %v140 = vpop.f32.mrf.mxu0
    %v141 = vadd.f32 %v66, %v140
    %v142 = vpop.f32.mrf.mxu0
    %143 = vmatprep.mubr.f32.mxu0 0.0
    %144 = vmatmul.mubr.f32.gmra.mxu0 %v72
    %v145 = vpop.f32.mrf.mxu0
    %v146 = vadd.f32 %v66, %v145
    %v147 = vpop.f32.mrf.mxu0
    %148 = vdwg.mxu0
    %151 = vrot.lane.b32.xlu0 %v141, 112
    %v152 = vpop.permute.xlu0 %151
    %153 = vrot.lane.b32.xlu0 %v146, 112
    %v154 = vpop.permute.xlu0 %153
    %155 = vrot.lane.b32.xlu0 %v141, 96
    %v156 = vpop.permute.xlu0 %155
    %vm157 = vcmask 130048
    %v158 = vsel %vm157, %v141, 0
    %v160 = vsel %vm157, %v156, 0
    %162 = vmatprep.subr.mxu0 0.0
    %163 = vmatpush1.xpose.msra.mxu0 0.0
    %164 = vmatprep.subr.mxu0 0.0
    %165 = vmatpush1.xpose.msra.mxu0 0.0
    %166 = vmatprep.subr.mxu0 0.0
    %167 = vmatpush1.xpose.msra.mxu0 0.0
    %168 = vmatprep.subr.mxu0 0.0
    %169 = vmatpush1.xpose.msra.mxu0 0.0
    %170 = vmatprep.subr.mxu0 0.0
    %171 = vmatpush1.xpose.msra.mxu0 0.0
    %172 = vmatprep.subr.mxu0 0.0
    %173 = vmatpush1.xpose.msra.mxu0 0.0
    %174 = vmatprep.subr.mxu0 0.0
    %175 = vmatpush1.xpose.msra.mxu0 0.0
    %176 = vmatprep.subr.mxu0 0.0
    %177 = vmatpush1.xpose.msra.mxu0 0.0
    %178 = vmatprep.subr.mxu0 0.0
    %179 = vmatpush1.xpose.msra.mxu0 0.0
    %180 = vmatprep.subr.mxu0 0.0
    %181 = vmatpush1.xpose.msra.mxu0 0.0
    %182 = vmatprep.subr.mxu0 0.0
    %183 = vmatpush1.xpose.msra.mxu0 0.0
    %184 = vmatprep.subr.mxu0 0.0
    %185 = vmatpush1.xpose.msra.mxu0 0.0
    %186 = vmatprep.subr.mxu0 0.0
    %187 = vmatpush1.xpose.msra.mxu0 0.0
    %188 = vmatprep.subr.mxu0 0.0
    %189 = vmatpush1.xpose.msra.mxu0 0.0
    %190 = vmatprep.subr.mxu0 0.0
    %191 = vmatpush1.xpose.msra.mxu0 0.0
    %192 = vmatprep.subr.mxu0 0.0
    %193 = vmatpush1.xpose.msra.mxu0 %v160
    %194 = vmatprep.subr.mxu0 0.0
    %195 = vmatpush2.xpose.msra.mxu0 0.0
    %196 = vmatprep.subr.mxu0 0.0
    %197 = vmatpush2.xpose.msra.mxu0 0.0
    %198 = vmatprep.subr.mxu0 0.0
    %199 = vmatpush2.xpose.msra.mxu0 0.0
    %200 = vmatprep.subr.mxu0 0.0
    %201 = vmatpush2.xpose.msra.mxu0 0.0
    %202 = vmatprep.subr.mxu0 0.0
    %203 = vmatpush2.xpose.msra.mxu0 0.0
    %204 = vmatprep.subr.mxu0 0.0
    %205 = vmatpush2.xpose.msra.mxu0 0.0
    %206 = vmatprep.subr.mxu0 0.0
    %207 = vmatpush2.xpose.msra.mxu0 0.0
    %208 = vmatprep.subr.mxu0 0.0
    %209 = vmatpush2.xpose.msra.mxu0 0.0
    %210 = vmatprep.subr.mxu0 0.0
    %211 = vmatpush2.xpose.msra.mxu0 0.0
    %212 = vmatprep.subr.mxu0 0.0
    %213 = vmatpush2.xpose.msra.mxu0 0.0
    %214 = vmatprep.subr.mxu0 0.0
    %215 = vmatpush2.xpose.msra.mxu0 0.0
    %216 = vmatprep.subr.mxu0 0.0
    %217 = vmatpush2.xpose.msra.mxu0 0.0
    %218 = vmatprep.subr.mxu0 0.0
    %219 = vmatpush2.xpose.msra.mxu0 0.0
    %220 = vmatprep.subr.mxu0 0.0
    %221 = vmatpush2.xpose.msra.mxu0 0.0
    %222 = vmatprep.subr.mxu0 0.0
    %223 = vmatpush2.xpose.msra.mxu0 0.0
    %224 = vmatprep.subr.mxu0 0.0
    %225 = vmatpush2.xpose.msra.mxu0 0.0
    %226 = vmatprep.mubr.f32.mxu0 0.0
    %227 = vmatmul.mubr.f32.gmra.mxu0 %v158
    %v228 = vpop.f32.mrf.mxu0
    %v229 = vadd.f32 0.0, %v228
    %v230 = vpop.f32.mrf.mxu0
    %231 = vdwg.mxu0
    %232 = vrot.lane.b32.xlu0 %v146, 96
    %v233 = vpop.permute.xlu0 %232
    %v234 = vsel %vm157, %v146, 0
    %v236 = vsel %vm157, %v233, 0
    %238 = vmatprep.subr.mxu0 0.0
    %239 = vmatpush1.xpose.msra.mxu0 0.0
    %240 = vmatprep.subr.mxu0 0.0
    %241 = vmatpush1.xpose.msra.mxu0 0.0
    %242 = vmatprep.subr.mxu0 0.0
    %243 = vmatpush1.xpose.msra.mxu0 0.0
    %244 = vmatprep.subr.mxu0 0.0
    %245 = vmatpush1.xpose.msra.mxu0 0.0
    %246 = vmatprep.subr.mxu0 0.0
    %247 = vmatpush1.xpose.msra.mxu0 0.0
    %248 = vmatprep.subr.mxu0 0.0
    %249 = vmatpush1.xpose.msra.mxu0 0.0
    %250 = vmatprep.subr.mxu0 0.0
    %251 = vmatpush1.xpose.msra.mxu0 0.0
    %252 = vmatprep.subr.mxu0 0.0
    %253 = vmatpush1.xpose.msra.mxu0 0.0
    %254 = vmatprep.subr.mxu0 0.0
    %255 = vmatpush1.xpose.msra.mxu0 0.0
    %256 = vmatprep.subr.mxu0 0.0
    %257 = vmatpush1.xpose.msra.mxu0 0.0
    %258 = vmatprep.subr.mxu0 0.0
    %259 = vmatpush1.xpose.msra.mxu0 0.0
    %260 = vmatprep.subr.mxu0 0.0
    %261 = vmatpush1.xpose.msra.mxu0 0.0
    %262 = vmatprep.subr.mxu0 0.0
    %263 = vmatpush1.xpose.msra.mxu0 0.0
    %264 = vmatprep.subr.mxu0 0.0
    %265 = vmatpush1.xpose.msra.mxu0 0.0
    %266 = vmatprep.subr.mxu0 0.0
    %267 = vmatpush1.xpose.msra.mxu0 0.0
    %268 = vmatprep.subr.mxu0 0.0
    %269 = vmatpush1.xpose.msra.mxu0 %v236
    %270 = vmatprep.subr.mxu0 0.0
    %271 = vmatpush2.xpose.msra.mxu0 0.0
    %272 = vmatprep.subr.mxu0 0.0
    %273 = vmatpush2.xpose.msra.mxu0 0.0
    %274 = vmatprep.subr.mxu0 0.0
    %275 = vmatpush2.xpose.msra.mxu0 0.0
    %276 = vmatprep.subr.mxu0 0.0
    %277 = vmatpush2.xpose.msra.mxu0 0.0
    %278 = vmatprep.subr.mxu0 0.0
    %279 = vmatpush2.xpose.msra.mxu0 0.0
    %280 = vmatprep.subr.mxu0 0.0
    %281 = vmatpush2.xpose.msra.mxu0 0.0
    %282 = vmatprep.subr.mxu0 0.0
    %283 = vmatpush2.xpose.msra.mxu0 0.0
    %284 = vmatprep.subr.mxu0 0.0
    %285 = vmatpush2.xpose.msra.mxu0 0.0
    %286 = vmatprep.subr.mxu0 0.0
    %287 = vmatpush2.xpose.msra.mxu0 0.0
    %288 = vmatprep.subr.mxu0 0.0
    %289 = vmatpush2.xpose.msra.mxu0 0.0
    %290 = vmatprep.subr.mxu0 0.0
    %291 = vmatpush2.xpose.msra.mxu0 0.0
    %292 = vmatprep.subr.mxu0 0.0
    %293 = vmatpush2.xpose.msra.mxu0 0.0
    %294 = vmatprep.subr.mxu0 0.0
    %295 = vmatpush2.xpose.msra.mxu0 0.0
    %296 = vmatprep.subr.mxu0 0.0
    %297 = vmatpush2.xpose.msra.mxu0 0.0
    %298 = vmatprep.subr.mxu0 0.0
    %299 = vmatpush2.xpose.msra.mxu0 0.0
    %300 = vmatprep.subr.mxu0 0.0
    %301 = vmatpush2.xpose.msra.mxu0 0.0
    %302 = vmatprep.mubr.f32.mxu0 0.0
    %303 = vmatmul.mubr.f32.gmra.mxu0 %v234
    %v304 = vpop.f32.mrf.mxu0
    %v305 = vadd.f32 0.0, %v304
    %v306 = vpop.f32.mrf.mxu0
    %307 = vdwg.mxu0
    %308 = vrot.lane.b32.xlu0 %v152, 96
    %v309 = vpop.permute.xlu0 %308
    %v310 = vsel %vm157, %v152, 0
    %v312 = vsel %vm157, %v309, 0
    %314 = vmatprep.subr.mxu0 0.0
    %315 = vmatpush1.xpose.msra.mxu0 0.0
    %316 = vmatprep.subr.mxu0 0.0
    %317 = vmatpush1.xpose.msra.mxu0 0.0
    %318 = vmatprep.subr.mxu0 0.0
    %319 = vmatpush1.xpose.msra.mxu0 0.0
    %320 = vmatprep.subr.mxu0 0.0
    %321 = vmatpush1.xpose.msra.mxu0 0.0
    %322 = vmatprep.subr.mxu0 0.0
    %323 = vmatpush1.xpose.msra.mxu0 0.0
    %324 = vmatprep.subr.mxu0 0.0
    %325 = vmatpush1.xpose.msra.mxu0 0.0
    %326 = vmatprep.subr.mxu0 0.0
    %327 = vmatpush1.xpose.msra.mxu0 0.0
    %328 = vmatprep.subr.mxu0 0.0
    %329 = vmatpush1.xpose.msra.mxu0 0.0
    %330 = vmatprep.subr.mxu0 0.0
    %331 = vmatpush1.xpose.msra.mxu0 0.0
    %332 = vmatprep.subr.mxu0 0.0
    %333 = vmatpush1.xpose.msra.mxu0 0.0
    %334 = vmatprep.subr.mxu0 0.0
    %335 = vmatpush1.xpose.msra.mxu0 0.0
    %336 = vmatprep.subr.mxu0 0.0
    %337 = vmatpush1.xpose.msra.mxu0 0.0
    %338 = vmatprep.subr.mxu0 0.0
    %339 = vmatpush1.xpose.msra.mxu0 0.0
    %340 = vmatprep.subr.mxu0 0.0
    %341 = vmatpush1.xpose.msra.mxu0 0.0
    %342 = vmatprep.subr.mxu0 0.0
    %343 = vmatpush1.xpose.msra.mxu0 0.0
    %344 = vmatprep.subr.mxu0 0.0
    %345 = vmatpush1.xpose.msra.mxu0 %v312
    %346 = vmatprep.subr.mxu0 0.0
    %347 = vmatpush2.xpose.msra.mxu0 0.0
    %348 = vmatprep.subr.mxu0 0.0
    %349 = vmatpush2.xpose.msra.mxu0 0.0
    %350 = vmatprep.subr.mxu0 0.0
    %351 = vmatpush2.xpose.msra.mxu0 0.0
    %352 = vmatprep.subr.mxu0 0.0
    %353 = vmatpush2.xpose.msra.mxu0 0.0
    %354 = vmatprep.subr.mxu0 0.0
    %355 = vmatpush2.xpose.msra.mxu0 0.0
    %356 = vmatprep.subr.mxu0 0.0
    %357 = vmatpush2.xpose.msra.mxu0 0.0
    %358 = vmatprep.subr.mxu0 0.0
    %359 = vmatpush2.xpose.msra.mxu0 0.0
    %360 = vmatprep.subr.mxu0 0.0
    %361 = vmatpush2.xpose.msra.mxu0 0.0
    %362 = vmatprep.subr.mxu0 0.0
    %363 = vmatpush2.xpose.msra.mxu0 0.0
    %364 = vmatprep.subr.mxu0 0.0
    %365 = vmatpush2.xpose.msra.mxu0 0.0
    %366 = vmatprep.subr.mxu0 0.0
    %367 = vmatpush2.xpose.msra.mxu0 0.0
    %368 = vmatprep.subr.mxu0 0.0
    %369 = vmatpush2.xpose.msra.mxu0 0.0
    %370 = vmatprep.subr.mxu0 0.0
    %371 = vmatpush2.xpose.msra.mxu0 0.0
    %372 = vmatprep.subr.mxu0 0.0
    %373 = vmatpush2.xpose.msra.mxu0 0.0
    %374 = vmatprep.subr.mxu0 0.0
    %375 = vmatpush2.xpose.msra.mxu0 0.0
    %376 = vmatprep.subr.mxu0 0.0
    %377 = vmatpush2.xpose.msra.mxu0 0.0
    %378 = vmatprep.mubr.f32.mxu0 0.0
    %379 = vmatmul.mubr.f32.gmra.mxu0 %v310
    %v380 = vpop.f32.mrf.mxu0
    %v381 = vadd.f32 0.0, %v380
    %v382 = vpop.f32.mrf.mxu0
    %383 = vdwg.mxu0
    %384 = vrot.lane.b32.xlu0 %v154, 96
    %v385 = vpop.permute.xlu0 %384
    %v386 = vsel %vm157, %v154, 0
    %v388 = vsel %vm157, %v385, 0
    %390 = vmatprep.subr.mxu0 0.0
    %391 = vmatpush1.xpose.msra.mxu0 0.0
    %392 = vmatprep.subr.mxu0 0.0
    %393 = vmatpush1.xpose.msra.mxu0 0.0
    %394 = vmatprep.subr.mxu0 0.0
    %395 = vmatpush1.xpose.msra.mxu0 0.0
    %396 = vmatprep.subr.mxu0 0.0
    %397 = vmatpush1.xpose.msra.mxu0 0.0
    %398 = vmatprep.subr.mxu0 0.0
    %399 = vmatpush1.xpose.msra.mxu0 0.0
    %400 = vmatprep.subr.mxu0 0.0
    %401 = vmatpush1.xpose.msra.mxu0 0.0
    %402 = vmatprep.subr.mxu0 0.0
    %403 = vmatpush1.xpose.msra.mxu0 0.0
    %404 = vmatprep.subr.mxu0 0.0
    %405 = vmatpush1.xpose.msra.mxu0 0.0
    %406 = vmatprep.subr.mxu0 0.0
    %407 = vmatpush1.xpose.msra.mxu0 0.0
    %408 = vmatprep.subr.mxu0 0.0
    %409 = vmatpush1.xpose.msra.mxu0 0.0
    %410 = vmatprep.subr.mxu0 0.0
    %411 = vmatpush1.xpose.msra.mxu0 0.0
    %412 = vmatprep.subr.mxu0 0.0
    %413 = vmatpush1.xpose.msra.mxu0 0.0
    %414 = vmatprep.subr.mxu0 0.0
    %415 = vmatpush1.xpose.msra.mxu0 0.0
    %416 = vmatprep.subr.mxu0 0.0
    %417 = vmatpush1.xpose.msra.mxu0 0.0
    %418 = vmatprep.subr.mxu0 0.0
    %419 = vmatpush1.xpose.msra.mxu0 0.0
    %420 = vmatprep.subr.mxu0 0.0
    %421 = vmatpush1.xpose.msra.mxu0 %v388
    %422 = vmatprep.subr.mxu0 0.0
    %423 = vmatpush2.xpose.msra.mxu0 0.0
    %424 = vmatprep.subr.mxu0 0.0
    %425 = vmatpush2.xpose.msra.mxu0 0.0
    %426 = vmatprep.subr.mxu0 0.0
    %427 = vmatpush2.xpose.msra.mxu0 0.0
    %428 = vmatprep.subr.mxu0 0.0
    %429 = vmatpush2.xpose.msra.mxu0 0.0
    %430 = vmatprep.subr.mxu0 0.0
    %431 = vmatpush2.xpose.msra.mxu0 0.0
    %432 = vmatprep.subr.mxu0 0.0
    %433 = vmatpush2.xpose.msra.mxu0 0.0
    %434 = vmatprep.subr.mxu0 0.0
    %435 = vmatpush2.xpose.msra.mxu0 0.0
    %436 = vmatprep.subr.mxu0 0.0
    %437 = vmatpush2.xpose.msra.mxu0 0.0
    %438 = vmatprep.subr.mxu0 0.0
    %439 = vmatpush2.xpose.msra.mxu0 0.0
    %440 = vmatprep.subr.mxu0 0.0
    %441 = vmatpush2.xpose.msra.mxu0 0.0
    %442 = vmatprep.subr.mxu0 0.0
    %443 = vmatpush2.xpose.msra.mxu0 0.0
    %444 = vmatprep.subr.mxu0 0.0
    %445 = vmatpush2.xpose.msra.mxu0 0.0
    %446 = vmatprep.subr.mxu0 0.0
    %447 = vmatpush2.xpose.msra.mxu0 0.0
    %448 = vmatprep.subr.mxu0 0.0
    %449 = vmatpush2.xpose.msra.mxu0 0.0
    %450 = vmatprep.subr.mxu0 0.0
    %451 = vmatpush2.xpose.msra.mxu0 0.0
    %452 = vmatprep.subr.mxu0 0.0
    %453 = vmatpush2.xpose.msra.mxu0 0.0
    %454 = vmatprep.mubr.f32.mxu0 0.0
    %455 = vmatmul.mubr.f32.gmra.mxu0 %v386
    %v456 = vpop.f32.mrf.mxu0
    %v457 = vadd.f32 0.0, %v456
    %v458 = vpop.f32.mrf.mxu0
    %459 = vdwg.mxu0
    %vm460 = vcmask 64512
    %v461 = vsel %vm460, %v229, -inf
    %462 = vmax.xlane.f32.xlu0 %v461
    %v463 = vpop.xlane.xlu0 %462
    %v464 = vsel %vm460, %v305, -inf
    %465 = vmax.xlane.f32.xlu0 %v464
    %v466 = vpop.xlane.xlu0 %465
    %v467 = vsel %vm460, %v381, -inf
    %468 = vmax.xlane.f32.xlu0 %v467
    %v469 = vpop.xlane.xlu0 %468
    %v470 = vsel %vm460, %v457, -inf
    %471 = vmax.xlane.f32.xlu0 %v470
    %v472 = vpop.xlane.xlu0 %471
    %v473 = vsub.f32 %v229, %v463
    %v474 = vsub.f32 %v305, %v466
    %v475 = vsub.f32 %v381, %v469
    %v476 = vsub.f32 %v457, %v472
    %v477 = vmul.f32 %v473, 1.442695
    %v478 = vpow.pop %v477
    %v479 = vmul.f32 %v474, 1.442695
    %v480 = vpow.pop %v479
    %v481 = vmul.f32 %v475, 1.442695
    %v482 = vpow.pop %v481
    %v483 = vmul.f32 %v476, 1.442695
    %v484 = vpow.pop %v483
    %v485 = vsel %vm460, %v478, 0.0
    %486 = vadd.xlane.f32.xlu0 %v485
    %v487 = vpop.xlane.xlu0 %486
    %v488 = vsel %vm460, %v480, 0.0
    %489 = vadd.xlane.f32.xlu0 %v488
    %v490 = vpop.xlane.xlu0 %489
    %v491 = vsel %vm460, %v482, 0.0
    %492 = vadd.xlane.f32.xlu0 %v491
    %v493 = vpop.xlane.xlu0 %492
    %v494 = vsel %vm460, %v484, 0.0
    %495 = vadd.xlane.f32.xlu0 %v494
    %v496 = vpop.xlane.xlu0 %495
    %v497 = vrcp.pop %v487
    %v498 = vrcp.pop %v490
    %v499 = vrcp.pop %v493
    %v500 = vrcp.pop %v496
    %v501 = vmul.f32 %v478, %v497
    %v502 = vmul.f32 %v480, %v498
    %v503 = vmul.f32 %v482, %v499
    %v504 = vmul.f32 %v484, %v500
    %505 = vrot.lane.b32.xlu0 %v141, 64
    %v506 = vpop.permute.xlu0 %505
    %v509 = vsel %vm460, %v501, 0
    %511 = vmatprep.subr.mxu0 0.0
    %512 = vmatpush1.msra.mxu0 0.0
    %513 = vmatprep.subr.mxu0 0.0
    %514 = vmatpush1.msra.mxu0 0.0
    %515 = vmatprep.subr.mxu0 0.0
    %516 = vmatpush1.msra.mxu0 0.0
    %517 = vmatprep.subr.mxu0 0.0
    %518 = vmatpush1.msra.mxu0 0.0
    %519 = vmatprep.subr.mxu0 0.0
    %520 = vmatpush1.msra.mxu0 0.0
    %521 = vmatprep.subr.mxu0 0.0
    %522 = vmatpush1.msra.mxu0 0.0
    %523 = vmatprep.subr.mxu0 0.0
    %524 = vmatpush1.msra.mxu0 0.0
    %525 = vmatprep.subr.mxu0 0.0
    %526 = vmatpush1.msra.mxu0 0.0
    %527 = vmatprep.subr.mxu0 0.0
    %528 = vmatpush1.msra.mxu0 0.0
    %529 = vmatprep.subr.mxu0 0.0
    %530 = vmatpush1.msra.mxu0 0.0
    %531 = vmatprep.subr.mxu0 0.0
    %532 = vmatpush1.msra.mxu0 0.0
    %533 = vmatprep.subr.mxu0 0.0
    %534 = vmatpush1.msra.mxu0 0.0
    %535 = vmatprep.subr.mxu0 0.0
    %536 = vmatpush1.msra.mxu0 0.0
    %537 = vmatprep.subr.mxu0 0.0
    %538 = vmatpush1.msra.mxu0 0.0
    %539 = vmatprep.subr.mxu0 0.0
    %540 = vmatpush1.msra.mxu0 0.0
    %541 = vmatprep.subr.mxu0 0.0
    %542 = vmatpush1.msra.mxu0 %v506
    %543 = vmatprep.subr.mxu0 0.0
    %544 = vmatpush2.msra.mxu0 0.0
    %545 = vmatprep.subr.mxu0 0.0
    %546 = vmatpush2.msra.mxu0 0.0
    %547 = vmatprep.subr.mxu0 0.0
    %548 = vmatpush2.msra.mxu0 0.0
    %549 = vmatprep.subr.mxu0 0.0
    %550 = vmatpush2.msra.mxu0 0.0
    %551 = vmatprep.subr.mxu0 0.0
    %552 = vmatpush2.msra.mxu0 0.0
    %553 = vmatprep.subr.mxu0 0.0
    %554 = vmatpush2.msra.mxu0 0.0
    %555 = vmatprep.subr.mxu0 0.0
    %556 = vmatpush2.msra.mxu0 0.0
    %557 = vmatprep.subr.mxu0 0.0
    %558 = vmatpush2.msra.mxu0 0.0
    %559 = vmatprep.subr.mxu0 0.0
    %560 = vmatpush2.msra.mxu0 0.0
    %561 = vmatprep.subr.mxu0 0.0
    %562 = vmatpush2.msra.mxu0 0.0
    %563 = vmatprep.subr.mxu0 0.0
    %564 = vmatpush2.msra.mxu0 0.0
    %565 = vmatprep.subr.mxu0 0.0
    %566 = vmatpush2.msra.mxu0 0.0
    %567 = vmatprep.subr.mxu0 0.0
    %568 = vmatpush2.msra.mxu0 0.0
    %569 = vmatprep.subr.mxu0 0.0
    %570 = vmatpush2.msra.mxu0 0.0
    %571 = vmatprep.subr.mxu0 0.0
    %572 = vmatpush2.msra.mxu0 0.0
    %573 = vmatprep.subr.mxu0 0.0
    %574 = vmatpush2.msra.mxu0 0.0
    %575 = vmatprep.mubr.f32.mxu0 0.0
    %576 = vmatmul.mubr.f32.gmra.mxu0 %v509
    %v577 = vpop.f32.mrf.mxu0
    %v578 = vadd.f32 0.0, %v577
    %v579 = vpop.f32.mrf.mxu0
    %580 = vdwg.mxu0
    %581 = vrot.lane.b32.xlu0 %v146, 64
    %v582 = vpop.permute.xlu0 %581
    %v585 = vsel %vm460, %v502, 0
    %587 = vmatprep.subr.mxu0 0.0
    %588 = vmatpush1.msra.mxu0 0.0
    %589 = vmatprep.subr.mxu0 0.0
    %590 = vmatpush1.msra.mxu0 0.0
    %591 = vmatprep.subr.mxu0 0.0
    %592 = vmatpush1.msra.mxu0 0.0
    %593 = vmatprep.subr.mxu0 0.0
    %594 = vmatpush1.msra.mxu0 0.0
    %595 = vmatprep.subr.mxu0 0.0
    %596 = vmatpush1.msra.mxu0 0.0
    %597 = vmatprep.subr.mxu0 0.0
    %598 = vmatpush1.msra.mxu0 0.0
    %599 = vmatprep.subr.mxu0 0.0
    %600 = vmatpush1.msra.mxu0 0.0
    %601 = vmatprep.subr.mxu0 0.0
    %602 = vmatpush1.msra.mxu0 0.0
    %603 = vmatprep.subr.mxu0 0.0
    %604 = vmatpush1.msra.mxu0 0.0
    %605 = vmatprep.subr.mxu0 0.0
    %606 = vmatpush1.msra.mxu0 0.0
    %607 = vmatprep.subr.mxu0 0.0
    %608 = vmatpush1.msra.mxu0 0.0
    %609 = vmatprep.subr.mxu0 0.0
    %610 = vmatpush1.msra.mxu0 0.0
    %611 = vmatprep.subr.mxu0 0.0
    %612 = vmatpush1.msra.mxu0 0.0
    %613 = vmatprep.subr.mxu0 0.0
    %614 = vmatpush1.msra.mxu0 0.0
    %615 = vmatprep.subr.mxu0 0.0
    %616 = vmatpush1.msra.mxu0 0.0
    %617 = vmatprep.subr.mxu0 0.0
    %618 = vmatpush1.msra.mxu0 %v582
    %619 = vmatprep.subr.mxu0 0.0
    %620 = vmatpush2.msra.mxu0 0.0
    %621 = vmatprep.subr.mxu0 0.0
    %622 = vmatpush2.msra.mxu0 0.0
    %623 = vmatprep.subr.mxu0 0.0
    %624 = vmatpush2.msra.mxu0 0.0
    %625 = vmatprep.subr.mxu0 0.0
    %626 = vmatpush2.msra.mxu0 0.0
    %627 = vmatprep.subr.mxu0 0.0
    %628 = vmatpush2.msra.mxu0 0.0
    %629 = vmatprep.subr.mxu0 0.0
    %630 = vmatpush2.msra.mxu0 0.0
    %631 = vmatprep.subr.mxu0 0.0
    %632 = vmatpush2.msra.mxu0 0.0
    %633 = vmatprep.subr.mxu0 0.0
    %634 = vmatpush2.msra.mxu0 0.0
    %635 = vmatprep.subr.mxu0 0.0
    %636 = vmatpush2.msra.mxu0 0.0
    %637 = vmatprep.subr.mxu0 0.0
    %638 = vmatpush2.msra.mxu0 0.0
    %639 = vmatprep.subr.mxu0 0.0
    %640 = vmatpush2.msra.mxu0 0.0
    %641 = vmatprep.subr.mxu0 0.0
    %642 = vmatpush2.msra.mxu0 0.0
    %643 = vmatprep.subr.mxu0 0.0
    %644 = vmatpush2.msra.mxu0 0.0
    %645 = vmatprep.subr.mxu0 0.0
    %646 = vmatpush2.msra.mxu0 0.0
    %647 = vmatprep.subr.mxu0 0.0
    %648 = vmatpush2.msra.mxu0 0.0
    %649 = vmatprep.subr.mxu0 0.0
    %650 = vmatpush2.msra.mxu0 0.0
    %651 = vmatprep.mubr.f32.mxu0 0.0
    %652 = vmatmul.mubr.f32.gmra.mxu0 %v585
    %v653 = vpop.f32.mrf.mxu0
    %v654 = vadd.f32 0.0, %v653
    %v655 = vpop.f32.mrf.mxu0
    %656 = vdwg.mxu0
    %657 = vrot.lane.b32.xlu0 %v152, 64
    %v658 = vpop.permute.xlu0 %657
    %v661 = vsel %vm460, %v503, 0
    %663 = vmatprep.subr.mxu0 0.0
    %664 = vmatpush1.msra.mxu0 0.0
    %665 = vmatprep.subr.mxu0 0.0
    %666 = vmatpush1.msra.mxu0 0.0
    %667 = vmatprep.subr.mxu0 0.0
    %668 = vmatpush1.msra.mxu0 0.0
    %669 = vmatprep.subr.mxu0 0.0
    %670 = vmatpush1.msra.mxu0 0.0
    %671 = vmatprep.subr.mxu0 0.0
    %672 = vmatpush1.msra.mxu0 0.0
    %673 = vmatprep.subr.mxu0 0.0
    %674 = vmatpush1.msra.mxu0 0.0
    %675 = vmatprep.subr.mxu0 0.0
    %676 = vmatpush1.msra.mxu0 0.0
    %677 = vmatprep.subr.mxu0 0.0
    %678 = vmatpush1.msra.mxu0 0.0
    %679 = vmatprep.subr.mxu0 0.0
    %680 = vmatpush1.msra.mxu0 0.0
    %681 = vmatprep.subr.mxu0 0.0
    %682 = vmatpush1.msra.mxu0 0.0
    %683 = vmatprep.subr.mxu0 0.0
    %684 = vmatpush1.msra.mxu0 0.0
    %685 = vmatprep.subr.mxu0 0.0
    %686 = vmatpush1.msra.mxu0 0.0
    %687 = vmatprep.subr.mxu0 0.0
    %688 = vmatpush1.msra.mxu0 0.0
    %689 = vmatprep.subr.mxu0 0.0
    %690 = vmatpush1.msra.mxu0 0.0
    %691 = vmatprep.subr.mxu0 0.0
    %692 = vmatpush1.msra.mxu0 0.0
    %693 = vmatprep.subr.mxu0 0.0
    %694 = vmatpush1.msra.mxu0 %v658
    %695 = vmatprep.subr.mxu0 0.0
    %696 = vmatpush2.msra.mxu0 0.0
    %697 = vmatprep.subr.mxu0 0.0
    %698 = vmatpush2.msra.mxu0 0.0
    %699 = vmatprep.subr.mxu0 0.0
    %700 = vmatpush2.msra.mxu0 0.0
    %701 = vmatprep.subr.mxu0 0.0
    %702 = vmatpush2.msra.mxu0 0.0
    %703 = vmatprep.subr.mxu0 0.0
    %704 = vmatpush2.msra.mxu0 0.0
    %705 = vmatprep.subr.mxu0 0.0
    %706 = vmatpush2.msra.mxu0 0.0
    %707 = vmatprep.subr.mxu0 0.0
    %708 = vmatpush2.msra.mxu0 0.0
    %709 = vmatprep.subr.mxu0 0.0
    %710 = vmatpush2.msra.mxu0 0.0
    %711 = vmatprep.subr.mxu0 0.0
    %712 = vmatpush2.msra.mxu0 0.0
    %713 = vmatprep.subr.mxu0 0.0
    %714 = vmatpush2.msra.mxu0 0.0
    %715 = vmatprep.subr.mxu0 0.0
    %716 = vmatpush2.msra.mxu0 0.0
    %717 = vmatprep.subr.mxu0 0.0
    %718 = vmatpush2.msra.mxu0 0.0
    %719 = vmatprep.subr.mxu0 0.0
    %720 = vmatpush2.msra.mxu0 0.0
    %721 = vmatprep.subr.mxu0 0.0
    %722 = vmatpush2.msra.mxu0 0.0
    %723 = vmatprep.subr.mxu0 0.0
    %724 = vmatpush2.msra.mxu0 0.0
    %725 = vmatprep.subr.mxu0 0.0
    %726 = vmatpush2.msra.mxu0 0.0
    %727 = vmatprep.mubr.f32.mxu0 0.0
    %728 = vmatmul.mubr.f32.gmra.mxu0 %v661
    %v729 = vpop.f32.mrf.mxu0
    %v730 = vadd.f32 0.0, %v729
    %v731 = vpop.f32.mrf.mxu0
    %732 = vdwg.mxu0
    %733 = vrot.lane.b32.xlu0 %v154, 64
    %v734 = vpop.permute.xlu0 %733
    %v737 = vsel %vm460, %v504, 0
    %739 = vmatprep.subr.mxu0 0.0
    %740 = vmatpush1.msra.mxu0 0.0
    %741 = vmatprep.subr.mxu0 0.0
    %742 = vmatpush1.msra.mxu0 0.0
    %743 = vmatprep.subr.mxu0 0.0
    %744 = vmatpush1.msra.mxu0 0.0
    %745 = vmatprep.subr.mxu0 0.0
    %746 = vmatpush1.msra.mxu0 0.0
    %747 = vmatprep.subr.mxu0 0.0
    %748 = vmatpush1.msra.mxu0 0.0
    %749 = vmatprep.subr.mxu0 0.0
    %750 = vmatpush1.msra.mxu0 0.0
    %751 = vmatprep.subr.mxu0 0.0
    %752 = vmatpush1.msra.mxu0 0.0
    %753 = vmatprep.subr.mxu0 0.0
    %754 = vmatpush1.msra.mxu0 0.0
    %755 = vmatprep.subr.mxu0 0.0
    %756 = vmatpush1.msra.mxu0 0.0
    %757 = vmatprep.subr.mxu0 0.0
    %758 = vmatpush1.msra.mxu0 0.0
    %759 = vmatprep.subr.mxu0 0.0
    %760 = vmatpush1.msra.mxu0 0.0
    %761 = vmatprep.subr.mxu0 0.0
    %762 = vmatpush1.msra.mxu0 0.0
    %763 = vmatprep.subr.mxu0 0.0
    %764 = vmatpush1.msra.mxu0 0.0
    %765 = vmatprep.subr.mxu0 0.0
    %766 = vmatpush1.msra.mxu0 0.0
    %767 = vmatprep.subr.mxu0 0.0
    %768 = vmatpush1.msra.mxu0 0.0
    %769 = vmatprep.subr.mxu0 0.0
    %770 = vmatpush1.msra.mxu0 %v734
    %771 = vmatprep.subr.mxu0 0.0
    %772 = vmatpush2.msra.mxu0 0.0
    %773 = vmatprep.subr.mxu0 0.0
    %774 = vmatpush2.msra.mxu0 0.0
    %775 = vmatprep.subr.mxu0 0.0
    %776 = vmatpush2.msra.mxu0 0.0
    %777 = vmatprep.subr.mxu0 0.0
    %778 = vmatpush2.msra.mxu0 0.0
    %779 = vmatprep.subr.mxu0 0.0
    %780 = vmatpush2.msra.mxu0 0.0
    %781 = vmatprep.subr.mxu0 0.0
    %782 = vmatpush2.msra.mxu0 0.0
    %783 = vmatprep.subr.mxu0 0.0
    %784 = vmatpush2.msra.mxu0 0.0
    %785 = vmatprep.subr.mxu0 0.0
    %786 = vmatpush2.msra.mxu0 0.0
    %787 = vmatprep.subr.mxu0 0.0
    %788 = vmatpush2.msra.mxu0 0.0
    %789 = vmatprep.subr.mxu0 0.0
    %790 = vmatpush2.msra.mxu0 0.0
    %791 = vmatprep.subr.mxu0 0.0
    %792 = vmatpush2.msra.mxu0 0.0
    %793 = vmatprep.subr.mxu0 0.0
    %794 = vmatpush2.msra.mxu0 0.0
    %795 = vmatprep.subr.mxu0 0.0
    %796 = vmatpush2.msra.mxu0 0.0
    %797 = vmatprep.subr.mxu0 0.0
    %798 = vmatpush2.msra.mxu0 0.0
    %799 = vmatprep.subr.mxu0 0.0
    %800 = vmatpush2.msra.mxu0 0.0
    %801 = vmatprep.subr.mxu0 0.0
    %802 = vmatpush2.msra.mxu0 0.0
    %803 = vmatprep.mubr.f32.mxu0 0.0
    %804 = vmatmul.mubr.f32.gmra.mxu0 %v737
    %v805 = vpop.f32.mrf.mxu0
    %v806 = vadd.f32 0.0, %v805
    %v807 = vpop.f32.mrf.mxu0
    %808 = vdwg.mxu0
    %811 = vrot.lane.b32.xlu0 %v730, 16
    %v812 = vpop.permute.xlu0 %811
    %813 = vrot.lane.b32.xlu0 %v806, 16
    %v814 = vpop.permute.xlu0 %813
    %v817 = vsel %vm157, %v578, %v812
    %v818 = vsel %vm157, %v654, %v814
    %823 = vrot.lane.b32.xlu0 %v59, 32
    %v824 = vpop.permute.xlu0 %823
    %825 = vrot.lane.b32.xlu0 %v60, 32
    %v826 = vpop.permute.xlu0 %825
    %827 = vrot.lane.b32.xlu0 %v61, 32
    %v828 = vpop.permute.xlu0 %827
    %829 = vrot.lane.b32.xlu0 %v62, 32
    %v830 = vpop.permute.xlu0 %829
    %836 = vrot.lane.b32.xlu0 %v66, 32
    %v837 = vpop.permute.xlu0 %836
    %v840 = vsel %vm67, %v817, 0
    %v843 = vsel %vm67, %v818, 0
    %845 = vmatprep.subr.mxu0 0.0
    %846 = vmatpush1.msra.mxu0 0.0
    %847 = vmatprep.subr.mxu0 0.0
    %848 = vmatpush1.msra.mxu0 0.0
    %849 = vmatprep.subr.mxu0 0.0
    %850 = vmatpush1.msra.mxu0 0.0
    %851 = vmatprep.subr.mxu0 0.0
    %852 = vmatpush1.msra.mxu0 0.0
    %853 = vmatprep.subr.mxu0 0.0
    %854 = vmatpush1.msra.mxu0 0.0
    %855 = vmatprep.subr.mxu0 0.0
    %856 = vmatpush1.msra.mxu0 0.0
    %857 = vmatprep.subr.mxu0 0.0
    %858 = vmatpush1.msra.mxu0 0.0
    %859 = vmatprep.subr.mxu0 0.0
    %860 = vmatpush1.msra.mxu0 0.0
    %861 = vmatprep.subr.mxu0 0.0
    %862 = vmatpush1.msra.mxu0 0.0
    %863 = vmatprep.subr.mxu0 0.0
    %864 = vmatpush1.msra.mxu0 0.0
    %865 = vmatprep.subr.mxu0 0.0
    %866 = vmatpush1.msra.mxu0 0.0
    %867 = vmatprep.subr.mxu0 0.0
    %868 = vmatpush1.msra.mxu0 0.0
    %869 = vmatprep.subr.mxu0 0.0
    %870 = vmatpush1.msra.mxu0 %v830
    %871 = vmatprep.subr.mxu0 0.0
    %872 = vmatpush1.msra.mxu0 %v828
    %873 = vmatprep.subr.mxu0 0.0
    %874 = vmatpush1.msra.mxu0 %v826
    %875 = vmatprep.subr.mxu0 0.0
    %876 = vmatpush1.msra.mxu0 %v824
    %877 = vmatprep.subr.mxu0 0.0
    %878 = vmatpush2.msra.mxu0 0.0
    %879 = vmatprep.subr.mxu0 0.0
    %880 = vmatpush2.msra.mxu0 0.0
    %881 = vmatprep.subr.mxu0 0.0
    %882 = vmatpush2.msra.mxu0 0.0
    %883 = vmatprep.subr.mxu0 0.0
    %884 = vmatpush2.msra.mxu0 0.0
    %885 = vmatprep.subr.mxu0 0.0
    %886 = vmatpush2.msra.mxu0 0.0
    %887 = vmatprep.subr.mxu0 0.0
    %888 = vmatpush2.msra.mxu0 0.0
    %889 = vmatprep.subr.mxu0 0.0
    %890 = vmatpush2.msra.mxu0 0.0
    %891 = vmatprep.subr.mxu0 0.0
    %892 = vmatpush2.msra.mxu0 0.0
    %893 = vmatprep.subr.mxu0 0.0
    %894 = vmatpush2.msra.mxu0 0.0
    %895 = vmatprep.subr.mxu0 0.0
    %896 = vmatpush2.msra.mxu0 0.0
    %897 = vmatprep.subr.mxu0 0.0
    %898 = vmatpush2.msra.mxu0 0.0
    %899 = vmatprep.subr.mxu0 0.0
    %900 = vmatpush2.msra.mxu0 0.0
    %901 = vmatprep.subr.mxu0 0.0
    %902 = vmatpush2.msra.mxu0 0.0
    %903 = vmatprep.subr.mxu0 0.0
    %904 = vmatpush2.msra.mxu0 0.0
    %905 = vmatprep.subr.mxu0 0.0
    %906 = vmatpush2.msra.mxu0 0.0
    %907 = vmatprep.subr.mxu0 0.0
    %908 = vmatpush2.msra.mxu0 0.0
    %909 = vmatprep.mubr.f32.mxu0 0.0
    %910 = vmatmul.mubr.f32.gmra.mxu0 %v840
    %v911 = vpop.f32.mrf.mxu0
    %v912 = vadd.f32 %v837, %v911
    %v913 = vpop.f32.mrf.mxu0
    %914 = vmatprep.mubr.f32.mxu0 0.0
    %915 = vmatmul.mubr.f32.gmra.mxu0 %v843
    %v916 = vpop.f32.mrf.mxu0
    %v917 = vadd.f32 %v837, %v916
    %v918 = vpop.f32.mrf.mxu0
    %919 = vdwg.mxu0
    %v920 = vadd.f32 %v52, %v912
    %v921 = vadd.f32 %v53, %v917
    %v922 = vld [vmem:[%s4 + $0x3] sm:$0x1]
    %v923 = vld [vmem:[%s4 + $0x6] sm:$0x1]
    %v924 = vsel %vm67, %v920, 0.0
    %v925 = vsel %vm67, %v921, 0.0
    %v926 = vadd.f32 %v924, %v925
    %927 = vadd.xlane.f32.xlu0 %v926
    %v928 = vpop.xlane.xlu0 %927
    %v929 = vrot.slane %v928, 4
    %v930 = vadd.f32 %v928, %v929
    %v931 = vrot.slane %v930, 2
    %v932 = vadd.f32 %v930, %v931
    %v933 = vrot.slane %v932, 1
    %v934 = vadd.f32 %v932, %v933
    %s935 = vtos %v934
    %v936 = vmul.f32 %v920, %v920
    %v937 = vmul.f32 %v921, %v921
    %v938 = vsel %vm67, %v936, 0.0
    %v939 = vsel %vm67, %v937, 0.0
    %v940 = vadd.f32 %v938, %v939
    %941 = vadd.xlane.f32.xlu0 %v940
    %v942 = vpop.xlane.xlu0 %941
    %v943 = vrot.slane %v942, 4
    %v944 = vadd.f32 %v942, %v943
    %v945 = vrot.slane %v944, 2
    %v946 = vadd.f32 %v944, %v945
    %v947 = vrot.slane %v946, 1
    %v948 = vadd.f32 %v946, %v947
    %s949 = vtos %v948
    %v950 = vrcp.pop 512.0
    %s951 = vtos %v950
    %s952 = smul.f32 %s935, %s951
    %s953 = smul.f32 %s935, %s952
    %s954 = ssub.f32 %s949, %s953
    %v955 = vrcp.pop 511.0
    %s956 = vtos %v955
    %s957 = smul.f32 %s954, %s956
    %s958 = smax.f32 %s957, 0.0
    %v959 = vstv %s958
    %v960 = vrsqrt.pop %v959
    %v961 = vmul.f32 %v959, %v960
    %vm962 = vcmp.eq.f32.partialorder %v959, inf
    %v963 = vsel %vm962, %v959, %v961
    %vm964 = vcmp.eq.f32.partialorder %v959, 0.0
    %v965 = vand.u32 %v959, 2147483648
    %v966 = vsel %vm964, %v965, %v963
    %s967 = vtos %v966
    %s968 = sadd.f32 %s967, 1e-06
    %v969 = vstv %s968
    %v970 = vrcp.pop %v969
    %s971 = vtos %v970
    %v972 = vstv %s952
    %v973 = vsub.f32 %v920, %v972
    %v974 = vsub.f32 %v921, %v972
    %v975 = vstv %s971
    %v976 = vmul.f32 %v973, %v975
    %v977 = vmul.f32 %v974, %v975
    %v978 = vlaneseq
    %v979 = vshrl.u32 %v978, 7
    %v980 = vsub.s32 0, %v979
    %v981 = vrot.slane %v922, %v980
    %v982 = vmul.f32 %v981, %v976
    %v983 = vmul.f32 %v981, %v977
    %v984 = vlaneseq
    %v985 = vshrl.u32 %v984, 7
    %v986 = vsub.s32 0, %v985
    %v987 = vrot.slane %v923, %v986
    %v988 = vadd.f32 %v982, %v987
    %v989 = vadd.f32 %v983, %v987
    %s990 = scalar_lea.vmem [#allocation5], 32
    %v991 = vld [vmem:[%s990] sm:$0xff]
    %v992 = vld [vmem:[%s990 + $0x8] sm:$0xff]
    %v993 = vld [vmem:[%s990 + $0x10] sm:$0xff]
    %v994 = vld [vmem:[%s990 + $0x18] sm:$0xff]
    %v995 = vlaneseq
    %v996 = vshrl.u32 %v995, 7
    %v997 = vsub.s32 0, %v996
    %v998 = vrot.slane %v57, %v997
    %v1000 = vsel %vm67, %v988, 0
    %v1003 = vsel %vm67, %v989, 0
    %v1006 = vsel %vm67, %v54, 0
    %v1009 = vsel %vm67, %v55, 0
    %1011 = vmatprep.subr.mxu0 0.0
    %1012 = vmatpush1.msra.mxu0 0.0
    %1013 = vmatprep.subr.mxu0 0.0
    %1014 = vmatpush1.msra.mxu0 0.0
    %1015 = vmatprep.subr.mxu0 0.0
    %1016 = vmatpush1.msra.mxu0 0.0
    %1017 = vmatprep.subr.mxu0 0.0
    %1018 = vmatpush1.msra.mxu0 0.0
    %1019 = vmatprep.subr.mxu0 0.0
    %1020 = vmatpush1.msra.mxu0 0.0
    %1021 = vmatprep.subr.mxu0 0.0
    %1022 = vmatpush1.msra.mxu0 0.0
    %1023 = vmatprep.subr.mxu0 0.0
    %1024 = vmatpush1.msra.mxu0 0.0
    %1025 = vmatprep.subr.mxu0 0.0
    %1026 = vmatpush1.msra.mxu0 0.0
    %1027 = vmatprep.subr.mxu0 0.0
    %1028 = vmatpush1.msra.mxu0 0.0
    %1029 = vmatprep.subr.mxu0 0.0
    %1030 = vmatpush1.msra.mxu0 0.0
    %1031 = vmatprep.subr.mxu0 0.0
    %1032 = vmatpush1.msra.mxu0 0.0
    %1033 = vmatprep.subr.mxu0 0.0
    %1034 = vmatpush1.msra.mxu0 0.0
    %1035 = vmatprep.subr.mxu0 0.0
    %1036 = vmatpush1.msra.mxu0 %v994
    %1037 = vmatprep.subr.mxu0 0.0
    %1038 = vmatpush1.msra.mxu0 %v993
    %1039 = vmatprep.subr.mxu0 0.0
    %1040 = vmatpush1.msra.mxu0 %v992
    %1041 = vmatprep.subr.mxu0 0.0
    %1042 = vmatpush1.msra.mxu0 %v991
    %1043 = vmatprep.subr.mxu0 0.0
    %1044 = vmatpush2.msra.mxu0 0.0
    %1045 = vmatprep.subr.mxu0 0.0
    %1046 = vmatpush2.msra.mxu0 0.0
    %1047 = vmatprep.subr.mxu0 0.0
    %1048 = vmatpush2.msra.mxu0 0.0
    %1049 = vmatprep.subr.mxu0 0.0
    %1050 = vmatpush2.msra.mxu0 0.0
    %1051 = vmatprep.subr.mxu0 0.0
    %1052 = vmatpush2.msra.mxu0 0.0
    %1053 = vmatprep.subr.mxu0 0.0
    %1054 = vmatpush2.msra.mxu0 0.0
    %1055 = vmatprep.subr.mxu0 0.0
    %1056 = vmatpush2.msra.mxu0 0.0
    %1057 = vmatprep.subr.mxu0 0.0
    %1058 = vmatpush2.msra.mxu0 0.0
    %1059 = vmatprep.subr.mxu0 0.0
    %1060 = vmatpush2.msra.mxu0 0.0
    %1061 = vmatprep.subr.mxu0 0.0
    %1062 = vmatpush2.msra.mxu0 0.0
    %1063 = vmatprep.subr.mxu0 0.0
    %1064 = vmatpush2.msra.mxu0 0.0
    %1065 = vmatprep.subr.mxu0 0.0
    %1066 = vmatpush2.msra.mxu0 0.0
    %1067 = vmatprep.subr.mxu0 0.0
    %1068 = vmatpush2.msra.mxu0 0.0
    %1069 = vmatprep.subr.mxu0 0.0
    %1070 = vmatpush2.msra.mxu0 0.0
    %1071 = vmatprep.subr.mxu0 0.0
    %1072 = vmatpush2.msra.mxu0 0.0
    %1073 = vmatprep.subr.mxu0 0.0
    %1074 = vmatpush2.msra.mxu0 0.0
    %1075 = vmatprep.mubr.f32.mxu0 0.0
    %1076 = vmatmul.mubr.f32.gmra.mxu0 %v1000
    %v1077 = vpop.f32.mrf.mxu0
    %v1078 = vadd.f32 %v998, %v1077
    %v1079 = vpop.f32.mrf.mxu0
    %1080 = vmatprep.mubr.f32.mxu0 0.0
    %1081 = vmatmul.mubr.f32.gmra.mxu0 %v1003
    %v1082 = vpop.f32.mrf.mxu0
    %v1083 = vadd.f32 %v998, %v1082
    %v1084 = vpop.f32.mrf.mxu0
    %1085 = vmatprep.mubr.f32.mxu0 0.0
    %1086 = vmatmul.mubr.f32.gmra.mxu0 %v1006
    %v1087 = vpop.f32.mrf.mxu0
    %v1088 = vadd.f32 %v998, %v1087
    %v1089 = vpop.f32.mrf.mxu0
    %1090 = vmatprep.mubr.f32.mxu0 0.0
    %1091 = vmatmul.mubr.f32.gmra.mxu0 %v1009
    %v1092 = vpop.f32.mrf.mxu0
    %v1093 = vadd.f32 %v998, %v1092
    %v1094 = vpop.f32.mrf.mxu0
    %1095 = vdwg.mxu0
    %1098 = vrot.lane.b32.xlu0 %v1078, 112
    %v1099 = vpop.permute.xlu0 %1098
    %1100 = vrot.lane.b32.xlu0 %v1083, 112
    %v1101 = vpop.permute.xlu0 %1100
    %1104 = vrot.lane.b32.xlu0 %v1088, 112
    %v1105 = vpop.permute.xlu0 %1104
    %1106 = vrot.lane.b32.xlu0 %v1093, 112
    %v1107 = vpop.permute.xlu0 %1106
    %1108 = vrot.lane.b32.xlu0 %v1088, 96
    %v1109 = vpop.permute.xlu0 %1108
    %v1110 = vsel %vm157, %v1078, 0
    %v1112 = vsel %vm157, %v1109, 0
    %1114 = vmatprep.subr.mxu0 0.0
    %1115 = vmatpush1.xpose.msra.mxu0 0.0
    %1116 = vmatprep.subr.mxu0 0.0
    %1117 = vmatpush1.xpose.msra.mxu0 0.0
    %1118 = vmatprep.subr.mxu0 0.0
    %1119 = vmatpush1.xpose.msra.mxu0 0.0
    %1120 = vmatprep.subr.mxu0 0.0
    %1121 = vmatpush1.xpose.msra.mxu0 0.0
    %1122 = vmatprep.subr.mxu0 0.0
    %1123 = vmatpush1.xpose.msra.mxu0 0.0
    %1124 = vmatprep.subr.mxu0 0.0
    %1125 = vmatpush1.xpose.msra.mxu0 0.0
    %1126 = vmatprep.subr.mxu0 0.0
    %1127 = vmatpush1.xpose.msra.mxu0 0.0
    %1128 = vmatprep.subr.mxu0 0.0
    %1129 = vmatpush1.xpose.msra.mxu0 0.0
    %1130 = vmatprep.subr.mxu0 0.0
    %1131 = vmatpush1.xpose.msra.mxu0 0.0
    %1132 = vmatprep.subr.mxu0 0.0
    %1133 = vmatpush1.xpose.msra.mxu0 0.0
    %1134 = vmatprep.subr.mxu0 0.0
    %1135 = vmatpush1.xpose.msra.mxu0 0.0
    %1136 = vmatprep.subr.mxu0 0.0
    %1137 = vmatpush1.xpose.msra.mxu0 0.0
    %1138 = vmatprep.subr.mxu0 0.0
    %1139 = vmatpush1.xpose.msra.mxu0 0.0
    %1140 = vmatprep.subr.mxu0 0.0
    %1141 = vmatpush1.xpose.msra.mxu0 0.0
    %1142 = vmatprep.subr.mxu0 0.0
    %1143 = vmatpush1.xpose.msra.mxu0 0.0
    %1144 = vmatprep.subr.mxu0 0.0
    %1145 = vmatpush1.xpose.msra.mxu0 %v1112
    %1146 = vmatprep.subr.mxu0 0.0
    %1147 = vmatpush2.xpose.msra.mxu0 0.0
    %1148 = vmatprep.subr.mxu0 0.0
    %1149 = vmatpush2.xpose.msra.mxu0 0.0
    %1150 = vmatprep.subr.mxu0 0.0
    %1151 = vmatpush2.xpose.msra.mxu0 0.0
    %1152 = vmatprep.subr.mxu0 0.0
    %1153 = vmatpush2.xpose.msra.mxu0 0.0
    %1154 = vmatprep.subr.mxu0 0.0
    %1155 = vmatpush2.xpose.msra.mxu0 0.0
    %1156 = vmatprep.subr.mxu0 0.0
    %1157 = vmatpush2.xpose.msra.mxu0 0.0
    %1158 = vmatprep.subr.mxu0 0.0
    %1159 = vmatpush2.xpose.msra.mxu0 0.0
    %1160 = vmatprep.subr.mxu0 0.0
    %1161 = vmatpush2.xpose.msra.mxu0 0.0
    %1162 = vmatprep.subr.mxu0 0.0
    %1163 = vmatpush2.xpose.msra.mxu0 0.0
    %1164 = vmatprep.subr.mxu0 0.0
    %1165 = vmatpush2.xpose.msra.mxu0 0.0
    %1166 = vmatprep.subr.mxu0 0.0
    %1167 = vmatpush2.xpose.msra.mxu0 0.0
    %1168 = vmatprep.subr.mxu0 0.0
    %1169 = vmatpush2.xpose.msra.mxu0 0.0
    %1170 = vmatprep.subr.mxu0 0.0
    %1171 = vmatpush2.xpose.msra.mxu0 0.0
    %1172 = vmatprep.subr.mxu0 0.0
    %1173 = vmatpush2.xpose.msra.mxu0 0.0
    %1174 = vmatprep.subr.mxu0 0.0
    %1175 = vmatpush2.xpose.msra.mxu0 0.0
    %1176 = vmatprep.subr.mxu0 0.0
    %1177 = vmatpush2.xpose.msra.mxu0 0.0
    %1178 = vmatprep.mubr.f32.mxu0 0.0
    %1179 = vmatmul.mubr.f32.gmra.mxu0 %v1110
    %v1180 = vpop.f32.mrf.mxu0
    %v1181 = vadd.f32 0.0, %v1180
    %v1182 = vpop.f32.mrf.mxu0
    %1183 = vdwg.mxu0
    %1184 = vrot.lane.b32.xlu0 %v1093, 96
    %v1185 = vpop.permute.xlu0 %1184
    %v1186 = vsel %vm157, %v1083, 0
    %v1188 = vsel %vm157, %v1185, 0
    %1190 = vmatprep.subr.mxu0 0.0
    %1191 = vmatpush1.xpose.msra.mxu0 0.0
    %1192 = vmatprep.subr.mxu0 0.0
    %1193 = vmatpush1.xpose.msra.mxu0 0.0
    %1194 = vmatprep.subr.mxu0 0.0
    %1195 = vmatpush1.xpose.msra.mxu0 0.0
    %1196 = vmatprep.subr.mxu0 0.0
    %1197 = vmatpush1.xpose.msra.mxu0 0.0
    %1198 = vmatprep.subr.mxu0 0.0
    %1199 = vmatpush1.xpose.msra.mxu0 0.0
    %1200 = vmatprep.subr.mxu0 0.0
    %1201 = vmatpush1.xpose.msra.mxu0 0.0
    %1202 = vmatprep.subr.mxu0 0.0
    %1203 = vmatpush1.xpose.msra.mxu0 0.0
    %1204 = vmatprep.subr.mxu0 0.0
    %1205 = vmatpush1.xpose.msra.mxu0 0.0
    %1206 = vmatprep.subr.mxu0 0.0
    %1207 = vmatpush1.xpose.msra.mxu0 0.0
    %1208 = vmatprep.subr.mxu0 0.0
    %1209 = vmatpush1.xpose.msra.mxu0 0.0
    %1210 = vmatprep.subr.mxu0 0.0
    %1211 = vmatpush1.xpose.msra.mxu0 0.0
    %1212 = vmatprep.subr.mxu0 0.0
    %1213 = vmatpush1.xpose.msra.mxu0 0.0
    %1214 = vmatprep.subr.mxu0 0.0
    %1215 = vmatpush1.xpose.msra.mxu0 0.0
    %1216 = vmatprep.subr.mxu0 0.0
    %1217 = vmatpush1.xpose.msra.mxu0 0.0
    %1218 = vmatprep.subr.mxu0 0.0
    %1219 = vmatpush1.xpose.msra.mxu0 0.0
    %1220 = vmatprep.subr.mxu0 0.0
    %1221 = vmatpush1.xpose.msra.mxu0 %v1188
    %1222 = vmatprep.subr.mxu0 0.0
    %1223 = vmatpush2.xpose.msra.mxu0 0.0
    %1224 = vmatprep.subr.mxu0 0.0
    %1225 = vmatpush2.xpose.msra.mxu0 0.0
    %1226 = vmatprep.subr.mxu0 0.0
    %1227 = vmatpush2.xpose.msra.mxu0 0.0
    %1228 = vmatprep.subr.mxu0 0.0
    %1229 = vmatpush2.xpose.msra.mxu0 0.0
    %1230 = vmatprep.subr.mxu0 0.0
    %1231 = vmatpush2.xpose.msra.mxu0 0.0
    %1232 = vmatprep.subr.mxu0 0.0
    %1233 = vmatpush2.xpose.msra.mxu0 0.0
    %1234 = vmatprep.subr.mxu0 0.0
    %1235 = vmatpush2.xpose.msra.mxu0 0.0
    %1236 = vmatprep.subr.mxu0 0.0
    %1237 = vmatpush2.xpose.msra.mxu0 0.0
    %1238 = vmatprep.subr.mxu0 0.0
    %1239 = vmatpush2.xpose.msra.mxu0 0.0
    %1240 = vmatprep.subr.mxu0 0.0
    %1241 = vmatpush2.xpose.msra.mxu0 0.0
    %1242 = vmatprep.subr.mxu0 0.0
    %1243 = vmatpush2.xpose.msra.mxu0 0.0
    %1244 = vmatprep.subr.mxu0 0.0
    %1245 = vmatpush2.xpose.msra.mxu0 0.0
    %1246 = vmatprep.subr.mxu0 0.0
    %1247 = vmatpush2.xpose.msra.mxu0 0.0
    %1248 = vmatprep.subr.mxu0 0.0
    %1249 = vmatpush2.xpose.msra.mxu0 0.0
    %1250 = vmatprep.subr.mxu0 0.0
    %1251 = vmatpush2.xpose.msra.mxu0 0.0
    %1252 = vmatprep.subr.mxu0 0.0
    %1253 = vmatpush2.xpose.msra.mxu0 0.0
    %1254 = vmatprep.mubr.f32.mxu0 0.0
    %1255 = vmatmul.mubr.f32.gmra.mxu0 %v1186
    %v1256 = vpop.f32.mrf.mxu0
    %v1257 = vadd.f32 0.0, %v1256
    %v1258 = vpop.f32.mrf.mxu0
    %1259 = vdwg.mxu0
    %1260 = vrot.lane.b32.xlu0 %v1105, 96
    %v1261 = vpop.permute.xlu0 %1260
    %v1262 = vsel %vm157, %v1099, 0
    %v1264 = vsel %vm157, %v1261, 0
    %1266 = vmatprep.subr.mxu0 0.0
    %1267 = vmatpush1.xpose.msra.mxu0 0.0
    %1268 = vmatprep.subr.mxu0 0.0
    %1269 = vmatpush1.xpose.msra.mxu0 0.0
    %1270 = vmatprep.subr.mxu0 0.0
    %1271 = vmatpush1.xpose.msra.mxu0 0.0
    %1272 = vmatprep.subr.mxu0 0.0
    %1273 = vmatpush1.xpose.msra.mxu0 0.0
    %1274 = vmatprep.subr.mxu0 0.0
    %1275 = vmatpush1.xpose.msra.mxu0 0.0
    %1276 = vmatprep.subr.mxu0 0.0
    %1277 = vmatpush1.xpose.msra.mxu0 0.0
    %1278 = vmatprep.subr.mxu0 0.0
    %1279 = vmatpush1.xpose.msra.mxu0 0.0
    %1280 = vmatprep.subr.mxu0 0.0
    %1281 = vmatpush1.xpose.msra.mxu0 0.0
    %1282 = vmatprep.subr.mxu0 0.0
    %1283 = vmatpush1.xpose.msra.mxu0 0.0
    %1284 = vmatprep.subr.mxu0 0.0
    %1285 = vmatpush1.xpose.msra.mxu0 0.0
    %1286 = vmatprep.subr.mxu0 0.0
    %1287 = vmatpush1.xpose.msra.mxu0 0.0
    %1288 = vmatprep.subr.mxu0 0.0
    %1289 = vmatpush1.xpose.msra.mxu0 0.0
    %1290 = vmatprep.subr.mxu0 0.0
    %1291 = vmatpush1.xpose.msra.mxu0 0.0
    %1292 = vmatprep.subr.mxu0 0.0
    %1293 = vmatpush1.xpose.msra.mxu0 0.0
    %1294 = vmatprep.subr.mxu0 0.0
    %1295 = vmatpush1.xpose.msra.mxu0 0.0
    %1296 = vmatprep.subr.mxu0 0.0
    %1297 = vmatpush1.xpose.msra.mxu0 %v1264
    %1298 = vmatprep.subr.mxu0 0.0
    %1299 = vmatpush2.xpose.msra.mxu0 0.0
    %1300 = vmatprep.subr.mxu0 0.0
    %1301 = vmatpush2.xpose.msra.mxu0 0.0
    %1302 = vmatprep.subr.mxu0 0.0
    %1303 = vmatpush2.xpose.msra.mxu0 0.0
    %1304 = vmatprep.subr.mxu0 0.0
    %1305 = vmatpush2.xpose.msra.mxu0 0.0
    %1306 = vmatprep.subr.mxu0 0.0
    %1307 = vmatpush2.xpose.msra.mxu0 0.0
    %1308 = vmatprep.subr.mxu0 0.0
    %1309 = vmatpush2.xpose.msra.mxu0 0.0
    %1310 = vmatprep.subr.mxu0 0.0
    %1311 = vmatpush2.xpose.msra.mxu0 0.0
    %1312 = vmatprep.subr.mxu0 0.0
    %1313 = vmatpush2.xpose.msra.mxu0 0.0
    %1314 = vmatprep.subr.mxu0 0.0
    %1315 = vmatpush2.xpose.msra.mxu0 0.0
    %1316 = vmatprep.subr.mxu0 0.0
    %1317 = vmatpush2.xpose.msra.mxu0 0.0
    %1318 = vmatprep.subr.mxu0 0.0
    %1319 = vmatpush2.xpose.msra.mxu0 0.0
    %1320 = vmatprep.subr.mxu0 0.0
    %1321 = vmatpush2.xpose.msra.mxu0 0.0
    %1322 = vmatprep.subr.mxu0 0.0
    %1323 = vmatpush2.xpose.msra.mxu0 0.0
    %1324 = vmatprep.subr.mxu0 0.0
    %1325 = vmatpush2.xpose.msra.mxu0 0.0
    %1326 = vmatprep.subr.mxu0 0.0
    %1327 = vmatpush2.xpose.msra.mxu0 0.0
    %1328 = vmatprep.subr.mxu0 0.0
    %1329 = vmatpush2.xpose.msra.mxu0 0.0
    %1330 = vmatprep.mubr.f32.mxu0 0.0
    %1331 = vmatmul.mubr.f32.gmra.mxu0 %v1262
    %v1332 = vpop.f32.mrf.mxu0
    %v1333 = vadd.f32 0.0, %v1332
    %v1334 = vpop.f32.mrf.mxu0
    %1335 = vdwg.mxu0
    %1336 = vrot.lane.b32.xlu0 %v1107, 96
    %v1337 = vpop.permute.xlu0 %1336
    %v1338 = vsel %vm157, %v1101, 0
    %v1340 = vsel %vm157, %v1337, 0
    %1342 = vmatprep.subr.mxu0 0.0
    %1343 = vmatpush1.xpose.msra.mxu0 0.0
    %1344 = vmatprep.subr.mxu0 0.0
    %1345 = vmatpush1.xpose.msra.mxu0 0.0
    %1346 = vmatprep.subr.mxu0 0.0
    %1347 = vmatpush1.xpose.msra.mxu0 0.0
    %1348 = vmatprep.subr.mxu0 0.0
    %1349 = vmatpush1.xpose.msra.mxu0 0.0
    %1350 = vmatprep.subr.mxu0 0.0
    %1351 = vmatpush1.xpose.msra.mxu0 0.0
    %1352 = vmatprep.subr.mxu0 0.0
    %1353 = vmatpush1.xpose.msra.mxu0 0.0
    %1354 = vmatprep.subr.mxu0 0.0
    %1355 = vmatpush1.xpose.msra.mxu0 0.0
    %1356 = vmatprep.subr.mxu0 0.0
    %1357 = vmatpush1.xpose.msra.mxu0 0.0
    %1358 = vmatprep.subr.mxu0 0.0
    %1359 = vmatpush1.xpose.msra.mxu0 0.0
    %1360 = vmatprep.subr.mxu0 0.0
    %1361 = vmatpush1.xpose.msra.mxu0 0.0
    %1362 = vmatprep.subr.mxu0 0.0
    %1363 = vmatpush1.xpose.msra.mxu0 0.0
    %1364 = vmatprep.subr.mxu0 0.0
    %1365 = vmatpush1.xpose.msra.mxu0 0.0
    %1366 = vmatprep.subr.mxu0 0.0
    %1367 = vmatpush1.xpose.msra.mxu0 0.0
    %1368 = vmatprep.subr.mxu0 0.0
    %1369 = vmatpush1.xpose.msra.mxu0 0.0
    %1370 = vmatprep.subr.mxu0 0.0
    %1371 = vmatpush1.xpose.msra.mxu0 0.0
    %1372 = vmatprep.subr.mxu0 0.0
    %1373 = vmatpush1.xpose.msra.mxu0 %v1340
    %1374 = vmatprep.subr.mxu0 0.0
    %1375 = vmatpush2.xpose.msra.mxu0 0.0
    %1376 = vmatprep.subr.mxu0 0.0
    %1377 = vmatpush2.xpose.msra.mxu0 0.0
    %1378 = vmatprep.subr.mxu0 0.0
    %1379 = vmatpush2.xpose.msra.mxu0 0.0
    %1380 = vmatprep.subr.mxu0 0.0
    %1381 = vmatpush2.xpose.msra.mxu0 0.0
    %1382 = vmatprep.subr.mxu0 0.0
    %1383 = vmatpush2.xpose.msra.mxu0 0.0
    %1384 = vmatprep.subr.mxu0 0.0
    %1385 = vmatpush2.xpose.msra.mxu0 0.0
    %1386 = vmatprep.subr.mxu0 0.0
    %1387 = vmatpush2.xpose.msra.mxu0 0.0
    %1388 = vmatprep.subr.mxu0 0.0
    %1389 = vmatpush2.xpose.msra.mxu0 0.0
    %1390 = vmatprep.subr.mxu0 0.0
    %1391 = vmatpush2.xpose.msra.mxu0 0.0
    %1392 = vmatprep.subr.mxu0 0.0
    %1393 = vmatpush2.xpose.msra.mxu0 0.0
    %1394 = vmatprep.subr.mxu0 0.0
    %1395 = vmatpush2.xpose.msra.mxu0 0.0
    %1396 = vmatprep.subr.mxu0 0.0
    %1397 = vmatpush2.xpose.msra.mxu0 0.0
    %1398 = vmatprep.subr.mxu0 0.0
    %1399 = vmatpush2.xpose.msra.mxu0 0.0
    %1400 = vmatprep.subr.mxu0 0.0
    %1401 = vmatpush2.xpose.msra.mxu0 0.0
    %1402 = vmatprep.subr.mxu0 0.0
    %1403 = vmatpush2.xpose.msra.mxu0 0.0
    %1404 = vmatprep.subr.mxu0 0.0
    %1405 = vmatpush2.xpose.msra.mxu0 0.0
    %1406 = vmatprep.mubr.f32.mxu0 0.0
    %1407 = vmatmul.mubr.f32.gmra.mxu0 %v1338
    %v1408 = vpop.f32.mrf.mxu0
    %v1409 = vadd.f32 0.0, %v1408
    %v1410 = vpop.f32.mrf.mxu0
    %1411 = vdwg.mxu0
    %v1412 = vsel %vm460, %v1181, -inf
    %1413 = vmax.xlane.f32.xlu0 %v1412
    %v1414 = vpop.xlane.xlu0 %1413
    %v1415 = vsel %vm460, %v1257, -inf
    %1416 = vmax.xlane.f32.xlu0 %v1415
    %v1417 = vpop.xlane.xlu0 %1416
    %v1418 = vsel %vm460, %v1333, -inf
    %1419 = vmax.xlane.f32.xlu0 %v1418
    %v1420 = vpop.xlane.xlu0 %1419
    %v1421 = vsel %vm460, %v1409, -inf
    %1422 = vmax.xlane.f32.xlu0 %v1421
    %v1423 = vpop.xlane.xlu0 %1422
    %v1424 = vsub.f32 %v1181, %v1414
    %v1425 = vsub.f32 %v1257, %v1417
    %v1426 = vsub.f32 %v1333, %v1420
    %v1427 = vsub.f32 %v1409, %v1423
    %v1428 = vmul.f32 %v1424, 1.442695
    %v1429 = vpow.pop %v1428
    %v1430 = vmul.f32 %v1425, 1.442695
    %v1431 = vpow.pop %v1430
    %v1432 = vmul.f32 %v1426, 1.442695
    %v1433 = vpow.pop %v1432
    %v1434 = vmul.f32 %v1427, 1.442695
    %v1435 = vpow.pop %v1434
    %v1436 = vsel %vm460, %v1429, 0.0
    %1437 = vadd.xlane.f32.xlu0 %v1436
    %v1438 = vpop.xlane.xlu0 %1437
    %v1439 = vsel %vm460, %v1431, 0.0
    %1440 = vadd.xlane.f32.xlu0 %v1439
    %v1441 = vpop.xlane.xlu0 %1440
    %v1442 = vsel %vm460, %v1433, 0.0
    %1443 = vadd.xlane.f32.xlu0 %v1442
    %v1444 = vpop.xlane.xlu0 %1443
    %v1445 = vsel %vm460, %v1435, 0.0
    %1446 = vadd.xlane.f32.xlu0 %v1445
    %v1447 = vpop.xlane.xlu0 %1446
    %v1448 = vrcp.pop %v1438
    %v1449 = vrcp.pop %v1441
    %v1450 = vrcp.pop %v1444
    %v1451 = vrcp.pop %v1447
    %v1452 = vmul.f32 %v1429, %v1448
    %v1453 = vmul.f32 %v1431, %v1449
    %v1454 = vmul.f32 %v1433, %v1450
    %v1455 = vmul.f32 %v1435, %v1451
    %1456 = vrot.lane.b32.xlu0 %v1088, 64
    %v1457 = vpop.permute.xlu0 %1456
    %v1460 = vsel %vm460, %v1452, 0
    %1462 = vmatprep.subr.mxu0 0.0
    %1463 = vmatpush1.msra.mxu0 0.0
    %1464 = vmatprep.subr.mxu0 0.0
    %1465 = vmatpush1.msra.mxu0 0.0
    %1466 = vmatprep.subr.mxu0 0.0
    %1467 = vmatpush1.msra.mxu0 0.0
    %1468 = vmatprep.subr.mxu0 0.0
    %1469 = vmatpush1.msra.mxu0 0.0
    %1470 = vmatprep.subr.mxu0 0.0
    %1471 = vmatpush1.msra.mxu0 0.0
    %1472 = vmatprep.subr.mxu0 0.0
    %1473 = vmatpush1.msra.mxu0 0.0
    %1474 = vmatprep.subr.mxu0 0.0
    %1475 = vmatpush1.msra.mxu0 0.0
    %1476 = vmatprep.subr.mxu0 0.0
    %1477 = vmatpush1.msra.mxu0 0.0
    %1478 = vmatprep.subr.mxu0 0.0
    %1479 = vmatpush1.msra.mxu0 0.0
    %1480 = vmatprep.subr.mxu0 0.0
    %1481 = vmatpush1.msra.mxu0 0.0
    %1482 = vmatprep.subr.mxu0 0.0
    %1483 = vmatpush1.msra.mxu0 0.0
    %1484 = vmatprep.subr.mxu0 0.0
    %1485 = vmatpush1.msra.mxu0 0.0
    %1486 = vmatprep.subr.mxu0 0.0
    %1487 = vmatpush1.msra.mxu0 0.0
    %1488 = vmatprep.subr.mxu0 0.0
    %1489 = vmatpush1.msra.mxu0 0.0
    %1490 = vmatprep.subr.mxu0 0.0
    %1491 = vmatpush1.msra.mxu0 0.0
    %1492 = vmatprep.subr.mxu0 0.0
    %1493 = vmatpush1.msra.mxu0 %v1457
    %1494 = vmatprep.subr.mxu0 0.0
    %1495 = vmatpush2.msra.mxu0 0.0
    %1496 = vmatprep.subr.mxu0 0.0
    %1497 = vmatpush2.msra.mxu0 0.0
    %1498 = vmatprep.subr.mxu0 0.0
    %1499 = vmatpush2.msra.mxu0 0.0
    %1500 = vmatprep.subr.mxu0 0.0
    %1501 = vmatpush2.msra.mxu0 0.0
    %1502 = vmatprep.subr.mxu0 0.0
    %1503 = vmatpush2.msra.mxu0 0.0
    %1504 = vmatprep.subr.mxu0 0.0
    %1505 = vmatpush2.msra.mxu0 0.0
    %1506 = vmatprep.subr.mxu0 0.0
    %1507 = vmatpush2.msra.mxu0 0.0
    %1508 = vmatprep.subr.mxu0 0.0
    %1509 = vmatpush2.msra.mxu0 0.0
    %1510 = vmatprep.subr.mxu0 0.0
    %1511 = vmatpush2.msra.mxu0 0.0
    %1512 = vmatprep.subr.mxu0 0.0
    %1513 = vmatpush2.msra.mxu0 0.0
    %1514 = vmatprep.subr.mxu0 0.0
    %1515 = vmatpush2.msra.mxu0 0.0
    %1516 = vmatprep.subr.mxu0 0.0
    %1517 = vmatpush2.msra.mxu0 0.0
    %1518 = vmatprep.subr.mxu0 0.0
    %1519 = vmatpush2.msra.mxu0 0.0
    %1520 = vmatprep.subr.mxu0 0.0
    %1521 = vmatpush2.msra.mxu0 0.0
    %1522 = vmatprep.subr.mxu0 0.0
    %1523 = vmatpush2.msra.mxu0 0.0
    %1524 = vmatprep.subr.mxu0 0.0
    %1525 = vmatpush2.msra.mxu0 0.0
    %1526 = vmatprep.mubr.f32.mxu0 0.0
    %1527 = vmatmul.mubr.f32.gmra.mxu0 %v1460
    %v1528 = vpop.f32.mrf.mxu0
    %v1529 = vadd.f32 0.0, %v1528
    %v1530 = vpop.f32.mrf.mxu0
    %1531 = vdwg.mxu0
    %1532 = vrot.lane.b32.xlu0 %v1093, 64
    %v1533 = vpop.permute.xlu0 %1532
    %v1536 = vsel %vm460, %v1453, 0
    %1538 = vmatprep.subr.mxu0 0.0
    %1539 = vmatpush1.msra.mxu0 0.0
    %1540 = vmatprep.subr.mxu0 0.0
    %1541 = vmatpush1.msra.mxu0 0.0
    %1542 = vmatprep.subr.mxu0 0.0
    %1543 = vmatpush1.msra.mxu0 0.0
    %1544 = vmatprep.subr.mxu0 0.0
    %1545 = vmatpush1.msra.mxu0 0.0
    %1546 = vmatprep.subr.mxu0 0.0
    %1547 = vmatpush1.msra.mxu0 0.0
    %1548 = vmatprep.subr.mxu0 0.0
    %1549 = vmatpush1.msra.mxu0 0.0
    %1550 = vmatprep.subr.mxu0 0.0
    %1551 = vmatpush1.msra.mxu0 0.0
    %1552 = vmatprep.subr.mxu0 0.0
    %1553 = vmatpush1.msra.mxu0 0.0
    %1554 = vmatprep.subr.mxu0 0.0
    %1555 = vmatpush1.msra.mxu0 0.0
    %1556 = vmatprep.subr.mxu0 0.0
    %1557 = vmatpush1.msra.mxu0 0.0
    %1558 = vmatprep.subr.mxu0 0.0
    %1559 = vmatpush1.msra.mxu0 0.0
    %1560 = vmatprep.subr.mxu0 0.0
    %1561 = vmatpush1.msra.mxu0 0.0
    %1562 = vmatprep.subr.mxu0 0.0
    %1563 = vmatpush1.msra.mxu0 0.0
    %1564 = vmatprep.subr.mxu0 0.0
    %1565 = vmatpush1.msra.mxu0 0.0
    %1566 = vmatprep.subr.mxu0 0.0
    %1567 = vmatpush1.msra.mxu0 0.0
    %1568 = vmatprep.subr.mxu0 0.0
    %1569 = vmatpush1.msra.mxu0 %v1533
    %1570 = vmatprep.subr.mxu0 0.0
    %1571 = vmatpush2.msra.mxu0 0.0
    %1572 = vmatprep.subr.mxu0 0.0
    %1573 = vmatpush2.msra.mxu0 0.0
    %1574 = vmatprep.subr.mxu0 0.0
    %1575 = vmatpush2.msra.mxu0 0.0
    %1576 = vmatprep.subr.mxu0 0.0
    %1577 = vmatpush2.msra.mxu0 0.0
    %1578 = vmatprep.subr.mxu0 0.0
    %1579 = vmatpush2.msra.mxu0 0.0
    %1580 = vmatprep.subr.mxu0 0.0
    %1581 = vmatpush2.msra.mxu0 0.0
    %1582 = vmatprep.subr.mxu0 0.0
    %1583 = vmatpush2.msra.mxu0 0.0
    %1584 = vmatprep.subr.mxu0 0.0
    %1585 = vmatpush2.msra.mxu0 0.0
    %1586 = vmatprep.subr.mxu0 0.0
    %1587 = vmatpush2.msra.mxu0 0.0
    %1588 = vmatprep.subr.mxu0 0.0
    %1589 = vmatpush2.msra.mxu0 0.0
    %1590 = vmatprep.subr.mxu0 0.0
    %1591 = vmatpush2.msra.mxu0 0.0
    %1592 = vmatprep.subr.mxu0 0.0
    %1593 = vmatpush2.msra.mxu0 0.0
    %1594 = vmatprep.subr.mxu0 0.0
    %1595 = vmatpush2.msra.mxu0 0.0
    %1596 = vmatprep.subr.mxu0 0.0
    %1597 = vmatpush2.msra.mxu0 0.0
    %1598 = vmatprep.subr.mxu0 0.0
    %1599 = vmatpush2.msra.mxu0 0.0
    %1600 = vmatprep.subr.mxu0 0.0
    %1601 = vmatpush2.msra.mxu0 0.0
    %1602 = vmatprep.mubr.f32.mxu0 0.0
    %1603 = vmatmul.mubr.f32.gmra.mxu0 %v1536
    %v1604 = vpop.f32.mrf.mxu0
    %v1605 = vadd.f32 0.0, %v1604
    %v1606 = vpop.f32.mrf.mxu0
    %1607 = vdwg.mxu0
    %1608 = vrot.lane.b32.xlu0 %v1105, 64
    %v1609 = vpop.permute.xlu0 %1608
    %v1612 = vsel %vm460, %v1454, 0
    %1614 = vmatprep.subr.mxu0 0.0
    %1615 = vmatpush1.msra.mxu0 0.0
    %1616 = vmatprep.subr.mxu0 0.0
    %1617 = vmatpush1.msra.mxu0 0.0
    %1618 = vmatprep.subr.mxu0 0.0
    %1619 = vmatpush1.msra.mxu0 0.0
    %1620 = vmatprep.subr.mxu0 0.0
    %1621 = vmatpush1.msra.mxu0 0.0
    %1622 = vmatprep.subr.mxu0 0.0
    %1623 = vmatpush1.msra.mxu0 0.0
    %1624 = vmatprep.subr.mxu0 0.0
    %1625 = vmatpush1.msra.mxu0 0.0
    %1626 = vmatprep.subr.mxu0 0.0
    %1627 = vmatpush1.msra.mxu0 0.0
    %1628 = vmatprep.subr.mxu0 0.0
    %1629 = vmatpush1.msra.mxu0 0.0
    %1630 = vmatprep.subr.mxu0 0.0
    %1631 = vmatpush1.msra.mxu0 0.0
    %1632 = vmatprep.subr.mxu0 0.0
    %1633 = vmatpush1.msra.mxu0 0.0
    %1634 = vmatprep.subr.mxu0 0.0
    %1635 = vmatpush1.msra.mxu0 0.0
    %1636 = vmatprep.subr.mxu0 0.0
    %1637 = vmatpush1.msra.mxu0 0.0
    %1638 = vmatprep.subr.mxu0 0.0
    %1639 = vmatpush1.msra.mxu0 0.0
    %1640 = vmatprep.subr.mxu0 0.0
    %1641 = vmatpush1.msra.mxu0 0.0
    %1642 = vmatprep.subr.mxu0 0.0
    %1643 = vmatpush1.msra.mxu0 0.0
    %1644 = vmatprep.subr.mxu0 0.0
    %1645 = vmatpush1.msra.mxu0 %v1609
    %1646 = vmatprep.subr.mxu0 0.0
    %1647 = vmatpush2.msra.mxu0 0.0
    %1648 = vmatprep.subr.mxu0 0.0
    %1649 = vmatpush2.msra.mxu0 0.0
    %1650 = vmatprep.subr.mxu0 0.0
    %1651 = vmatpush2.msra.mxu0 0.0
    %1652 = vmatprep.subr.mxu0 0.0
    %1653 = vmatpush2.msra.mxu0 0.0
    %1654 = vmatprep.subr.mxu0 0.0
    %1655 = vmatpush2.msra.mxu0 0.0
    %1656 = vmatprep.subr.mxu0 0.0
    %1657 = vmatpush2.msra.mxu0 0.0
    %1658 = vmatprep.subr.mxu0 0.0
    %1659 = vmatpush2.msra.mxu0 0.0
    %1660 = vmatprep.subr.mxu0 0.0
    %1661 = vmatpush2.msra.mxu0 0.0
    %1662 = vmatprep.subr.mxu0 0.0
    %1663 = vmatpush2.msra.mxu0 0.0
    %1664 = vmatprep.subr.mxu0 0.0
    %1665 = vmatpush2.msra.mxu0 0.0
    %1666 = vmatprep.subr.mxu0 0.0
    %1667 = vmatpush2.msra.mxu0 0.0
    %1668 = vmatprep.subr.mxu0 0.0
    %1669 = vmatpush2.msra.mxu0 0.0
    %1670 = vmatprep.subr.mxu0 0.0
    %1671 = vmatpush2.msra.mxu0 0.0
    %1672 = vmatprep.subr.mxu0 0.0
    %1673 = vmatpush2.msra.mxu0 0.0
    %1674 = vmatprep.subr.mxu0 0.0
    %1675 = vmatpush2.msra.mxu0 0.0
    %1676 = vmatprep.subr.mxu0 0.0
    %1677 = vmatpush2.msra.mxu0 0.0
    %1678 = vmatprep.mubr.f32.mxu0 0.0
    %1679 = vmatmul.mubr.f32.gmra.mxu0 %v1612
    %v1680 = vpop.f32.mrf.mxu0
    %v1681 = vadd.f32 0.0, %v1680
    %v1682 = vpop.f32.mrf.mxu0
    %1683 = vdwg.mxu0
    %1684 = vrot.lane.b32.xlu0 %v1107, 64
    %v1685 = vpop.permute.xlu0 %1684
    %v1688 = vsel %vm460, %v1455, 0
    %1690 = vmatprep.subr.mxu0 0.0
    %1691 = vmatpush1.msra.mxu0 0.0
    %1692 = vmatprep.subr.mxu0 0.0
    %1693 = vmatpush1.msra.mxu0 0.0
    %1694 = vmatprep.subr.mxu0 0.0
    %1695 = vmatpush1.msra.mxu0 0.0
    %1696 = vmatprep.subr.mxu0 0.0
    %1697 = vmatpush1.msra.mxu0 0.0
    %1698 = vmatprep.subr.mxu0 0.0
    %1699 = vmatpush1.msra.mxu0 0.0
    %1700 = vmatprep.subr.mxu0 0.0
    %1701 = vmatpush1.msra.mxu0 0.0
    %1702 = vmatprep.subr.mxu0 0.0
    %1703 = vmatpush1.msra.mxu0 0.0
    %1704 = vmatprep.subr.mxu0 0.0
    %1705 = vmatpush1.msra.mxu0 0.0
    %1706 = vmatprep.subr.mxu0 0.0
    %1707 = vmatpush1.msra.mxu0 0.0
    %1708 = vmatprep.subr.mxu0 0.0
    %1709 = vmatpush1.msra.mxu0 0.0
    %1710 = vmatprep.subr.mxu0 0.0
    %1711 = vmatpush1.msra.mxu0 0.0
    %1712 = vmatprep.subr.mxu0 0.0
    %1713 = vmatpush1.msra.mxu0 0.0
    %1714 = vmatprep.subr.mxu0 0.0
    %1715 = vmatpush1.msra.mxu0 0.0
    %1716 = vmatprep.subr.mxu0 0.0
    %1717 = vmatpush1.msra.mxu0 0.0
    %1718 = vmatprep.subr.mxu0 0.0
    %1719 = vmatpush1.msra.mxu0 0.0
    %1720 = vmatprep.subr.mxu0 0.0
    %1721 = vmatpush1.msra.mxu0 %v1685
    %1722 = vmatprep.subr.mxu0 0.0
    %1723 = vmatpush2.msra.mxu0 0.0
    %1724 = vmatprep.subr.mxu0 0.0
    %1725 = vmatpush2.msra.mxu0 0.0
    %1726 = vmatprep.subr.mxu0 0.0
    %1727 = vmatpush2.msra.mxu0 0.0
    %1728 = vmatprep.subr.mxu0 0.0
    %1729 = vmatpush2.msra.mxu0 0.0
    %1730 = vmatprep.subr.mxu0 0.0
    %1731 = vmatpush2.msra.mxu0 0.0
    %1732 = vmatprep.subr.mxu0 0.0
    %1733 = vmatpush2.msra.mxu0 0.0
    %1734 = vmatprep.subr.mxu0 0.0
    %1735 = vmatpush2.msra.mxu0 0.0
    %1736 = vmatprep.subr.mxu0 0.0
    %1737 = vmatpush2.msra.mxu0 0.0
    %1738 = vmatprep.subr.mxu0 0.0
    %1739 = vmatpush2.msra.mxu0 0.0
    %1740 = vmatprep.subr.mxu0 0.0
    %1741 = vmatpush2.msra.mxu0 0.0
    %1742 = vmatprep.subr.mxu0 0.0
    %1743 = vmatpush2.msra.mxu0 0.0
    %1744 = vmatprep.subr.mxu0 0.0
    %1745 = vmatpush2.msra.mxu0 0.0
    %1746 = vmatprep.subr.mxu0 0.0
    %1747 = vmatpush2.msra.mxu0 0.0
    %1748 = vmatprep.subr.mxu0 0.0
    %1749 = vmatpush2.msra.mxu0 0.0
    %1750 = vmatprep.subr.mxu0 0.0
    %1751 = vmatpush2.msra.mxu0 0.0
    %1752 = vmatprep.subr.mxu0 0.0
    %1753 = vmatpush2.msra.mxu0 0.0
    %1754 = vmatprep.mubr.f32.mxu0 0.0
    %1755 = vmatmul.mubr.f32.gmra.mxu0 %v1688
    %v1756 = vpop.f32.mrf.mxu0
    %v1757 = vadd.f32 0.0, %v1756
    %v1758 = vpop.f32.mrf.mxu0
    %1759 = vdwg.mxu0
    %1762 = vrot.lane.b32.xlu0 %v1681, 16
    %v1763 = vpop.permute.xlu0 %1762
    %1764 = vrot.lane.b32.xlu0 %v1757, 16
    %v1765 = vpop.permute.xlu0 %1764
    %v1768 = vsel %vm157, %v1529, %v1763
    %v1769 = vsel %vm157, %v1605, %v1765
    %1774 = vrot.lane.b32.xlu0 %v991, 32
    %v1775 = vpop.permute.xlu0 %1774
    %1776 = vrot.lane.b32.xlu0 %v992, 32
    %v1777 = vpop.permute.xlu0 %1776
    %1778 = vrot.lane.b32.xlu0 %v993, 32
    %v1779 = vpop.permute.xlu0 %1778
    %1780 = vrot.lane.b32.xlu0 %v994, 32
    %v1781 = vpop.permute.xlu0 %1780
    %1787 = vrot.lane.b32.xlu0 %v998, 32
    %v1788 = vpop.permute.xlu0 %1787
    %v1791 = vsel %vm67, %v1768, 0
    %v1794 = vsel %vm67, %v1769, 0
    %1796 = vmatprep.subr.mxu0 0.0
    %1797 = vmatpush1.msra.mxu0 0.0
    %1798 = vmatprep.subr.mxu0 0.0
    %1799 = vmatpush1.msra.mxu0 0.0
    %1800 = vmatprep.subr.mxu0 0.0
    %1801 = vmatpush1.msra.mxu0 0.0
    %1802 = vmatprep.subr.mxu0 0.0
    %1803 = vmatpush1.msra.mxu0 0.0
    %1804 = vmatprep.subr.mxu0 0.0
    %1805 = vmatpush1.msra.mxu0 0.0
    %1806 = vmatprep.subr.mxu0 0.0
    %1807 = vmatpush1.msra.mxu0 0.0
    %1808 = vmatprep.subr.mxu0 0.0
    %1809 = vmatpush1.msra.mxu0 0.0
    %1810 = vmatprep.subr.mxu0 0.0
    %1811 = vmatpush1.msra.mxu0 0.0
    %1812 = vmatprep.subr.mxu0 0.0
    %1813 = vmatpush1.msra.mxu0 0.0
    %1814 = vmatprep.subr.mxu0 0.0
    %1815 = vmatpush1.msra.mxu0 0.0
    %1816 = vmatprep.subr.mxu0 0.0
    %1817 = vmatpush1.msra.mxu0 0.0
    %1818 = vmatprep.subr.mxu0 0.0
    %1819 = vmatpush1.msra.mxu0 0.0
    %1820 = vmatprep.subr.mxu0 0.0
    %1821 = vmatpush1.msra.mxu0 %v1781
    %1822 = vmatprep.subr.mxu0 0.0
    %1823 = vmatpush1.msra.mxu0 %v1779
    %1824 = vmatprep.subr.mxu0 0.0
    %1825 = vmatpush1.msra.mxu0 %v1777
    %1826 = vmatprep.subr.mxu0 0.0
    %1827 = vmatpush1.msra.mxu0 %v1775
    %1828 = vmatprep.subr.mxu0 0.0
    %1829 = vmatpush2.msra.mxu0 0.0
    %1830 = vmatprep.subr.mxu0 0.0
    %1831 = vmatpush2.msra.mxu0 0.0
    %1832 = vmatprep.subr.mxu0 0.0
    %1833 = vmatpush2.msra.mxu0 0.0
    %1834 = vmatprep.subr.mxu0 0.0
    %1835 = vmatpush2.msra.mxu0 0.0
    %1836 = vmatprep.subr.mxu0 0.0
    %1837 = vmatpush2.msra.mxu0 0.0
    %1838 = vmatprep.subr.mxu0 0.0
    %1839 = vmatpush2.msra.mxu0 0.0
    %1840 = vmatprep.subr.mxu0 0.0
    %1841 = vmatpush2.msra.mxu0 0.0
    %1842 = vmatprep.subr.mxu0 0.0
    %1843 = vmatpush2.msra.mxu0 0.0
    %1844 = vmatprep.subr.mxu0 0.0
    %1845 = vmatpush2.msra.mxu0 0.0
    %1846 = vmatprep.subr.mxu0 0.0
    %1847 = vmatpush2.msra.mxu0 0.0
    %1848 = vmatprep.subr.mxu0 0.0
    %1849 = vmatpush2.msra.mxu0 0.0
    %1850 = vmatprep.subr.mxu0 0.0
    %1851 = vmatpush2.msra.mxu0 0.0
    %1852 = vmatprep.subr.mxu0 0.0
    %1853 = vmatpush2.msra.mxu0 0.0
    %1854 = vmatprep.subr.mxu0 0.0
    %1855 = vmatpush2.msra.mxu0 0.0
    %1856 = vmatprep.subr.mxu0 0.0
    %1857 = vmatpush2.msra.mxu0 0.0
    %1858 = vmatprep.subr.mxu0 0.0
    %1859 = vmatpush2.msra.mxu0 0.0
    %1860 = vmatprep.mubr.f32.mxu0 0.0
    %1861 = vmatmul.mubr.f32.gmra.mxu0 %v1791
    %v1862 = vpop.f32.mrf.mxu0
    %v1863 = vadd.f32 %v1788, %v1862
    %v1864 = vpop.f32.mrf.mxu0
    %1865 = vmatprep.mubr.f32.mxu0 0.0
    %1866 = vmatmul.mubr.f32.gmra.mxu0 %v1794
    %v1867 = vpop.f32.mrf.mxu0
    %v1868 = vadd.f32 %v1788, %v1867
    %v1869 = vpop.f32.mrf.mxu0
    %1870 = vdwg.mxu0
    %v1871 = vadd.f32 %v988, %v1863
    %v1872 = vadd.f32 %v989, %v1868
    %v1873 = vld [vmem:[%s4 + $0x4] sm:$0x1]
    %v1874 = vld [vmem:[%s4 + $0x7] sm:$0x1]
    %v1875 = vsel %vm67, %v1871, 0.0
    %v1876 = vsel %vm67, %v1872, 0.0
    %v1877 = vadd.f32 %v1875, %v1876
    %1878 = vadd.xlane.f32.xlu0 %v1877
    %v1879 = vpop.xlane.xlu0 %1878
    %v1880 = vrot.slane %v1879, 4
    %v1881 = vadd.f32 %v1879, %v1880
    %v1882 = vrot.slane %v1881, 2
    %v1883 = vadd.f32 %v1881, %v1882
    %v1884 = vrot.slane %v1883, 1
    %v1885 = vadd.f32 %v1883, %v1884
    %s1886 = vtos %v1885
    %v1887 = vmul.f32 %v1871, %v1871
    %v1888 = vmul.f32 %v1872, %v1872
    %v1889 = vsel %vm67, %v1887, 0.0
    %v1890 = vsel %vm67, %v1888, 0.0
    %v1891 = vadd.f32 %v1889, %v1890
    %1892 = vadd.xlane.f32.xlu0 %v1891
    %v1893 = vpop.xlane.xlu0 %1892
    %v1894 = vrot.slane %v1893, 4
    %v1895 = vadd.f32 %v1893, %v1894
    %v1896 = vrot.slane %v1895, 2
    %v1897 = vadd.f32 %v1895, %v1896
    %v1898 = vrot.slane %v1897, 1
    %v1899 = vadd.f32 %v1897, %v1898
    %s1900 = vtos %v1899
    %v1901 = vrcp.pop 512.0
    %s1902 = vtos %v1901
    %s1903 = smul.f32 %s1886, %s1902
    %s1904 = smul.f32 %s1886, %s1903
    %s1905 = ssub.f32 %s1900, %s1904
    %v1906 = vrcp.pop 511.0
    %s1907 = vtos %v1906
    %s1908 = smul.f32 %s1905, %s1907
    %s1909 = smax.f32 %s1908, 0.0
    %v1910 = vstv %s1909
    %v1911 = vrsqrt.pop %v1910
    %v1912 = vmul.f32 %v1910, %v1911
    %vm1913 = vcmp.eq.f32.partialorder %v1910, inf
    %v1914 = vsel %vm1913, %v1910, %v1912
    %vm1915 = vcmp.eq.f32.partialorder %v1910, 0.0
    %v1916 = vand.u32 %v1910, 2147483648
    %v1917 = vsel %vm1915, %v1916, %v1914
    %s1918 = vtos %v1917
    %s1919 = sadd.f32 %s1918, 1e-06
    %v1920 = vstv %s1919
    %v1921 = vrcp.pop %v1920
    %s1922 = vtos %v1921
    %v1923 = vstv %s1903
    %v1924 = vsub.f32 %v1871, %v1923
    %v1925 = vsub.f32 %v1872, %v1923
    %v1926 = vstv %s1922
    %v1927 = vmul.f32 %v1924, %v1926
    %v1928 = vmul.f32 %v1925, %v1926
    %v1929 = vlaneseq
    %v1930 = vshrl.u32 %v1929, 7
    %v1931 = vsub.s32 0, %v1930
    %v1932 = vrot.slane %v1873, %v1931
    %v1933 = vmul.f32 %v1932, %v1927
    %v1934 = vmul.f32 %v1932, %v1928
    %v1935 = vlaneseq
    %v1936 = vshrl.u32 %v1935, 7
    %v1937 = vsub.s32 0, %v1936
    %v1938 = vrot.slane %v1874, %v1937
    %v1939 = vadd.f32 %v1933, %v1938
    %v1940 = vadd.f32 %v1934, %v1938
    %s1941 = scalar_lea.vmem [#allocation5], 64
    %v1942 = vld [vmem:[%s1941] sm:$0xff]
    %v1943 = vld [vmem:[%s1941 + $0x8] sm:$0xff]
    %v1944 = vld [vmem:[%s1941 + $0x10] sm:$0xff]
    %v1945 = vld [vmem:[%s1941 + $0x18] sm:$0xff]
    %v1946 = vlaneseq
    %v1947 = vshrl.u32 %v1946, 7
    %v1948 = vsub.s32 0, %v1947
    %v1949 = vrot.slane %v58, %v1948
    %v1951 = vsel %vm67, %v1863, 0
    %v1954 = vsel %vm67, %v1868, 0
    %1956 = vmatprep.subr.mxu0 0.0
    %1957 = vmatpush1.msra.mxu0 0.0
    %1958 = vmatprep.subr.mxu0 0.0
    %1959 = vmatpush1.msra.mxu0 0.0
    %1960 = vmatprep.subr.mxu0 0.0
    %1961 = vmatpush1.msra.mxu0 0.0
    %1962 = vmatprep.subr.mxu0 0.0
    %1963 = vmatpush1.msra.mxu0 0.0
    %1964 = vmatprep.subr.mxu0 0.0
    %1965 = vmatpush1.msra.mxu0 0.0
    %1966 = vmatprep.subr.mxu0 0.0
    %1967 = vmatpush1.msra.mxu0 0.0
    %1968 = vmatprep.subr.mxu0 0.0
    %1969 = vmatpush1.msra.mxu0 0.0
    %1970 = vmatprep.subr.mxu0 0.0
    %1971 = vmatpush1.msra.mxu0 0.0
    %1972 = vmatprep.subr.mxu0 0.0
    %1973 = vmatpush1.msra.mxu0 0.0
    %1974 = vmatprep.subr.mxu0 0.0
    %1975 = vmatpush1.msra.mxu0 0.0
    %1976 = vmatprep.subr.mxu0 0.0
    %1977 = vmatpush1.msra.mxu0 0.0
    %1978 = vmatprep.subr.mxu0 0.0
    %1979 = vmatpush1.msra.mxu0 0.0
    %1980 = vmatprep.subr.mxu0 0.0
    %1981 = vmatpush1.msra.mxu0 %v1945
    %1982 = vmatprep.subr.mxu0 0.0
    %1983 = vmatpush1.msra.mxu0 %v1944
    %1984 = vmatprep.subr.mxu0 0.0
    %1985 = vmatpush1.msra.mxu0 %v1943
    %1986 = vmatprep.subr.mxu0 0.0
    %1987 = vmatpush1.msra.mxu0 %v1942
    %1988 = vmatprep.subr.mxu0 0.0
    %1989 = vmatpush2.msra.mxu0 0.0
    %1990 = vmatprep.subr.mxu0 0.0
    %1991 = vmatpush2.msra.mxu0 0.0
    %1992 = vmatprep.subr.mxu0 0.0
    %1993 = vmatpush2.msra.mxu0 0.0
    %1994 = vmatprep.subr.mxu0 0.0
    %1995 = vmatpush2.msra.mxu0 0.0
    %1996 = vmatprep.subr.mxu0 0.0
    %1997 = vmatpush2.msra.mxu0 0.0
    %1998 = vmatprep.subr.mxu0 0.0
    %1999 = vmatpush2.msra.mxu0 0.0
    %2000 = vmatprep.subr.mxu0 0.0
    %2001 = vmatpush2.msra.mxu0 0.0
    %2002 = vmatprep.subr.mxu0 0.0
    %2003 = vmatpush2.msra.mxu0 0.0
    %2004 = vmatprep.subr.mxu0 0.0
    %2005 = vmatpush2.msra.mxu0 0.0
    %2006 = vmatprep.subr.mxu0 0.0
    %2007 = vmatpush2.msra.mxu0 0.0
    %2008 = vmatprep.subr.mxu0 0.0
    %2009 = vmatpush2.msra.mxu0 0.0
    %2010 = vmatprep.subr.mxu0 0.0
    %2011 = vmatpush2.msra.mxu0 0.0
    %2012 = vmatprep.subr.mxu0 0.0
    %2013 = vmatpush2.msra.mxu0 0.0
    %2014 = vmatprep.subr.mxu0 0.0
    %2015 = vmatpush2.msra.mxu0 0.0
    %2016 = vmatprep.subr.mxu0 0.0
    %2017 = vmatpush2.msra.mxu0 0.0
    %2018 = vmatprep.subr.mxu0 0.0
    %2019 = vmatpush2.msra.mxu0 0.0
    %2020 = vmatprep.mubr.f32.mxu0 0.0
    %2021 = vmatmul.mubr.f32.gmra.mxu0 %v1951
    %v2022 = vpop.f32.mrf.mxu0
    %v2023 = vadd.f32 %v1949, %v2022
    %v2024 = vpop.f32.mrf.mxu0
    %2025 = vmatprep.mubr.f32.mxu0 0.0
    %2026 = vmatmul.mubr.f32.gmra.mxu0 %v1954
    %v2027 = vpop.f32.mrf.mxu0
    %v2028 = vadd.f32 %v1949, %v2027
    %v2029 = vpop.f32.mrf.mxu0
    %2030 = vdwg.mxu0
    %v2031 = vadd.f32 %v1939, %v2023
    %v2032 = vadd.f32 %v1940, %v2028
    %v2033 = vld [vmem:[%s4 + $0x5] sm:$0x1]
    %v2034 = vld [vmem:[%s4 + $0x8] sm:$0x1]
    %v2035 = vsel %vm67, %v2031, 0.0
    %v2036 = vsel %vm67, %v2032, 0.0
    %v2037 = vadd.f32 %v2035, %v2036
    %2038 = vadd.xlane.f32.xlu0 %v2037
    %v2039 = vpop.xlane.xlu0 %2038
    %v2040 = vrot.slane %v2039, 4
    %v2041 = vadd.f32 %v2039, %v2040
    %v2042 = vrot.slane %v2041, 2
    %v2043 = vadd.f32 %v2041, %v2042
    %v2044 = vrot.slane %v2043, 1
    %v2045 = vadd.f32 %v2043, %v2044
    %s2046 = vtos %v2045
    %v2047 = vmul.f32 %v2031, %v2031
    %v2048 = vmul.f32 %v2032, %v2032
    %v2049 = vsel %vm67, %v2047, 0.0
    %v2050 = vsel %vm67, %v2048, 0.0
    %v2051 = vadd.f32 %v2049, %v2050
    %2052 = vadd.xlane.f32.xlu0 %v2051
    %v2053 = vpop.xlane.xlu0 %2052
    %v2054 = vrot.slane %v2053, 4
    %v2055 = vadd.f32 %v2053, %v2054
    %v2056 = vrot.slane %v2055, 2
    %v2057 = vadd.f32 %v2055, %v2056
    %v2058 = vrot.slane %v2057, 1
    %v2059 = vadd.f32 %v2057, %v2058
    %s2060 = vtos %v2059
    %v2061 = vrcp.pop 512.0
    %s2062 = vtos %v2061
    %s2063 = smul.f32 %s2046, %s2062
    %s2064 = smul.f32 %s2046, %s2063
    %s2065 = ssub.f32 %s2060, %s2064
    %v2066 = vrcp.pop 511.0
    %s2067 = vtos %v2066
    %s2068 = smul.f32 %s2065, %s2067
    %s2069 = smax.f32 %s2068, 0.0
    %v2070 = vstv %s2069
    %v2071 = vrsqrt.pop %v2070
    %v2072 = vmul.f32 %v2070, %v2071
    %vm2073 = vcmp.eq.f32.partialorder %v2070, inf
    %v2074 = vsel %vm2073, %v2070, %v2072
    %vm2075 = vcmp.eq.f32.partialorder %v2070, 0.0
    %v2076 = vand.u32 %v2070, 2147483648
    %v2077 = vsel %vm2075, %v2076, %v2074
    %s2078 = vtos %v2077
    %s2079 = sadd.f32 %s2078, 1e-06
    %v2080 = vstv %s2079
    %v2081 = vrcp.pop %v2080
    %s2082 = vtos %v2081
    %v2083 = vstv %s2063
    %v2084 = vsub.f32 %v2031, %v2083
    %v2085 = vsub.f32 %v2032, %v2083
    %v2086 = vstv %s2082
    %v2087 = vmul.f32 %v2084, %v2086
    %v2088 = vmul.f32 %v2085, %v2086
    %v2089 = vlaneseq
    %v2090 = vshrl.u32 %v2089, 7
    %v2091 = vsub.s32 0, %v2090
    %v2092 = vrot.slane %v2033, %v2091
    %v2093 = vmul.f32 %v2092, %v2087
    %v2094 = vmul.f32 %v2092, %v2088
    %v2095 = vlaneseq
    %v2096 = vshrl.u32 %v2095, 7
    %v2097 = vsub.s32 0, %v2096
    %v2098 = vrot.slane %v2034, %v2097
    %v2099 = vadd.f32 %v2093, %v2098
    %v2100 = vadd.f32 %v2094, %v2098
    %s2101 = scalar_lea.vmem %s4, 16
    %v2102 = vld [vmem:[%s2101] sm:$0x1]
    %v2103 = vld [vmem:[%s2101 + $0x1] sm:$0x1]
    %v2104 = vld [vmem:[%s2101 + $0x2] sm:$0x1]
    %s2105 = scalar_lea.vmem [#allocation5], 96
    %v2106 = vld [vmem:[%s2105] sm:$0xff]
    %v2107 = vld [vmem:[%s2105 + $0x8] sm:$0xff]
    %v2108 = vld [vmem:[%s2105 + $0x10] sm:$0xff]
    %v2109 = vld [vmem:[%s2105 + $0x18] sm:$0xff]
    %v2110 = vlaneseq
    %v2111 = vshrl.u32 %v2110, 7
    %v2112 = vsub.s32 0, %v2111
    %v2113 = vrot.slane %v2102, %v2112
    %v2115 = vsel %vm67, %v2099, 0
    %v2118 = vsel %vm67, %v2100, 0
    %2120 = vmatprep.subr.mxu0 0.0
    %2121 = vmatpush1.msra.mxu0 0.0
    %2122 = vmatprep.subr.mxu0 0.0
    %2123 = vmatpush1.msra.mxu0 0.0
    %2124 = vmatprep.subr.mxu0 0.0
    %2125 = vmatpush1.msra.mxu0 0.0
    %2126 = vmatprep.subr.mxu0 0.0
    %2127 = vmatpush1.msra.mxu0 0.0
    %2128 = vmatprep.subr.mxu0 0.0
    %2129 = vmatpush1.msra.mxu0 0.0
    %2130 = vmatprep.subr.mxu0 0.0
    %2131 = vmatpush1.msra.mxu0 0.0
    %2132 = vmatprep.subr.mxu0 0.0
    %2133 = vmatpush1.msra.mxu0 0.0
    %2134 = vmatprep.subr.mxu0 0.0
    %2135 = vmatpush1.msra.mxu0 0.0
    %2136 = vmatprep.subr.mxu0 0.0
    %2137 = vmatpush1.msra.mxu0 0.0
    %2138 = vmatprep.subr.mxu0 0.0
    %2139 = vmatpush1.msra.mxu0 0.0
    %2140 = vmatprep.subr.mxu0 0.0
    %2141 = vmatpush1.msra.mxu0 0.0
    %2142 = vmatprep.subr.mxu0 0.0
    %2143 = vmatpush1.msra.mxu0 0.0
    %2144 = vmatprep.subr.mxu0 0.0
    %2145 = vmatpush1.msra.mxu0 %v2109
    %2146 = vmatprep.subr.mxu0 0.0
    %2147 = vmatpush1.msra.mxu0 %v2108
    %2148 = vmatprep.subr.mxu0 0.0
    %2149 = vmatpush1.msra.mxu0 %v2107
    %2150 = vmatprep.subr.mxu0 0.0
    %2151 = vmatpush1.msra.mxu0 %v2106
    %2152 = vmatprep.subr.mxu0 0.0
    %2153 = vmatpush2.msra.mxu0 0.0
    %2154 = vmatprep.subr.mxu0 0.0
    %2155 = vmatpush2.msra.mxu0 0.0
    %2156 = vmatprep.subr.mxu0 0.0
    %2157 = vmatpush2.msra.mxu0 0.0
    %2158 = vmatprep.subr.mxu0 0.0
    %2159 = vmatpush2.msra.mxu0 0.0
    %2160 = vmatprep.subr.mxu0 0.0
    %2161 = vmatpush2.msra.mxu0 0.0
    %2162 = vmatprep.subr.mxu0 0.0
    %2163 = vmatpush2.msra.mxu0 0.0
    %2164 = vmatprep.subr.mxu0 0.0
    %2165 = vmatpush2.msra.mxu0 0.0
    %2166 = vmatprep.subr.mxu0 0.0
    %2167 = vmatpush2.msra.mxu0 0.0
    %2168 = vmatprep.subr.mxu0 0.0
    %2169 = vmatpush2.msra.mxu0 0.0
    %2170 = vmatprep.subr.mxu0 0.0
    %2171 = vmatpush2.msra.mxu0 0.0
    %2172 = vmatprep.subr.mxu0 0.0
    %2173 = vmatpush2.msra.mxu0 0.0
    %2174 = vmatprep.subr.mxu0 0.0
    %2175 = vmatpush2.msra.mxu0 0.0
    %2176 = vmatprep.subr.mxu0 0.0
    %2177 = vmatpush2.msra.mxu0 0.0
    %2178 = vmatprep.subr.mxu0 0.0
    %2179 = vmatpush2.msra.mxu0 0.0
    %2180 = vmatprep.subr.mxu0 0.0
    %2181 = vmatpush2.msra.mxu0 0.0
    %2182 = vmatprep.subr.mxu0 0.0
    %2183 = vmatpush2.msra.mxu0 0.0
    %2184 = vmatprep.mubr.f32.mxu0 0.0
    %2185 = vmatmul.mubr.f32.gmra.mxu0 %v2115
    %v2186 = vpop.f32.mrf.mxu0
    %v2187 = vadd.f32 %v2113, %v2186
    %v2188 = vpop.f32.mrf.mxu0
    %2189 = vmatprep.mubr.f32.mxu0 0.0
    %2190 = vmatmul.mubr.f32.gmra.mxu0 %v2118
    %v2191 = vpop.f32.mrf.mxu0
    %v2192 = vadd.f32 %v2113, %v2191
    %v2193 = vpop.f32.mrf.mxu0
    %2194 = vdwg.mxu0
    %2197 = vrot.lane.b32.xlu0 %v2187, 112
    %v2198 = vpop.permute.xlu0 %2197
    %2199 = vrot.lane.b32.xlu0 %v2192, 112
    %v2200 = vpop.permute.xlu0 %2199
    %2201 = vrot.lane.b32.xlu0 %v2187, 96
    %v2202 = vpop.permute.xlu0 %2201
    %v2203 = vsel %vm157, %v2187, 0
    %v2205 = vsel %vm157, %v2202, 0
    %2207 = vmatprep.subr.mxu0 0.0
    %2208 = vmatpush1.xpose.msra.mxu0 0.0
    %2209 = vmatprep.subr.mxu0 0.0
    %2210 = vmatpush1.xpose.msra.mxu0 0.0
    %2211 = vmatprep.subr.mxu0 0.0
    %2212 = vmatpush1.xpose.msra.mxu0 0.0
    %2213 = vmatprep.subr.mxu0 0.0
    %2214 = vmatpush1.xpose.msra.mxu0 0.0
    %2215 = vmatprep.subr.mxu0 0.0
    %2216 = vmatpush1.xpose.msra.mxu0 0.0
    %2217 = vmatprep.subr.mxu0 0.0
    %2218 = vmatpush1.xpose.msra.mxu0 0.0
    %2219 = vmatprep.subr.mxu0 0.0
    %2220 = vmatpush1.xpose.msra.mxu0 0.0
    %2221 = vmatprep.subr.mxu0 0.0
    %2222 = vmatpush1.xpose.msra.mxu0 0.0
    %2223 = vmatprep.subr.mxu0 0.0
    %2224 = vmatpush1.xpose.msra.mxu0 0.0
    %2225 = vmatprep.subr.mxu0 0.0
    %2226 = vmatpush1.xpose.msra.mxu0 0.0
    %2227 = vmatprep.subr.mxu0 0.0
    %2228 = vmatpush1.xpose.msra.mxu0 0.0
    %2229 = vmatprep.subr.mxu0 0.0
    %2230 = vmatpush1.xpose.msra.mxu0 0.0
    %2231 = vmatprep.subr.mxu0 0.0
    %2232 = vmatpush1.xpose.msra.mxu0 0.0
    %2233 = vmatprep.subr.mxu0 0.0
    %2234 = vmatpush1.xpose.msra.mxu0 0.0
    %2235 = vmatprep.subr.mxu0 0.0
    %2236 = vmatpush1.xpose.msra.mxu0 0.0
    %2237 = vmatprep.subr.mxu0 0.0
    %2238 = vmatpush1.xpose.msra.mxu0 %v2205
    %2239 = vmatprep.subr.mxu0 0.0
    %2240 = vmatpush2.xpose.msra.mxu0 0.0
    %2241 = vmatprep.subr.mxu0 0.0
    %2242 = vmatpush2.xpose.msra.mxu0 0.0
    %2243 = vmatprep.subr.mxu0 0.0
    %2244 = vmatpush2.xpose.msra.mxu0 0.0
    %2245 = vmatprep.subr.mxu0 0.0
    %2246 = vmatpush2.xpose.msra.mxu0 0.0
    %2247 = vmatprep.subr.mxu0 0.0
    %2248 = vmatpush2.xpose.msra.mxu0 0.0
    %2249 = vmatprep.subr.mxu0 0.0
    %2250 = vmatpush2.xpose.msra.mxu0 0.0
    %2251 = vmatprep.subr.mxu0 0.0
    %2252 = vmatpush2.xpose.msra.mxu0 0.0
    %2253 = vmatprep.subr.mxu0 0.0
    %2254 = vmatpush2.xpose.msra.mxu0 0.0
    %2255 = vmatprep.subr.mxu0 0.0
    %2256 = vmatpush2.xpose.msra.mxu0 0.0
    %2257 = vmatprep.subr.mxu0 0.0
    %2258 = vmatpush2.xpose.msra.mxu0 0.0
    %2259 = vmatprep.subr.mxu0 0.0
    %2260 = vmatpush2.xpose.msra.mxu0 0.0
    %2261 = vmatprep.subr.mxu0 0.0
    %2262 = vmatpush2.xpose.msra.mxu0 0.0
    %2263 = vmatprep.subr.mxu0 0.0
    %2264 = vmatpush2.xpose.msra.mxu0 0.0
    %2265 = vmatprep.subr.mxu0 0.0
    %2266 = vmatpush2.xpose.msra.mxu0 0.0
    %2267 = vmatprep.subr.mxu0 0.0
    %2268 = vmatpush2.xpose.msra.mxu0 0.0
    %2269 = vmatprep.subr.mxu0 0.0
    %2270 = vmatpush2.xpose.msra.mxu0 0.0
    %2271 = vmatprep.mubr.f32.mxu0 0.0
    %2272 = vmatmul.mubr.f32.gmra.mxu0 %v2203
    %v2273 = vpop.f32.mrf.mxu0
    %v2274 = vadd.f32 0.0, %v2273
    %v2275 = vpop.f32.mrf.mxu0
    %2276 = vdwg.mxu0
    %2277 = vrot.lane.b32.xlu0 %v2192, 96
    %v2278 = vpop.permute.xlu0 %2277
    %v2279 = vsel %vm157, %v2192, 0
    %v2281 = vsel %vm157, %v2278, 0
    %2283 = vmatprep.subr.mxu0 0.0
    %2284 = vmatpush1.xpose.msra.mxu0 0.0
    %2285 = vmatprep.subr.mxu0 0.0
    %2286 = vmatpush1.xpose.msra.mxu0 0.0
    %2287 = vmatprep.subr.mxu0 0.0
    %2288 = vmatpush1.xpose.msra.mxu0 0.0
    %2289 = vmatprep.subr.mxu0 0.0
    %2290 = vmatpush1.xpose.msra.mxu0 0.0
    %2291 = vmatprep.subr.mxu0 0.0
    %2292 = vmatpush1.xpose.msra.mxu0 0.0
    %2293 = vmatprep.subr.mxu0 0.0
    %2294 = vmatpush1.xpose.msra.mxu0 0.0
    %2295 = vmatprep.subr.mxu0 0.0
    %2296 = vmatpush1.xpose.msra.mxu0 0.0
    %2297 = vmatprep.subr.mxu0 0.0
    %2298 = vmatpush1.xpose.msra.mxu0 0.0
    %2299 = vmatprep.subr.mxu0 0.0
    %2300 = vmatpush1.xpose.msra.mxu0 0.0
    %2301 = vmatprep.subr.mxu0 0.0
    %2302 = vmatpush1.xpose.msra.mxu0 0.0
    %2303 = vmatprep.subr.mxu0 0.0
    %2304 = vmatpush1.xpose.msra.mxu0 0.0
    %2305 = vmatprep.subr.mxu0 0.0
    %2306 = vmatpush1.xpose.msra.mxu0 0.0
    %2307 = vmatprep.subr.mxu0 0.0
    %2308 = vmatpush1.xpose.msra.mxu0 0.0
    %2309 = vmatprep.subr.mxu0 0.0
    %2310 = vmatpush1.xpose.msra.mxu0 0.0
    %2311 = vmatprep.subr.mxu0 0.0
    %2312 = vmatpush1.xpose.msra.mxu0 0.0
    %2313 = vmatprep.subr.mxu0 0.0
    %2314 = vmatpush1.xpose.msra.mxu0 %v2281
    %2315 = vmatprep.subr.mxu0 0.0
    %2316 = vmatpush2.xpose.msra.mxu0 0.0
    %2317 = vmatprep.subr.mxu0 0.0
    %2318 = vmatpush2.xpose.msra.mxu0 0.0
    %2319 = vmatprep.subr.mxu0 0.0
    %2320 = vmatpush2.xpose.msra.mxu0 0.0
    %2321 = vmatprep.subr.mxu0 0.0
    %2322 = vmatpush2.xpose.msra.mxu0 0.0
    %2323 = vmatprep.subr.mxu0 0.0
    %2324 = vmatpush2.xpose.msra.mxu0 0.0
    %2325 = vmatprep.subr.mxu0 0.0
    %2326 = vmatpush2.xpose.msra.mxu0 0.0
    %2327 = vmatprep.subr.mxu0 0.0
    %2328 = vmatpush2.xpose.msra.mxu0 0.0
    %2329 = vmatprep.subr.mxu0 0.0
    %2330 = vmatpush2.xpose.msra.mxu0 0.0
    %2331 = vmatprep.subr.mxu0 0.0
    %2332 = vmatpush2.xpose.msra.mxu0 0.0
    %2333 = vmatprep.subr.mxu0 0.0
    %2334 = vmatpush2.xpose.msra.mxu0 0.0
    %2335 = vmatprep.subr.mxu0 0.0
    %2336 = vmatpush2.xpose.msra.mxu0 0.0
    %2337 = vmatprep.subr.mxu0 0.0
    %2338 = vmatpush2.xpose.msra.mxu0 0.0
    %2339 = vmatprep.subr.mxu0 0.0
    %2340 = vmatpush2.xpose.msra.mxu0 0.0
    %2341 = vmatprep.subr.mxu0 0.0
    %2342 = vmatpush2.xpose.msra.mxu0 0.0
    %2343 = vmatprep.subr.mxu0 0.0
    %2344 = vmatpush2.xpose.msra.mxu0 0.0
    %2345 = vmatprep.subr.mxu0 0.0
    %2346 = vmatpush2.xpose.msra.mxu0 0.0
    %2347 = vmatprep.mubr.f32.mxu0 0.0
    %2348 = vmatmul.mubr.f32.gmra.mxu0 %v2279
    %v2349 = vpop.f32.mrf.mxu0
    %v2350 = vadd.f32 0.0, %v2349
    %v2351 = vpop.f32.mrf.mxu0
    %2352 = vdwg.mxu0
    %2353 = vrot.lane.b32.xlu0 %v2198, 96
    %v2354 = vpop.permute.xlu0 %2353
    %v2355 = vsel %vm157, %v2198, 0
    %v2357 = vsel %vm157, %v2354, 0
    %2359 = vmatprep.subr.mxu0 0.0
    %2360 = vmatpush1.xpose.msra.mxu0 0.0
    %2361 = vmatprep.subr.mxu0 0.0
    %2362 = vmatpush1.xpose.msra.mxu0 0.0
    %2363 = vmatprep.subr.mxu0 0.0
    %2364 = vmatpush1.xpose.msra.mxu0 0.0
    %2365 = vmatprep.subr.mxu0 0.0
    %2366 = vmatpush1.xpose.msra.mxu0 0.0
    %2367 = vmatprep.subr.mxu0 0.0
    %2368 = vmatpush1.xpose.msra.mxu0 0.0
    %2369 = vmatprep.subr.mxu0 0.0
    %2370 = vmatpush1.xpose.msra.mxu0 0.0
    %2371 = vmatprep.subr.mxu0 0.0
    %2372 = vmatpush1.xpose.msra.mxu0 0.0
    %2373 = vmatprep.subr.mxu0 0.0
    %2374 = vmatpush1.xpose.msra.mxu0 0.0
    %2375 = vmatprep.subr.mxu0 0.0
    %2376 = vmatpush1.xpose.msra.mxu0 0.0
    %2377 = vmatprep.subr.mxu0 0.0
    %2378 = vmatpush1.xpose.msra.mxu0 0.0
    %2379 = vmatprep.subr.mxu0 0.0
    %2380 = vmatpush1.xpose.msra.mxu0 0.0
    %2381 = vmatprep.subr.mxu0 0.0
    %2382 = vmatpush1.xpose.msra.mxu0 0.0
    %2383 = vmatprep.subr.mxu0 0.0
    %2384 = vmatpush1.xpose.msra.mxu0 0.0
    %2385 = vmatprep.subr.mxu0 0.0
    %2386 = vmatpush1.xpose.msra.mxu0 0.0
    %2387 = vmatprep.subr.mxu0 0.0
    %2388 = vmatpush1.xpose.msra.mxu0 0.0
    %2389 = vmatprep.subr.mxu0 0.0
    %2390 = vmatpush1.xpose.msra.mxu0 %v2357
    %2391 = vmatprep.subr.mxu0 0.0
    %2392 = vmatpush2.xpose.msra.mxu0 0.0
    %2393 = vmatprep.subr.mxu0 0.0
    %2394 = vmatpush2.xpose.msra.mxu0 0.0
    %2395 = vmatprep.subr.mxu0 0.0
    %2396 = vmatpush2.xpose.msra.mxu0 0.0
    %2397 = vmatprep.subr.mxu0 0.0
    %2398 = vmatpush2.xpose.msra.mxu0 0.0
    %2399 = vmatprep.subr.mxu0 0.0
    %2400 = vmatpush2.xpose.msra.mxu0 0.0
    %2401 = vmatprep.subr.mxu0 0.0
    %2402 = vmatpush2.xpose.msra.mxu0 0.0
    %2403 = vmatprep.subr.mxu0 0.0
    %2404 = vmatpush2.xpose.msra.mxu0 0.0
    %2405 = vmatprep.subr.mxu0 0.0
    %2406 = vmatpush2.xpose.msra.mxu0 0.0
    %2407 = vmatprep.subr.mxu0 0.0
    %2408 = vmatpush2.xpose.msra.mxu0 0.0
    %2409 = vmatprep.subr.mxu0 0.0
    %2410 = vmatpush2.xpose.msra.mxu0 0.0
    %2411 = vmatprep.subr.mxu0 0.0
    %2412 = vmatpush2.xpose.msra.mxu0 0.0
    %2413 = vmatprep.subr.mxu0 0.0
    %2414 = vmatpush2.xpose.msra.mxu0 0.0
    %2415 = vmatprep.subr.mxu0 0.0
    %2416 = vmatpush2.xpose.msra.mxu0 0.0
    %2417 = vmatprep.subr.mxu0 0.0
    %2418 = vmatpush2.xpose.msra.mxu0 0.0
    %2419 = vmatprep.subr.mxu0 0.0
    %2420 = vmatpush2.xpose.msra.mxu0 0.0
    %2421 = vmatprep.subr.mxu0 0.0
    %2422 = vmatpush2.xpose.msra.mxu0 0.0
    %2423 = vmatprep.mubr.f32.mxu0 0.0
    %2424 = vmatmul.mubr.f32.gmra.mxu0 %v2355
    %v2425 = vpop.f32.mrf.mxu0
    %v2426 = vadd.f32 0.0, %v2425
    %v2427 = vpop.f32.mrf.mxu0
    %2428 = vdwg.mxu0
    %2429 = vrot.lane.b32.xlu0 %v2200, 96
    %v2430 = vpop.permute.xlu0 %2429
    %v2431 = vsel %vm157, %v2200, 0
    %v2433 = vsel %vm157, %v2430, 0
    %2435 = vmatprep.subr.mxu0 0.0
    %2436 = vmatpush1.xpose.msra.mxu0 0.0
    %2437 = vmatprep.subr.mxu0 0.0
    %2438 = vmatpush1.xpose.msra.mxu0 0.0
    %2439 = vmatprep.subr.mxu0 0.0
    %2440 = vmatpush1.xpose.msra.mxu0 0.0
    %2441 = vmatprep.subr.mxu0 0.0
    %2442 = vmatpush1.xpose.msra.mxu0 0.0
    %2443 = vmatprep.subr.mxu0 0.0
    %2444 = vmatpush1.xpose.msra.mxu0 0.0
    %2445 = vmatprep.subr.mxu0 0.0
    %2446 = vmatpush1.xpose.msra.mxu0 0.0
    %2447 = vmatprep.subr.mxu0 0.0
    %2448 = vmatpush1.xpose.msra.mxu0 0.0
    %2449 = vmatprep.subr.mxu0 0.0
    %2450 = vmatpush1.xpose.msra.mxu0 0.0
    %2451 = vmatprep.subr.mxu0 0.0
    %2452 = vmatpush1.xpose.msra.mxu0 0.0
    %2453 = vmatprep.subr.mxu0 0.0
    %2454 = vmatpush1.xpose.msra.mxu0 0.0
    %2455 = vmatprep.subr.mxu0 0.0
    %2456 = vmatpush1.xpose.msra.mxu0 0.0
    %2457 = vmatprep.subr.mxu0 0.0
    %2458 = vmatpush1.xpose.msra.mxu0 0.0
    %2459 = vmatprep.subr.mxu0 0.0
    %2460 = vmatpush1.xpose.msra.mxu0 0.0
    %2461 = vmatprep.subr.mxu0 0.0
    %2462 = vmatpush1.xpose.msra.mxu0 0.0
    %2463 = vmatprep.subr.mxu0 0.0
    %2464 = vmatpush1.xpose.msra.mxu0 0.0
    %2465 = vmatprep.subr.mxu0 0.0
    %2466 = vmatpush1.xpose.msra.mxu0 %v2433
    %2467 = vmatprep.subr.mxu0 0.0
    %2468 = vmatpush2.xpose.msra.mxu0 0.0
    %2469 = vmatprep.subr.mxu0 0.0
    %2470 = vmatpush2.xpose.msra.mxu0 0.0
    %2471 = vmatprep.subr.mxu0 0.0
    %2472 = vmatpush2.xpose.msra.mxu0 0.0
    %2473 = vmatprep.subr.mxu0 0.0
    %2474 = vmatpush2.xpose.msra.mxu0 0.0
    %2475 = vmatprep.subr.mxu0 0.0
    %2476 = vmatpush2.xpose.msra.mxu0 0.0
    %2477 = vmatprep.subr.mxu0 0.0
    %2478 = vmatpush2.xpose.msra.mxu0 0.0
    %2479 = vmatprep.subr.mxu0 0.0
    %2480 = vmatpush2.xpose.msra.mxu0 0.0
    %2481 = vmatprep.subr.mxu0 0.0
    %2482 = vmatpush2.xpose.msra.mxu0 0.0
    %2483 = vmatprep.subr.mxu0 0.0
    %2484 = vmatpush2.xpose.msra.mxu0 0.0
    %2485 = vmatprep.subr.mxu0 0.0
    %2486 = vmatpush2.xpose.msra.mxu0 0.0
    %2487 = vmatprep.subr.mxu0 0.0
    %2488 = vmatpush2.xpose.msra.mxu0 0.0
    %2489 = vmatprep.subr.mxu0 0.0
    %2490 = vmatpush2.xpose.msra.mxu0 0.0
    %2491 = vmatprep.subr.mxu0 0.0
    %2492 = vmatpush2.xpose.msra.mxu0 0.0
    %2493 = vmatprep.subr.mxu0 0.0
    %2494 = vmatpush2.xpose.msra.mxu0 0.0
    %2495 = vmatprep.subr.mxu0 0.0
    %2496 = vmatpush2.xpose.msra.mxu0 0.0
    %2497 = vmatprep.subr.mxu0 0.0
    %2498 = vmatpush2.xpose.msra.mxu0 0.0
    %2499 = vmatprep.mubr.f32.mxu0 0.0
    %2500 = vmatmul.mubr.f32.gmra.mxu0 %v2431
    %v2501 = vpop.f32.mrf.mxu0
    %v2502 = vadd.f32 0.0, %v2501
    %v2503 = vpop.f32.mrf.mxu0
    %2504 = vdwg.mxu0
    %v2505 = vsel %vm460, %v2274, -inf
    %2506 = vmax.xlane.f32.xlu0 %v2505
    %v2507 = vpop.xlane.xlu0 %2506
    %v2508 = vsel %vm460, %v2350, -inf
    %2509 = vmax.xlane.f32.xlu0 %v2508
    %v2510 = vpop.xlane.xlu0 %2509
    %v2511 = vsel %vm460, %v2426, -inf
    %2512 = vmax.xlane.f32.xlu0 %v2511
    %v2513 = vpop.xlane.xlu0 %2512
    %v2514 = vsel %vm460, %v2502, -inf
    %2515 = vmax.xlane.f32.xlu0 %v2514
    %v2516 = vpop.xlane.xlu0 %2515
    %v2517 = vsub.f32 %v2274, %v2507
    %v2518 = vsub.f32 %v2350, %v2510
    %v2519 = vsub.f32 %v2426, %v2513
    %v2520 = vsub.f32 %v2502, %v2516
    %v2521 = vmul.f32 %v2517, 1.442695
    %v2522 = vpow.pop %v2521
    %v2523 = vmul.f32 %v2518, 1.442695
    %v2524 = vpow.pop %v2523
    %v2525 = vmul.f32 %v2519, 1.442695
    %v2526 = vpow.pop %v2525
    %v2527 = vmul.f32 %v2520, 1.442695
    %v2528 = vpow.pop %v2527
    %v2529 = vsel %vm460, %v2522, 0.0
    %2530 = vadd.xlane.f32.xlu0 %v2529
    %v2531 = vpop.xlane.xlu0 %2530
    %v2532 = vsel %vm460, %v2524, 0.0
    %2533 = vadd.xlane.f32.xlu0 %v2532
    %v2534 = vpop.xlane.xlu0 %2533
    %v2535 = vsel %vm460, %v2526, 0.0
    %2536 = vadd.xlane.f32.xlu0 %v2535
    %v2537 = vpop.xlane.xlu0 %2536
    %v2538 = vsel %vm460, %v2528, 0.0
    %2539 = vadd.xlane.f32.xlu0 %v2538
    %v2540 = vpop.xlane.xlu0 %2539
    %v2541 = vrcp.pop %v2531
    %v2542 = vrcp.pop %v2534
    %v2543 = vrcp.pop %v2537
    %v2544 = vrcp.pop %v2540
    %v2545 = vmul.f32 %v2522, %v2541
    %v2546 = vmul.f32 %v2524, %v2542
    %v2547 = vmul.f32 %v2526, %v2543
    %v2548 = vmul.f32 %v2528, %v2544
    %2549 = vrot.lane.b32.xlu0 %v2187, 64
    %v2550 = vpop.permute.xlu0 %2549
    %v2553 = vsel %vm460, %v2545, 0
    %2555 = vmatprep.subr.mxu0 0.0
    %2556 = vmatpush1.msra.mxu0 0.0
    %2557 = vmatprep.subr.mxu0 0.0
    %2558 = vmatpush1.msra.mxu0 0.0
    %2559 = vmatprep.subr.mxu0 0.0
    %2560 = vmatpush1.msra.mxu0 0.0
    %2561 = vmatprep.subr.mxu0 0.0
    %2562 = vmatpush1.msra.mxu0 0.0
    %2563 = vmatprep.subr.mxu0 0.0
    %2564 = vmatpush1.msra.mxu0 0.0
    %2565 = vmatprep.subr.mxu0 0.0
    %2566 = vmatpush1.msra.mxu0 0.0
    %2567 = vmatprep.subr.mxu0 0.0
    %2568 = vmatpush1.msra.mxu0 0.0
    %2569 = vmatprep.subr.mxu0 0.0
    %2570 = vmatpush1.msra.mxu0 0.0
    %2571 = vmatprep.subr.mxu0 0.0
    %2572 = vmatpush1.msra.mxu0 0.0
    %2573 = vmatprep.subr.mxu0 0.0
    %2574 = vmatpush1.msra.mxu0 0.0
    %2575 = vmatprep.subr.mxu0 0.0
    %2576 = vmatpush1.msra.mxu0 0.0
    %2577 = vmatprep.subr.mxu0 0.0
    %2578 = vmatpush1.msra.mxu0 0.0
    %2579 = vmatprep.subr.mxu0 0.0
    %2580 = vmatpush1.msra.mxu0 0.0
    %2581 = vmatprep.subr.mxu0 0.0
    %2582 = vmatpush1.msra.mxu0 0.0
    %2583 = vmatprep.subr.mxu0 0.0
    %2584 = vmatpush1.msra.mxu0 0.0
    %2585 = vmatprep.subr.mxu0 0.0
    %2586 = vmatpush1.msra.mxu0 %v2550
    %2587 = vmatprep.subr.mxu0 0.0
    %2588 = vmatpush2.msra.mxu0 0.0
    %2589 = vmatprep.subr.mxu0 0.0
    %2590 = vmatpush2.msra.mxu0 0.0
    %2591 = vmatprep.subr.mxu0 0.0
    %2592 = vmatpush2.msra.mxu0 0.0
    %2593 = vmatprep.subr.mxu0 0.0
    %2594 = vmatpush2.msra.mxu0 0.0
    %2595 = vmatprep.subr.mxu0 0.0
    %2596 = vmatpush2.msra.mxu0 0.0
    %2597 = vmatprep.subr.mxu0 0.0
    %2598 = vmatpush2.msra.mxu0 0.0
    %2599 = vmatprep.subr.mxu0 0.0
    %2600 = vmatpush2.msra.mxu0 0.0
    %2601 = vmatprep.subr.mxu0 0.0
    %2602 = vmatpush2.msra.mxu0 0.0
    %2603 = vmatprep.subr.mxu0 0.0
    %2604 = vmatpush2.msra.mxu0 0.0
    %2605 = vmatprep.subr.mxu0 0.0
    %2606 = vmatpush2.msra.mxu0 0.0
    %2607 = vmatprep.subr.mxu0 0.0
    %2608 = vmatpush2.msra.mxu0 0.0
    %2609 = vmatprep.subr.mxu0 0.0
    %2610 = vmatpush2.msra.mxu0 0.0
    %2611 = vmatprep.subr.mxu0 0.0
    %2612 = vmatpush2.msra.mxu0 0.0
    %2613 = vmatprep.subr.mxu0 0.0
    %2614 = vmatpush2.msra.mxu0 0.0
    %2615 = vmatprep.subr.mxu0 0.0
    %2616 = vmatpush2.msra.mxu0 0.0
    %2617 = vmatprep.subr.mxu0 0.0
    %2618 = vmatpush2.msra.mxu0 0.0
    %2619 = vmatprep.mubr.f32.mxu0 0.0
    %2620 = vmatmul.mubr.f32.gmra.mxu0 %v2553
    %v2621 = vpop.f32.mrf.mxu0
    %v2622 = vadd.f32 0.0, %v2621
    %v2623 = vpop.f32.mrf.mxu0
    %2624 = vdwg.mxu0
    %2625 = vrot.lane.b32.xlu0 %v2192, 64
    %v2626 = vpop.permute.xlu0 %2625
    %v2629 = vsel %vm460, %v2546, 0
    %2631 = vmatprep.subr.mxu0 0.0
    %2632 = vmatpush1.msra.mxu0 0.0
    %2633 = vmatprep.subr.mxu0 0.0
    %2634 = vmatpush1.msra.mxu0 0.0
    %2635 = vmatprep.subr.mxu0 0.0
    %2636 = vmatpush1.msra.mxu0 0.0
    %2637 = vmatprep.subr.mxu0 0.0
    %2638 = vmatpush1.msra.mxu0 0.0
    %2639 = vmatprep.subr.mxu0 0.0
    %2640 = vmatpush1.msra.mxu0 0.0
    %2641 = vmatprep.subr.mxu0 0.0
    %2642 = vmatpush1.msra.mxu0 0.0
    %2643 = vmatprep.subr.mxu0 0.0
    %2644 = vmatpush1.msra.mxu0 0.0
    %2645 = vmatprep.subr.mxu0 0.0
    %2646 = vmatpush1.msra.mxu0 0.0
    %2647 = vmatprep.subr.mxu0 0.0
    %2648 = vmatpush1.msra.mxu0 0.0
    %2649 = vmatprep.subr.mxu0 0.0
    %2650 = vmatpush1.msra.mxu0 0.0
    %2651 = vmatprep.subr.mxu0 0.0
    %2652 = vmatpush1.msra.mxu0 0.0
    %2653 = vmatprep.subr.mxu0 0.0
    %2654 = vmatpush1.msra.mxu0 0.0
    %2655 = vmatprep.subr.mxu0 0.0
    %2656 = vmatpush1.msra.mxu0 0.0
    %2657 = vmatprep.subr.mxu0 0.0
    %2658 = vmatpush1.msra.mxu0 0.0
    %2659 = vmatprep.subr.mxu0 0.0
    %2660 = vmatpush1.msra.mxu0 0.0
    %2661 = vmatprep.subr.mxu0 0.0
    %2662 = vmatpush1.msra.mxu0 %v2626
    %2663 = vmatprep.subr.mxu0 0.0
    %2664 = vmatpush2.msra.mxu0 0.0
    %2665 = vmatprep.subr.mxu0 0.0
    %2666 = vmatpush2.msra.mxu0 0.0
    %2667 = vmatprep.subr.mxu0 0.0
    %2668 = vmatpush2.msra.mxu0 0.0
    %2669 = vmatprep.subr.mxu0 0.0
    %2670 = vmatpush2.msra.mxu0 0.0
    %2671 = vmatprep.subr.mxu0 0.0
    %2672 = vmatpush2.msra.mxu0 0.0
    %2673 = vmatprep.subr.mxu0 0.0
    %2674 = vmatpush2.msra.mxu0 0.0
    %2675 = vmatprep.subr.mxu0 0.0
    %2676 = vmatpush2.msra.mxu0 0.0
    %2677 = vmatprep.subr.mxu0 0.0
    %2678 = vmatpush2.msra.mxu0 0.0
    %2679 = vmatprep.subr.mxu0 0.0
    %2680 = vmatpush2.msra.mxu0 0.0
    %2681 = vmatprep.subr.mxu0 0.0
    %2682 = vmatpush2.msra.mxu0 0.0
    %2683 = vmatprep.subr.mxu0 0.0
    %2684 = vmatpush2.msra.mxu0 0.0
    %2685 = vmatprep.subr.mxu0 0.0
    %2686 = vmatpush2.msra.mxu0 0.0
    %2687 = vmatprep.subr.mxu0 0.0
    %2688 = vmatpush2.msra.mxu0 0.0
    %2689 = vmatprep.subr.mxu0 0.0
    %2690 = vmatpush2.msra.mxu0 0.0
    %2691 = vmatprep.subr.mxu0 0.0
    %2692 = vmatpush2.msra.mxu0 0.0
    %2693 = vmatprep.subr.mxu0 0.0
    %2694 = vmatpush2.msra.mxu0 0.0
    %2695 = vmatprep.mubr.f32.mxu0 0.0
    %2696 = vmatmul.mubr.f32.gmra.mxu0 %v2629
    %v2697 = vpop.f32.mrf.mxu0
    %v2698 = vadd.f32 0.0, %v2697
    %v2699 = vpop.f32.mrf.mxu0
    %2700 = vdwg.mxu0
    %2701 = vrot.lane.b32.xlu0 %v2198, 64
    %v2702 = vpop.permute.xlu0 %2701
    %v2705 = vsel %vm460, %v2547, 0
    %2707 = vmatprep.subr.mxu0 0.0
    %2708 = vmatpush1.msra.mxu0 0.0
    %2709 = vmatprep.subr.mxu0 0.0
    %2710 = vmatpush1.msra.mxu0 0.0
    %2711 = vmatprep.subr.mxu0 0.0
    %2712 = vmatpush1.msra.mxu0 0.0
    %2713 = vmatprep.subr.mxu0 0.0
    %2714 = vmatpush1.msra.mxu0 0.0
    %2715 = vmatprep.subr.mxu0 0.0
    %2716 = vmatpush1.msra.mxu0 0.0
    %2717 = vmatprep.subr.mxu0 0.0
    %2718 = vmatpush1.msra.mxu0 0.0
    %2719 = vmatprep.subr.mxu0 0.0
    %2720 = vmatpush1.msra.mxu0 0.0
    %2721 = vmatprep.subr.mxu0 0.0
    %2722 = vmatpush1.msra.mxu0 0.0
    %2723 = vmatprep.subr.mxu0 0.0
    %2724 = vmatpush1.msra.mxu0 0.0
    %2725 = vmatprep.subr.mxu0 0.0
    %2726 = vmatpush1.msra.mxu0 0.0
    %2727 = vmatprep.subr.mxu0 0.0
    %2728 = vmatpush1.msra.mxu0 0.0
    %2729 = vmatprep.subr.mxu0 0.0
    %2730 = vmatpush1.msra.mxu0 0.0
    %2731 = vmatprep.subr.mxu0 0.0
    %2732 = vmatpush1.msra.mxu0 0.0
    %2733 = vmatprep.subr.mxu0 0.0
    %2734 = vmatpush1.msra.mxu0 0.0
    %2735 = vmatprep.subr.mxu0 0.0
    %2736 = vmatpush1.msra.mxu0 0.0
    %2737 = vmatprep.subr.mxu0 0.0
    %2738 = vmatpush1.msra.mxu0 %v2702
    %2739 = vmatprep.subr.mxu0 0.0
    %2740 = vmatpush2.msra.mxu0 0.0
    %2741 = vmatprep.subr.mxu0 0.0
    %2742 = vmatpush2.msra.mxu0 0.0
    %2743 = vmatprep.subr.mxu0 0.0
    %2744 = vmatpush2.msra.mxu0 0.0
    %2745 = vmatprep.subr.mxu0 0.0
    %2746 = vmatpush2.msra.mxu0 0.0
    %2747 = vmatprep.subr.mxu0 0.0
    %2748 = vmatpush2.msra.mxu0 0.0
    %2749 = vmatprep.subr.mxu0 0.0
    %2750 = vmatpush2.msra.mxu0 0.0
    %2751 = vmatprep.subr.mxu0 0.0
    %2752 = vmatpush2.msra.mxu0 0.0
    %2753 = vmatprep.subr.mxu0 0.0
    %2754 = vmatpush2.msra.mxu0 0.0
    %2755 = vmatprep.subr.mxu0 0.0
    %2756 = vmatpush2.msra.mxu0 0.0
    %2757 = vmatprep.subr.mxu0 0.0
    %2758 = vmatpush2.msra.mxu0 0.0
    %2759 = vmatprep.subr.mxu0 0.0
    %2760 = vmatpush2.msra.mxu0 0.0
    %2761 = vmatprep.subr.mxu0 0.0
    %2762 = vmatpush2.msra.mxu0 0.0
    %2763 = vmatprep.subr.mxu0 0.0
    %2764 = vmatpush2.msra.mxu0 0.0
    %2765 = vmatprep.subr.mxu0 0.0
    %2766 = vmatpush2.msra.mxu0 0.0
    %2767 = vmatprep.subr.mxu0 0.0
    %2768 = vmatpush2.msra.mxu0 0.0
    %2769 = vmatprep.subr.mxu0 0.0
    %2770 = vmatpush2.msra.mxu0 0.0
    %2771 = vmatprep.mubr.f32.mxu0 0.0
    %2772 = vmatmul.mubr.f32.gmra.mxu0 %v2705
    %v2773 = vpop.f32.mrf.mxu0
    %v2774 = vadd.f32 0.0, %v2773
    %v2775 = vpop.f32.mrf.mxu0
    %2776 = vdwg.mxu0
    %2777 = vrot.lane.b32.xlu0 %v2200, 64
    %v2778 = vpop.permute.xlu0 %2777
    %v2781 = vsel %vm460, %v2548, 0
    %2783 = vmatprep.subr.mxu0 0.0
    %2784 = vmatpush1.msra.mxu0 0.0
    %2785 = vmatprep.subr.mxu0 0.0
    %2786 = vmatpush1.msra.mxu0 0.0
    %2787 = vmatprep.subr.mxu0 0.0
    %2788 = vmatpush1.msra.mxu0 0.0
    %2789 = vmatprep.subr.mxu0 0.0
    %2790 = vmatpush1.msra.mxu0 0.0
    %2791 = vmatprep.subr.mxu0 0.0
    %2792 = vmatpush1.msra.mxu0 0.0
    %2793 = vmatprep.subr.mxu0 0.0
    %2794 = vmatpush1.msra.mxu0 0.0
    %2795 = vmatprep.subr.mxu0 0.0
    %2796 = vmatpush1.msra.mxu0 0.0
    %2797 = vmatprep.subr.mxu0 0.0
    %2798 = vmatpush1.msra.mxu0 0.0
    %2799 = vmatprep.subr.mxu0 0.0
    %2800 = vmatpush1.msra.mxu0 0.0
    %2801 = vmatprep.subr.mxu0 0.0
    %2802 = vmatpush1.msra.mxu0 0.0
    %2803 = vmatprep.subr.mxu0 0.0
    %2804 = vmatpush1.msra.mxu0 0.0
    %2805 = vmatprep.subr.mxu0 0.0
    %2806 = vmatpush1.msra.mxu0 0.0
    %2807 = vmatprep.subr.mxu0 0.0
    %2808 = vmatpush1.msra.mxu0 0.0
    %2809 = vmatprep.subr.mxu0 0.0
    %2810 = vmatpush1.msra.mxu0 0.0
    %2811 = vmatprep.subr.mxu0 0.0
    %2812 = vmatpush1.msra.mxu0 0.0
    %2813 = vmatprep.subr.mxu0 0.0
    %2814 = vmatpush1.msra.mxu0 %v2778
    %2815 = vmatprep.subr.mxu0 0.0
    %2816 = vmatpush2.msra.mxu0 0.0
    %2817 = vmatprep.subr.mxu0 0.0
    %2818 = vmatpush2.msra.mxu0 0.0
    %2819 = vmatprep.subr.mxu0 0.0
    %2820 = vmatpush2.msra.mxu0 0.0
    %2821 = vmatprep.subr.mxu0 0.0
    %2822 = vmatpush2.msra.mxu0 0.0
    %2823 = vmatprep.subr.mxu0 0.0
    %2824 = vmatpush2.msra.mxu0 0.0
    %2825 = vmatprep.subr.mxu0 0.0
    %2826 = vmatpush2.msra.mxu0 0.0
    %2827 = vmatprep.subr.mxu0 0.0
    %2828 = vmatpush2.msra.mxu0 0.0
    %2829 = vmatprep.subr.mxu0 0.0
    %2830 = vmatpush2.msra.mxu0 0.0
    %2831 = vmatprep.subr.mxu0 0.0
    %2832 = vmatpush2.msra.mxu0 0.0
    %2833 = vmatprep.subr.mxu0 0.0
    %2834 = vmatpush2.msra.mxu0 0.0
    %2835 = vmatprep.subr.mxu0 0.0
    %2836 = vmatpush2.msra.mxu0 0.0
    %2837 = vmatprep.subr.mxu0 0.0
    %2838 = vmatpush2.msra.mxu0 0.0
    %2839 = vmatprep.subr.mxu0 0.0
    %2840 = vmatpush2.msra.mxu0 0.0
    %2841 = vmatprep.subr.mxu0 0.0
    %2842 = vmatpush2.msra.mxu0 0.0
    %2843 = vmatprep.subr.mxu0 0.0
    %2844 = vmatpush2.msra.mxu0 0.0
    %2845 = vmatprep.subr.mxu0 0.0
    %2846 = vmatpush2.msra.mxu0 0.0
    %2847 = vmatprep.mubr.f32.mxu0 0.0
    %2848 = vmatmul.mubr.f32.gmra.mxu0 %v2781
    %v2849 = vpop.f32.mrf.mxu0
    %v2850 = vadd.f32 0.0, %v2849
    %v2851 = vpop.f32.mrf.mxu0
    %2852 = vdwg.mxu0
    %2855 = vrot.lane.b32.xlu0 %v2774, 16
    %v2856 = vpop.permute.xlu0 %2855
    %2857 = vrot.lane.b32.xlu0 %v2850, 16
    %v2858 = vpop.permute.xlu0 %2857
    %v2861 = vsel %vm157, %v2622, %v2856
    %v2862 = vsel %vm157, %v2698, %v2858
    %2867 = vrot.lane.b32.xlu0 %v2106, 32
    %v2868 = vpop.permute.xlu0 %2867
    %2869 = vrot.lane.b32.xlu0 %v2107, 32
    %v2870 = vpop.permute.xlu0 %2869
    %2871 = vrot.lane.b32.xlu0 %v2108, 32
    %v2872 = vpop.permute.xlu0 %2871
    %2873 = vrot.lane.b32.xlu0 %v2109, 32
    %v2874 = vpop.permute.xlu0 %2873
    %2880 = vrot.lane.b32.xlu0 %v2113, 32
    %v2881 = vpop.permute.xlu0 %2880
    %v2884 = vsel %vm67, %v2861, 0
    %v2887 = vsel %vm67, %v2862, 0
    %2889 = vmatprep.subr.mxu0 0.0
    %2890 = vmatpush1.msra.mxu0 0.0
    %2891 = vmatprep.subr.mxu0 0.0
    %2892 = vmatpush1.msra.mxu0 0.0
    %2893 = vmatprep.subr.mxu0 0.0
    %2894 = vmatpush1.msra.mxu0 0.0
    %2895 = vmatprep.subr.mxu0 0.0
    %2896 = vmatpush1.msra.mxu0 0.0
    %2897 = vmatprep.subr.mxu0 0.0
    %2898 = vmatpush1.msra.mxu0 0.0
    %2899 = vmatprep.subr.mxu0 0.0
    %2900 = vmatpush1.msra.mxu0 0.0
    %2901 = vmatprep.subr.mxu0 0.0
    %2902 = vmatpush1.msra.mxu0 0.0
    %2903 = vmatprep.subr.mxu0 0.0
    %2904 = vmatpush1.msra.mxu0 0.0
    %2905 = vmatprep.subr.mxu0 0.0
    %2906 = vmatpush1.msra.mxu0 0.0
    %2907 = vmatprep.subr.mxu0 0.0
    %2908 = vmatpush1.msra.mxu0 0.0
    %2909 = vmatprep.subr.mxu0 0.0
    %2910 = vmatpush1.msra.mxu0 0.0
    %2911 = vmatprep.subr.mxu0 0.0
    %2912 = vmatpush1.msra.mxu0 0.0
    %2913 = vmatprep.subr.mxu0 0.0
    %2914 = vmatpush1.msra.mxu0 %v2874
    %2915 = vmatprep.subr.mxu0 0.0
    %2916 = vmatpush1.msra.mxu0 %v2872
    %2917 = vmatprep.subr.mxu0 0.0
    %2918 = vmatpush1.msra.mxu0 %v2870
    %2919 = vmatprep.subr.mxu0 0.0
    %2920 = vmatpush1.msra.mxu0 %v2868
    %2921 = vmatprep.subr.mxu0 0.0
    %2922 = vmatpush2.msra.mxu0 0.0
    %2923 = vmatprep.subr.mxu0 0.0
    %2924 = vmatpush2.msra.mxu0 0.0
    %2925 = vmatprep.subr.mxu0 0.0
    %2926 = vmatpush2.msra.mxu0 0.0
    %2927 = vmatprep.subr.mxu0 0.0
    %2928 = vmatpush2.msra.mxu0 0.0
    %2929 = vmatprep.subr.mxu0 0.0
    %2930 = vmatpush2.msra.mxu0 0.0
    %2931 = vmatprep.subr.mxu0 0.0
    %2932 = vmatpush2.msra.mxu0 0.0
    %2933 = vmatprep.subr.mxu0 0.0
    %2934 = vmatpush2.msra.mxu0 0.0
    %2935 = vmatprep.subr.mxu0 0.0
    %2936 = vmatpush2.msra.mxu0 0.0
    %2937 = vmatprep.subr.mxu0 0.0
    %2938 = vmatpush2.msra.mxu0 0.0
    %2939 = vmatprep.subr.mxu0 0.0
    %2940 = vmatpush2.msra.mxu0 0.0
    %2941 = vmatprep.subr.mxu0 0.0
    %2942 = vmatpush2.msra.mxu0 0.0
    %2943 = vmatprep.subr.mxu0 0.0
    %2944 = vmatpush2.msra.mxu0 0.0
    %2945 = vmatprep.subr.mxu0 0.0
    %2946 = vmatpush2.msra.mxu0 0.0
    %2947 = vmatprep.subr.mxu0 0.0
    %2948 = vmatpush2.msra.mxu0 0.0
    %2949 = vmatprep.subr.mxu0 0.0
    %2950 = vmatpush2.msra.mxu0 0.0
    %2951 = vmatprep.subr.mxu0 0.0
    %2952 = vmatpush2.msra.mxu0 0.0
    %2953 = vmatprep.mubr.f32.mxu0 0.0
    %2954 = vmatmul.mubr.f32.gmra.mxu0 %v2884
    %v2955 = vpop.f32.mrf.mxu0
    %v2956 = vadd.f32 %v2881, %v2955
    %v2957 = vpop.f32.mrf.mxu0
    %2958 = vmatprep.mubr.f32.mxu0 0.0
    %2959 = vmatmul.mubr.f32.gmra.mxu0 %v2887
    %v2960 = vpop.f32.mrf.mxu0
    %v2961 = vadd.f32 %v2881, %v2960
    %v2962 = vpop.f32.mrf.mxu0
    %2963 = vdwg.mxu0
    %v2964 = vadd.f32 %v2099, %v2956
    %v2965 = vadd.f32 %v2100, %v2961
    %v2966 = vld [vmem:[%s2101 + $0x3] sm:$0x1]
    %v2967 = vld [vmem:[%s2101 + $0x6] sm:$0x1]
    %v2968 = vsel %vm67, %v2964, 0.0
    %v2969 = vsel %vm67, %v2965, 0.0
    %v2970 = vadd.f32 %v2968, %v2969
    %2971 = vadd.xlane.f32.xlu0 %v2970
    %v2972 = vpop.xlane.xlu0 %2971
    %v2973 = vrot.slane %v2972, 4
    %v2974 = vadd.f32 %v2972, %v2973
    %v2975 = vrot.slane %v2974, 2
    %v2976 = vadd.f32 %v2974, %v2975
    %v2977 = vrot.slane %v2976, 1
    %v2978 = vadd.f32 %v2976, %v2977
    %s2979 = vtos %v2978
    %v2980 = vmul.f32 %v2964, %v2964
    %v2981 = vmul.f32 %v2965, %v2965
    %v2982 = vsel %vm67, %v2980, 0.0
    %v2983 = vsel %vm67, %v2981, 0.0
    %v2984 = vadd.f32 %v2982, %v2983
    %2985 = vadd.xlane.f32.xlu0 %v2984
    %v2986 = vpop.xlane.xlu0 %2985
    %v2987 = vrot.slane %v2986, 4
    %v2988 = vadd.f32 %v2986, %v2987
    %v2989 = vrot.slane %v2988, 2
    %v2990 = vadd.f32 %v2988, %v2989
    %v2991 = vrot.slane %v2990, 1
    %v2992 = vadd.f32 %v2990, %v2991
    %s2993 = vtos %v2992
    %v2994 = vrcp.pop 512.0
    %s2995 = vtos %v2994
    %s2996 = smul.f32 %s2979, %s2995
    %s2997 = smul.f32 %s2979, %s2996
    %s2998 = ssub.f32 %s2993, %s2997
    %v2999 = vrcp.pop 511.0
    %s3000 = vtos %v2999
    %s3001 = smul.f32 %s2998, %s3000
    %s3002 = smax.f32 %s3001, 0.0
    %v3003 = vstv %s3002
    %v3004 = vrsqrt.pop %v3003
    %v3005 = vmul.f32 %v3003, %v3004
    %vm3006 = vcmp.eq.f32.partialorder %v3003, inf
    %v3007 = vsel %vm3006, %v3003, %v3005
    %vm3008 = vcmp.eq.f32.partialorder %v3003, 0.0
    %v3009 = vand.u32 %v3003, 2147483648
    %v3010 = vsel %vm3008, %v3009, %v3007
    %s3011 = vtos %v3010
    %s3012 = sadd.f32 %s3011, 1e-06
    %v3013 = vstv %s3012
    %v3014 = vrcp.pop %v3013
    %s3015 = vtos %v3014
    %v3016 = vstv %s2996
    %v3017 = vsub.f32 %v2964, %v3016
    %v3018 = vsub.f32 %v2965, %v3016
    %v3019 = vstv %s3015
    %v3020 = vmul.f32 %v3017, %v3019
    %v3021 = vmul.f32 %v3018, %v3019
    %v3022 = vlaneseq
    %v3023 = vshrl.u32 %v3022, 7
    %v3024 = vsub.s32 0, %v3023
    %v3025 = vrot.slane %v2966, %v3024
    %v3026 = vmul.f32 %v3025, %v3020
    %v3027 = vmul.f32 %v3025, %v3021
    %v3028 = vlaneseq
    %v3029 = vshrl.u32 %v3028, 7
    %v3030 = vsub.s32 0, %v3029
    %v3031 = vrot.slane %v2967, %v3030
    %v3032 = vadd.f32 %v3026, %v3031
    %v3033 = vadd.f32 %v3027, %v3031
    %s3034 = scalar_lea.vmem [#allocation5], 128
    %v3035 = vld [vmem:[%s3034] sm:$0xff]
    %v3036 = vld [vmem:[%s3034 + $0x8] sm:$0xff]
    %v3037 = vld [vmem:[%s3034 + $0x10] sm:$0xff]
    %v3038 = vld [vmem:[%s3034 + $0x18] sm:$0xff]
    %v3039 = vlaneseq
    %v3040 = vshrl.u32 %v3039, 7
    %v3041 = vsub.s32 0, %v3040
    %v3042 = vrot.slane %v2103, %v3041
    %v3044 = vsel %vm67, %v3032, 0
    %v3047 = vsel %vm67, %v3033, 0
    %3049 = vmatprep.subr.mxu0 0.0
    %3050 = vmatpush1.msra.mxu0 0.0
    %3051 = vmatprep.subr.mxu0 0.0
    %3052 = vmatpush1.msra.mxu0 0.0
    %3053 = vmatprep.subr.mxu0 0.0
    %3054 = vmatpush1.msra.mxu0 0.0
    %3055 = vmatprep.subr.mxu0 0.0
    %3056 = vmatpush1.msra.mxu0 0.0
    %3057 = vmatprep.subr.mxu0 0.0
    %3058 = vmatpush1.msra.mxu0 0.0
    %3059 = vmatprep.subr.mxu0 0.0
    %3060 = vmatpush1.msra.mxu0 0.0
    %3061 = vmatprep.subr.mxu0 0.0
    %3062 = vmatpush1.msra.mxu0 0.0
    %3063 = vmatprep.subr.mxu0 0.0
    %3064 = vmatpush1.msra.mxu0 0.0
    %3065 = vmatprep.subr.mxu0 0.0
    %3066 = vmatpush1.msra.mxu0 0.0
    %3067 = vmatprep.subr.mxu0 0.0
    %3068 = vmatpush1.msra.mxu0 0.0
    %3069 = vmatprep.subr.mxu0 0.0
    %3070 = vmatpush1.msra.mxu0 0.0
    %3071 = vmatprep.subr.mxu0 0.0
    %3072 = vmatpush1.msra.mxu0 0.0
    %3073 = vmatprep.subr.mxu0 0.0
    %3074 = vmatpush1.msra.mxu0 %v3038
    %3075 = vmatprep.subr.mxu0 0.0
    %3076 = vmatpush1.msra.mxu0 %v3037
    %3077 = vmatprep.subr.mxu0 0.0
    %3078 = vmatpush1.msra.mxu0 %v3036
    %3079 = vmatprep.subr.mxu0 0.0
    %3080 = vmatpush1.msra.mxu0 %v3035
    %3081 = vmatprep.subr.mxu0 0.0
    %3082 = vmatpush2.msra.mxu0 0.0
    %3083 = vmatprep.subr.mxu0 0.0
    %3084 = vmatpush2.msra.mxu0 0.0
    %3085 = vmatprep.subr.mxu0 0.0
    %3086 = vmatpush2.msra.mxu0 0.0
    %3087 = vmatprep.subr.mxu0 0.0
    %3088 = vmatpush2.msra.mxu0 0.0
    %3089 = vmatprep.subr.mxu0 0.0
    %3090 = vmatpush2.msra.mxu0 0.0
    %3091 = vmatprep.subr.mxu0 0.0
    %3092 = vmatpush2.msra.mxu0 0.0
    %3093 = vmatprep.subr.mxu0 0.0
    %3094 = vmatpush2.msra.mxu0 0.0
    %3095 = vmatprep.subr.mxu0 0.0
    %3096 = vmatpush2.msra.mxu0 0.0
    %3097 = vmatprep.subr.mxu0 0.0
    %3098 = vmatpush2.msra.mxu0 0.0
    %3099 = vmatprep.subr.mxu0 0.0
    %3100 = vmatpush2.msra.mxu0 0.0
    %3101 = vmatprep.subr.mxu0 0.0
    %3102 = vmatpush2.msra.mxu0 0.0
    %3103 = vmatprep.subr.mxu0 0.0
    %3104 = vmatpush2.msra.mxu0 0.0
    %3105 = vmatprep.subr.mxu0 0.0
    %3106 = vmatpush2.msra.mxu0 0.0
    %3107 = vmatprep.subr.mxu0 0.0
    %3108 = vmatpush2.msra.mxu0 0.0
    %3109 = vmatprep.subr.mxu0 0.0
    %3110 = vmatpush2.msra.mxu0 0.0
    %3111 = vmatprep.subr.mxu0 0.0
    %3112 = vmatpush2.msra.mxu0 0.0
    %3113 = vmatprep.mubr.f32.mxu0 0.0
    %3114 = vmatmul.mubr.f32.gmra.mxu0 %v3044
    %v3115 = vpop.f32.mrf.mxu0
    %v3116 = vadd.f32 %v3042, %v3115
    %v3117 = vpop.f32.mrf.mxu0
    %3118 = vmatprep.mubr.f32.mxu0 0.0
    %3119 = vmatmul.mubr.f32.gmra.mxu0 %v3047
    %v3120 = vpop.f32.mrf.mxu0
    %v3121 = vadd.f32 %v3042, %v3120
    %v3122 = vpop.f32.mrf.mxu0
    %3123 = vmatprep.mubr.f32.mxu0 0.0
    %3124 = vmatmul.mubr.f32.gmra.mxu0 %v1006
    %v3125 = vpop.f32.mrf.mxu0
    %v3126 = vadd.f32 %v3042, %v3125
    %v3127 = vpop.f32.mrf.mxu0
    %3128 = vmatprep.mubr.f32.mxu0 0.0
    %3129 = vmatmul.mubr.f32.gmra.mxu0 %v1009
    %v3130 = vpop.f32.mrf.mxu0
    %v3131 = vadd.f32 %v3042, %v3130
    %v3132 = vpop.f32.mrf.mxu0
    %3133 = vdwg.mxu0
    %3136 = vrot.lane.b32.xlu0 %v3116, 112
    %v3137 = vpop.permute.xlu0 %3136
    %3138 = vrot.lane.b32.xlu0 %v3121, 112
    %v3139 = vpop.permute.xlu0 %3138
    %3142 = vrot.lane.b32.xlu0 %v3126, 112
    %v3143 = vpop.permute.xlu0 %3142
    %3144 = vrot.lane.b32.xlu0 %v3131, 112
    %v3145 = vpop.permute.xlu0 %3144
    %3146 = vrot.lane.b32.xlu0 %v3126, 96
    %v3147 = vpop.permute.xlu0 %3146
    %v3148 = vsel %vm157, %v3116, 0
    %v3150 = vsel %vm157, %v3147, 0
    %3152 = vmatprep.subr.mxu0 0.0
    %3153 = vmatpush1.xpose.msra.mxu0 0.0
    %3154 = vmatprep.subr.mxu0 0.0
    %3155 = vmatpush1.xpose.msra.mxu0 0.0
    %3156 = vmatprep.subr.mxu0 0.0
    %3157 = vmatpush1.xpose.msra.mxu0 0.0
    %3158 = vmatprep.subr.mxu0 0.0
    %3159 = vmatpush1.xpose.msra.mxu0 0.0
    %3160 = vmatprep.subr.mxu0 0.0
    %3161 = vmatpush1.xpose.msra.mxu0 0.0
    %3162 = vmatprep.subr.mxu0 0.0
    %3163 = vmatpush1.xpose.msra.mxu0 0.0
    %3164 = vmatprep.subr.mxu0 0.0
    %3165 = vmatpush1.xpose.msra.mxu0 0.0
    %3166 = vmatprep.subr.mxu0 0.0
    %3167 = vmatpush1.xpose.msra.mxu0 0.0
    %3168 = vmatprep.subr.mxu0 0.0
    %3169 = vmatpush1.xpose.msra.mxu0 0.0
    %3170 = vmatprep.subr.mxu0 0.0
    %3171 = vmatpush1.xpose.msra.mxu0 0.0
    %3172 = vmatprep.subr.mxu0 0.0
    %3173 = vmatpush1.xpose.msra.mxu0 0.0
    %3174 = vmatprep.subr.mxu0 0.0
    %3175 = vmatpush1.xpose.msra.mxu0 0.0
    %3176 = vmatprep.subr.mxu0 0.0
    %3177 = vmatpush1.xpose.msra.mxu0 0.0
    %3178 = vmatprep.subr.mxu0 0.0
    %3179 = vmatpush1.xpose.msra.mxu0 0.0
    %3180 = vmatprep.subr.mxu0 0.0
    %3181 = vmatpush1.xpose.msra.mxu0 0.0
    %3182 = vmatprep.subr.mxu0 0.0
    %3183 = vmatpush1.xpose.msra.mxu0 %v3150
    %3184 = vmatprep.subr.mxu0 0.0
    %3185 = vmatpush2.xpose.msra.mxu0 0.0
    %3186 = vmatprep.subr.mxu0 0.0
    %3187 = vmatpush2.xpose.msra.mxu0 0.0
    %3188 = vmatprep.subr.mxu0 0.0
    %3189 = vmatpush2.xpose.msra.mxu0 0.0
    %3190 = vmatprep.subr.mxu0 0.0
    %3191 = vmatpush2.xpose.msra.mxu0 0.0
    %3192 = vmatprep.subr.mxu0 0.0
    %3193 = vmatpush2.xpose.msra.mxu0 0.0
    %3194 = vmatprep.subr.mxu0 0.0
    %3195 = vmatpush2.xpose.msra.mxu0 0.0
    %3196 = vmatprep.subr.mxu0 0.0
    %3197 = vmatpush2.xpose.msra.mxu0 0.0
    %3198 = vmatprep.subr.mxu0 0.0
    %3199 = vmatpush2.xpose.msra.mxu0 0.0
    %3200 = vmatprep.subr.mxu0 0.0
    %3201 = vmatpush2.xpose.msra.mxu0 0.0
    %3202 = vmatprep.subr.mxu0 0.0
    %3203 = vmatpush2.xpose.msra.mxu0 0.0
    %3204 = vmatprep.subr.mxu0 0.0
    %3205 = vmatpush2.xpose.msra.mxu0 0.0
    %3206 = vmatprep.subr.mxu0 0.0
    %3207 = vmatpush2.xpose.msra.mxu0 0.0
    %3208 = vmatprep.subr.mxu0 0.0
    %3209 = vmatpush2.xpose.msra.mxu0 0.0
    %3210 = vmatprep.subr.mxu0 0.0
    %3211 = vmatpush2.xpose.msra.mxu0 0.0
    %3212 = vmatprep.subr.mxu0 0.0
    %3213 = vmatpush2.xpose.msra.mxu0 0.0
    %3214 = vmatprep.subr.mxu0 0.0
    %3215 = vmatpush2.xpose.msra.mxu0 0.0
    %3216 = vmatprep.mubr.f32.mxu0 0.0
    %3217 = vmatmul.mubr.f32.gmra.mxu0 %v3148
    %v3218 = vpop.f32.mrf.mxu0
    %v3219 = vadd.f32 0.0, %v3218
    %v3220 = vpop.f32.mrf.mxu0
    %3221 = vdwg.mxu0
    %3222 = vrot.lane.b32.xlu0 %v3131, 96
    %v3223 = vpop.permute.xlu0 %3222
    %v3224 = vsel %vm157, %v3121, 0
    %v3226 = vsel %vm157, %v3223, 0
    %3228 = vmatprep.subr.mxu0 0.0
    %3229 = vmatpush1.xpose.msra.mxu0 0.0
    %3230 = vmatprep.subr.mxu0 0.0
    %3231 = vmatpush1.xpose.msra.mxu0 0.0
    %3232 = vmatprep.subr.mxu0 0.0
    %3233 = vmatpush1.xpose.msra.mxu0 0.0
    %3234 = vmatprep.subr.mxu0 0.0
    %3235 = vmatpush1.xpose.msra.mxu0 0.0
    %3236 = vmatprep.subr.mxu0 0.0
    %3237 = vmatpush1.xpose.msra.mxu0 0.0
    %3238 = vmatprep.subr.mxu0 0.0
    %3239 = vmatpush1.xpose.msra.mxu0 0.0
    %3240 = vmatprep.subr.mxu0 0.0
    %3241 = vmatpush1.xpose.msra.mxu0 0.0
    %3242 = vmatprep.subr.mxu0 0.0
    %3243 = vmatpush1.xpose.msra.mxu0 0.0
    %3244 = vmatprep.subr.mxu0 0.0
    %3245 = vmatpush1.xpose.msra.mxu0 0.0
    %3246 = vmatprep.subr.mxu0 0.0
    %3247 = vmatpush1.xpose.msra.mxu0 0.0
    %3248 = vmatprep.subr.mxu0 0.0
    %3249 = vmatpush1.xpose.msra.mxu0 0.0
    %3250 = vmatprep.subr.mxu0 0.0
    %3251 = vmatpush1.xpose.msra.mxu0 0.0
    %3252 = vmatprep.subr.mxu0 0.0
    %3253 = vmatpush1.xpose.msra.mxu0 0.0
    %3254 = vmatprep.subr.mxu0 0.0
    %3255 = vmatpush1.xpose.msra.mxu0 0.0
    %3256 = vmatprep.subr.mxu0 0.0
    %3257 = vmatpush1.xpose.msra.mxu0 0.0
    %3258 = vmatprep.subr.mxu0 0.0
    %3259 = vmatpush1.xpose.msra.mxu0 %v3226
    %3260 = vmatprep.subr.mxu0 0.0
    %3261 = vmatpush2.xpose.msra.mxu0 0.0
    %3262 = vmatprep.subr.mxu0 0.0
    %3263 = vmatpush2.xpose.msra.mxu0 0.0
    %3264 = vmatprep.subr.mxu0 0.0
    %3265 = vmatpush2.xpose.msra.mxu0 0.0
    %3266 = vmatprep.subr.mxu0 0.0
    %3267 = vmatpush2.xpose.msra.mxu0 0.0
    %3268 = vmatprep.subr.mxu0 0.0
    %3269 = vmatpush2.xpose.msra.mxu0 0.0
    %3270 = vmatprep.subr.mxu0 0.0
    %3271 = vmatpush2.xpose.msra.mxu0 0.0
    %3272 = vmatprep.subr.mxu0 0.0
    %3273 = vmatpush2.xpose.msra.mxu0 0.0
    %3274 = vmatprep.subr.mxu0 0.0
    %3275 = vmatpush2.xpose.msra.mxu0 0.0
    %3276 = vmatprep.subr.mxu0 0.0
    %3277 = vmatpush2.xpose.msra.mxu0 0.0
    %3278 = vmatprep.subr.mxu0 0.0
    %3279 = vmatpush2.xpose.msra.mxu0 0.0
    %3280 = vmatprep.subr.mxu0 0.0
    %3281 = vmatpush2.xpose.msra.mxu0 0.0
    %3282 = vmatprep.subr.mxu0 0.0
    %3283 = vmatpush2.xpose.msra.mxu0 0.0
    %3284 = vmatprep.subr.mxu0 0.0
    %3285 = vmatpush2.xpose.msra.mxu0 0.0
    %3286 = vmatprep.subr.mxu0 0.0
    %3287 = vmatpush2.xpose.msra.mxu0 0.0
    %3288 = vmatprep.subr.mxu0 0.0
    %3289 = vmatpush2.xpose.msra.mxu0 0.0
    %3290 = vmatprep.subr.mxu0 0.0
    %3291 = vmatpush2.xpose.msra.mxu0 0.0
    %3292 = vmatprep.mubr.f32.mxu0 0.0
    %3293 = vmatmul.mubr.f32.gmra.mxu0 %v3224
    %v3294 = vpop.f32.mrf.mxu0
    %v3295 = vadd.f32 0.0, %v3294
    %v3296 = vpop.f32.mrf.mxu0
    %3297 = vdwg.mxu0
    %3298 = vrot.lane.b32.xlu0 %v3143, 96
    %v3299 = vpop.permute.xlu0 %3298
    %v3300 = vsel %vm157, %v3137, 0
    %v3302 = vsel %vm157, %v3299, 0
    %3304 = vmatprep.subr.mxu0 0.0
    %3305 = vmatpush1.xpose.msra.mxu0 0.0
    %3306 = vmatprep.subr.mxu0 0.0
    %3307 = vmatpush1.xpose.msra.mxu0 0.0
    %3308 = vmatprep.subr.mxu0 0.0
    %3309 = vmatpush1.xpose.msra.mxu0 0.0
    %3310 = vmatprep.subr.mxu0 0.0
    %3311 = vmatpush1.xpose.msra.mxu0 0.0
    %3312 = vmatprep.subr.mxu0 0.0
    %3313 = vmatpush1.xpose.msra.mxu0 0.0
    %3314 = vmatprep.subr.mxu0 0.0
    %3315 = vmatpush1.xpose.msra.mxu0 0.0
    %3316 = vmatprep.subr.mxu0 0.0
    %3317 = vmatpush1.xpose.msra.mxu0 0.0
    %3318 = vmatprep.subr.mxu0 0.0
    %3319 = vmatpush1.xpose.msra.mxu0 0.0
    %3320 = vmatprep.subr.mxu0 0.0
    %3321 = vmatpush1.xpose.msra.mxu0 0.0
    %3322 = vmatprep.subr.mxu0 0.0
    %3323 = vmatpush1.xpose.msra.mxu0 0.0
    %3324 = vmatprep.subr.mxu0 0.0
    %3325 = vmatpush1.xpose.msra.mxu0 0.0
    %3326 = vmatprep.subr.mxu0 0.0
    %3327 = vmatpush1.xpose.msra.mxu0 0.0
    %3328 = vmatprep.subr.mxu0 0.0
    %3329 = vmatpush1.xpose.msra.mxu0 0.0
    %3330 = vmatprep.subr.mxu0 0.0
    %3331 = vmatpush1.xpose.msra.mxu0 0.0
    %3332 = vmatprep.subr.mxu0 0.0
    %3333 = vmatpush1.xpose.msra.mxu0 0.0
    %3334 = vmatprep.subr.mxu0 0.0
    %3335 = vmatpush1.xpose.msra.mxu0 %v3302
    %3336 = vmatprep.subr.mxu0 0.0
    %3337 = vmatpush2.xpose.msra.mxu0 0.0
    %3338 = vmatprep.subr.mxu0 0.0
    %3339 = vmatpush2.xpose.msra.mxu0 0.0
    %3340 = vmatprep.subr.mxu0 0.0
    %3341 = vmatpush2.xpose.msra.mxu0 0.0
    %3342 = vmatprep.subr.mxu0 0.0
    %3343 = vmatpush2.xpose.msra.mxu0 0.0
    %3344 = vmatprep.subr.mxu0 0.0
    %3345 = vmatpush2.xpose.msra.mxu0 0.0
    %3346 = vmatprep.subr.mxu0 0.0
    %3347 = vmatpush2.xpose.msra.mxu0 0.0
    %3348 = vmatprep.subr.mxu0 0.0
    %3349 = vmatpush2.xpose.msra.mxu0 0.0
    %3350 = vmatprep.subr.mxu0 0.0
    %3351 = vmatpush2.xpose.msra.mxu0 0.0
    %3352 = vmatprep.subr.mxu0 0.0
    %3353 = vmatpush2.xpose.msra.mxu0 0.0
    %3354 = vmatprep.subr.mxu0 0.0
    %3355 = vmatpush2.xpose.msra.mxu0 0.0
    %3356 = vmatprep.subr.mxu0 0.0
    %3357 = vmatpush2.xpose.msra.mxu0 0.0
    %3358 = vmatprep.subr.mxu0 0.0
    %3359 = vmatpush2.xpose.msra.mxu0 0.0
    %3360 = vmatprep.subr.mxu0 0.0
    %3361 = vmatpush2.xpose.msra.mxu0 0.0
    %3362 = vmatprep.subr.mxu0 0.0
    %3363 = vmatpush2.xpose.msra.mxu0 0.0
    %3364 = vmatprep.subr.mxu0 0.0
    %3365 = vmatpush2.xpose.msra.mxu0 0.0
    %3366 = vmatprep.subr.mxu0 0.0
    %3367 = vmatpush2.xpose.msra.mxu0 0.0
    %3368 = vmatprep.mubr.f32.mxu0 0.0
    %3369 = vmatmul.mubr.f32.gmra.mxu0 %v3300
    %v3370 = vpop.f32.mrf.mxu0
    %v3371 = vadd.f32 0.0, %v3370
    %v3372 = vpop.f32.mrf.mxu0
    %3373 = vdwg.mxu0
    %3374 = vrot.lane.b32.xlu0 %v3145, 96
    %v3375 = vpop.permute.xlu0 %3374
    %v3376 = vsel %vm157, %v3139, 0
    %v3378 = vsel %vm157, %v3375, 0
    %3380 = vmatprep.subr.mxu0 0.0
    %3381 = vmatpush1.xpose.msra.mxu0 0.0
    %3382 = vmatprep.subr.mxu0 0.0
    %3383 = vmatpush1.xpose.msra.mxu0 0.0
    %3384 = vmatprep.subr.mxu0 0.0
    %3385 = vmatpush1.xpose.msra.mxu0 0.0
    %3386 = vmatprep.subr.mxu0 0.0
    %3387 = vmatpush1.xpose.msra.mxu0 0.0
    %3388 = vmatprep.subr.mxu0 0.0
    %3389 = vmatpush1.xpose.msra.mxu0 0.0
    %3390 = vmatprep.subr.mxu0 0.0
    %3391 = vmatpush1.xpose.msra.mxu0 0.0
    %3392 = vmatprep.subr.mxu0 0.0
    %3393 = vmatpush1.xpose.msra.mxu0 0.0
    %3394 = vmatprep.subr.mxu0 0.0
    %3395 = vmatpush1.xpose.msra.mxu0 0.0
    %3396 = vmatprep.subr.mxu0 0.0
    %3397 = vmatpush1.xpose.msra.mxu0 0.0
    %3398 = vmatprep.subr.mxu0 0.0
    %3399 = vmatpush1.xpose.msra.mxu0 0.0
    %3400 = vmatprep.subr.mxu0 0.0
    %3401 = vmatpush1.xpose.msra.mxu0 0.0
    %3402 = vmatprep.subr.mxu0 0.0
    %3403 = vmatpush1.xpose.msra.mxu0 0.0
    %3404 = vmatprep.subr.mxu0 0.0
    %3405 = vmatpush1.xpose.msra.mxu0 0.0
    %3406 = vmatprep.subr.mxu0 0.0
    %3407 = vmatpush1.xpose.msra.mxu0 0.0
    %3408 = vmatprep.subr.mxu0 0.0
    %3409 = vmatpush1.xpose.msra.mxu0 0.0
    %3410 = vmatprep.subr.mxu0 0.0
    %3411 = vmatpush1.xpose.msra.mxu0 %v3378
    %3412 = vmatprep.subr.mxu0 0.0
    %3413 = vmatpush2.xpose.msra.mxu0 0.0
    %3414 = vmatprep.subr.mxu0 0.0
    %3415 = vmatpush2.xpose.msra.mxu0 0.0
    %3416 = vmatprep.subr.mxu0 0.0
    %3417 = vmatpush2.xpose.msra.mxu0 0.0
    %3418 = vmatprep.subr.mxu0 0.0
    %3419 = vmatpush2.xpose.msra.mxu0 0.0
    %3420 = vmatprep.subr.mxu0 0.0
    %3421 = vmatpush2.xpose.msra.mxu0 0.0
    %3422 = vmatprep.subr.mxu0 0.0
    %3423 = vmatpush2.xpose.msra.mxu0 0.0
    %3424 = vmatprep.subr.mxu0 0.0
    %3425 = vmatpush2.xpose.msra.mxu0 0.0
    %3426 = vmatprep.subr.mxu0 0.0
    %3427 = vmatpush2.xpose.msra.mxu0 0.0
    %3428 = vmatprep.subr.mxu0 0.0
    %3429 = vmatpush2.xpose.msra.mxu0 0.0
    %3430 = vmatprep.subr.mxu0 0.0
    %3431 = vmatpush2.xpose.msra.mxu0 0.0
    %3432 = vmatprep.subr.mxu0 0.0
    %3433 = vmatpush2.xpose.msra.mxu0 0.0
    %3434 = vmatprep.subr.mxu0 0.0
    %3435 = vmatpush2.xpose.msra.mxu0 0.0
    %3436 = vmatprep.subr.mxu0 0.0
    %3437 = vmatpush2.xpose.msra.mxu0 0.0
    %3438 = vmatprep.subr.mxu0 0.0
    %3439 = vmatpush2.xpose.msra.mxu0 0.0
    %3440 = vmatprep.subr.mxu0 0.0
    %3441 = vmatpush2.xpose.msra.mxu0 0.0
    %3442 = vmatprep.subr.mxu0 0.0
    %3443 = vmatpush2.xpose.msra.mxu0 0.0
    %3444 = vmatprep.mubr.f32.mxu0 0.0
    %3445 = vmatmul.mubr.f32.gmra.mxu0 %v3376
    %v3446 = vpop.f32.mrf.mxu0
    %v3447 = vadd.f32 0.0, %v3446
    %v3448 = vpop.f32.mrf.mxu0
    %3449 = vdwg.mxu0
    %v3450 = vsel %vm460, %v3219, -inf
    %3451 = vmax.xlane.f32.xlu0 %v3450
    %v3452 = vpop.xlane.xlu0 %3451
    %v3453 = vsel %vm460, %v3295, -inf
    %3454 = vmax.xlane.f32.xlu0 %v3453
    %v3455 = vpop.xlane.xlu0 %3454
    %v3456 = vsel %vm460, %v3371, -inf
    %3457 = vmax.xlane.f32.xlu0 %v3456
    %v3458 = vpop.xlane.xlu0 %3457
    %v3459 = vsel %vm460, %v3447, -inf
    %3460 = vmax.xlane.f32.xlu0 %v3459
    %v3461 = vpop.xlane.xlu0 %3460
    %v3462 = vsub.f32 %v3219, %v3452
    %v3463 = vsub.f32 %v3295, %v3455
    %v3464 = vsub.f32 %v3371, %v3458
    %v3465 = vsub.f32 %v3447, %v3461
    %v3466 = vmul.f32 %v3462, 1.442695
    %v3467 = vpow.pop %v3466
    %v3468 = vmul.f32 %v3463, 1.442695
    %v3469 = vpow.pop %v3468
    %v3470 = vmul.f32 %v3464, 1.442695
    %v3471 = vpow.pop %v3470
    %v3472 = vmul.f32 %v3465, 1.442695
    %v3473 = vpow.pop %v3472
    %v3474 = vsel %vm460, %v3467, 0.0
    %3475 = vadd.xlane.f32.xlu0 %v3474
    %v3476 = vpop.xlane.xlu0 %3475
    %v3477 = vsel %vm460, %v3469, 0.0
    %3478 = vadd.xlane.f32.xlu0 %v3477
    %v3479 = vpop.xlane.xlu0 %3478
    %v3480 = vsel %vm460, %v3471, 0.0
    %3481 = vadd.xlane.f32.xlu0 %v3480
    %v3482 = vpop.xlane.xlu0 %3481
    %v3483 = vsel %vm460, %v3473, 0.0
    %3484 = vadd.xlane.f32.xlu0 %v3483
    %v3485 = vpop.xlane.xlu0 %3484
    %v3486 = vrcp.pop %v3476
    %v3487 = vrcp.pop %v3479
    %v3488 = vrcp.pop %v3482
    %v3489 = vrcp.pop %v3485
    %v3490 = vmul.f32 %v3467, %v3486
    %v3491 = vmul.f32 %v3469, %v3487
    %v3492 = vmul.f32 %v3471, %v3488
    %v3493 = vmul.f32 %v3473, %v3489
    %3494 = vrot.lane.b32.xlu0 %v3126, 64
    %v3495 = vpop.permute.xlu0 %3494
    %v3498 = vsel %vm460, %v3490, 0
    %3500 = vmatprep.subr.mxu0 0.0
    %3501 = vmatpush1.msra.mxu0 0.0
    %3502 = vmatprep.subr.mxu0 0.0
    %3503 = vmatpush1.msra.mxu0 0.0
    %3504 = vmatprep.subr.mxu0 0.0
    %3505 = vmatpush1.msra.mxu0 0.0
    %3506 = vmatprep.subr.mxu0 0.0
    %3507 = vmatpush1.msra.mxu0 0.0
    %3508 = vmatprep.subr.mxu0 0.0
    %3509 = vmatpush1.msra.mxu0 0.0
    %3510 = vmatprep.subr.mxu0 0.0
    %3511 = vmatpush1.msra.mxu0 0.0
    %3512 = vmatprep.subr.mxu0 0.0
    %3513 = vmatpush1.msra.mxu0 0.0
    %3514 = vmatprep.subr.mxu0 0.0
    %3515 = vmatpush1.msra.mxu0 0.0
    %3516 = vmatprep.subr.mxu0 0.0
    %3517 = vmatpush1.msra.mxu0 0.0
    %3518 = vmatprep.subr.mxu0 0.0
    %3519 = vmatpush1.msra.mxu0 0.0
    %3520 = vmatprep.subr.mxu0 0.0
    %3521 = vmatpush1.msra.mxu0 0.0
    %3522 = vmatprep.subr.mxu0 0.0
    %3523 = vmatpush1.msra.mxu0 0.0
    %3524 = vmatprep.subr.mxu0 0.0
    %3525 = vmatpush1.msra.mxu0 0.0
    %3526 = vmatprep.subr.mxu0 0.0
    %3527 = vmatpush1.msra.mxu0 0.0
    %3528 = vmatprep.subr.mxu0 0.0
    %3529 = vmatpush1.msra.mxu0 0.0
    %3530 = vmatprep.subr.mxu0 0.0
    %3531 = vmatpush1.msra.mxu0 %v3495
    %3532 = vmatprep.subr.mxu0 0.0
    %3533 = vmatpush2.msra.mxu0 0.0
    %3534 = vmatprep.subr.mxu0 0.0
    %3535 = vmatpush2.msra.mxu0 0.0
    %3536 = vmatprep.subr.mxu0 0.0
    %3537 = vmatpush2.msra.mxu0 0.0
    %3538 = vmatprep.subr.mxu0 0.0
    %3539 = vmatpush2.msra.mxu0 0.0
    %3540 = vmatprep.subr.mxu0 0.0
    %3541 = vmatpush2.msra.mxu0 0.0
    %3542 = vmatprep.subr.mxu0 0.0
    %3543 = vmatpush2.msra.mxu0 0.0
    %3544 = vmatprep.subr.mxu0 0.0
    %3545 = vmatpush2.msra.mxu0 0.0
    %3546 = vmatprep.subr.mxu0 0.0
    %3547 = vmatpush2.msra.mxu0 0.0
    %3548 = vmatprep.subr.mxu0 0.0
    %3549 = vmatpush2.msra.mxu0 0.0
    %3550 = vmatprep.subr.mxu0 0.0
    %3551 = vmatpush2.msra.mxu0 0.0
    %3552 = vmatprep.subr.mxu0 0.0
    %3553 = vmatpush2.msra.mxu0 0.0
    %3554 = vmatprep.subr.mxu0 0.0
    %3555 = vmatpush2.msra.mxu0 0.0
    %3556 = vmatprep.subr.mxu0 0.0
    %3557 = vmatpush2.msra.mxu0 0.0
    %3558 = vmatprep.subr.mxu0 0.0
    %3559 = vmatpush2.msra.mxu0 0.0
    %3560 = vmatprep.subr.mxu0 0.0
    %3561 = vmatpush2.msra.mxu0 0.0
    %3562 = vmatprep.subr.mxu0 0.0
    %3563 = vmatpush2.msra.mxu0 0.0
    %3564 = vmatprep.mubr.f32.mxu0 0.0
    %3565 = vmatmul.mubr.f32.gmra.mxu0 %v3498
    %v3566 = vpop.f32.mrf.mxu0
    %v3567 = vadd.f32 0.0, %v3566
    %v3568 = vpop.f32.mrf.mxu0
    %3569 = vdwg.mxu0
    %3570 = vrot.lane.b32.xlu0 %v3131, 64
    %v3571 = vpop.permute.xlu0 %3570
    %v3574 = vsel %vm460, %v3491, 0
    %3576 = vmatprep.subr.mxu0 0.0
    %3577 = vmatpush1.msra.mxu0 0.0
    %3578 = vmatprep.subr.mxu0 0.0
    %3579 = vmatpush1.msra.mxu0 0.0
    %3580 = vmatprep.subr.mxu0 0.0
    %3581 = vmatpush1.msra.mxu0 0.0
    %3582 = vmatprep.subr.mxu0 0.0
    %3583 = vmatpush1.msra.mxu0 0.0
    %3584 = vmatprep.subr.mxu0 0.0
    %3585 = vmatpush1.msra.mxu0 0.0
    %3586 = vmatprep.subr.mxu0 0.0
    %3587 = vmatpush1.msra.mxu0 0.0
    %3588 = vmatprep.subr.mxu0 0.0
    %3589 = vmatpush1.msra.mxu0 0.0
    %3590 = vmatprep.subr.mxu0 0.0
    %3591 = vmatpush1.msra.mxu0 0.0
    %3592 = vmatprep.subr.mxu0 0.0
    %3593 = vmatpush1.msra.mxu0 0.0
    %3594 = vmatprep.subr.mxu0 0.0
    %3595 = vmatpush1.msra.mxu0 0.0
    %3596 = vmatprep.subr.mxu0 0.0
    %3597 = vmatpush1.msra.mxu0 0.0
    %3598 = vmatprep.subr.mxu0 0.0
    %3599 = vmatpush1.msra.mxu0 0.0
    %3600 = vmatprep.subr.mxu0 0.0
    %3601 = vmatpush1.msra.mxu0 0.0
    %3602 = vmatprep.subr.mxu0 0.0
    %3603 = vmatpush1.msra.mxu0 0.0
    %3604 = vmatprep.subr.mxu0 0.0
    %3605 = vmatpush1.msra.mxu0 0.0
    %3606 = vmatprep.subr.mxu0 0.0
    %3607 = vmatpush1.msra.mxu0 %v3571
    %3608 = vmatprep.subr.mxu0 0.0
    %3609 = vmatpush2.msra.mxu0 0.0
    %3610 = vmatprep.subr.mxu0 0.0
    %3611 = vmatpush2.msra.mxu0 0.0
    %3612 = vmatprep.subr.mxu0 0.0
    %3613 = vmatpush2.msra.mxu0 0.0
    %3614 = vmatprep.subr.mxu0 0.0
    %3615 = vmatpush2.msra.mxu0 0.0
    %3616 = vmatprep.subr.mxu0 0.0
    %3617 = vmatpush2.msra.mxu0 0.0
    %3618 = vmatprep.subr.mxu0 0.0
    %3619 = vmatpush2.msra.mxu0 0.0
    %3620 = vmatprep.subr.mxu0 0.0
    %3621 = vmatpush2.msra.mxu0 0.0
    %3622 = vmatprep.subr.mxu0 0.0
    %3623 = vmatpush2.msra.mxu0 0.0
    %3624 = vmatprep.subr.mxu0 0.0
    %3625 = vmatpush2.msra.mxu0 0.0
    %3626 = vmatprep.subr.mxu0 0.0
    %3627 = vmatpush2.msra.mxu0 0.0
    %3628 = vmatprep.subr.mxu0 0.0
    %3629 = vmatpush2.msra.mxu0 0.0
    %3630 = vmatprep.subr.mxu0 0.0
    %3631 = vmatpush2.msra.mxu0 0.0
    %3632 = vmatprep.subr.mxu0 0.0
    %3633 = vmatpush2.msra.mxu0 0.0
    %3634 = vmatprep.subr.mxu0 0.0
    %3635 = vmatpush2.msra.mxu0 0.0
    %3636 = vmatprep.subr.mxu0 0.0
    %3637 = vmatpush2.msra.mxu0 0.0
    %3638 = vmatprep.subr.mxu0 0.0
    %3639 = vmatpush2.msra.mxu0 0.0
    %3640 = vmatprep.mubr.f32.mxu0 0.0
    %3641 = vmatmul.mubr.f32.gmra.mxu0 %v3574
    %v3642 = vpop.f32.mrf.mxu0
    %v3643 = vadd.f32 0.0, %v3642
    %v3644 = vpop.f32.mrf.mxu0
    %3645 = vdwg.mxu0
    %3646 = vrot.lane.b32.xlu0 %v3143, 64
    %v3647 = vpop.permute.xlu0 %3646
    %v3650 = vsel %vm460, %v3492, 0
    %3652 = vmatprep.subr.mxu0 0.0
    %3653 = vmatpush1.msra.mxu0 0.0
    %3654 = vmatprep.subr.mxu0 0.0
    %3655 = vmatpush1.msra.mxu0 0.0
    %3656 = vmatprep.subr.mxu0 0.0
    %3657 = vmatpush1.msra.mxu0 0.0
    %3658 = vmatprep.subr.mxu0 0.0
    %3659 = vmatpush1.msra.mxu0 0.0
    %3660 = vmatprep.subr.mxu0 0.0
    %3661 = vmatpush1.msra.mxu0 0.0
    %3662 = vmatprep.subr.mxu0 0.0
    %3663 = vmatpush1.msra.mxu0 0.0
    %3664 = vmatprep.subr.mxu0 0.0
    %3665 = vmatpush1.msra.mxu0 0.0
    %3666 = vmatprep.subr.mxu0 0.0
    %3667 = vmatpush1.msra.mxu0 0.0
    %3668 = vmatprep.subr.mxu0 0.0
    %3669 = vmatpush1.msra.mxu0 0.0
    %3670 = vmatprep.subr.mxu0 0.0
    %3671 = vmatpush1.msra.mxu0 0.0
    %3672 = vmatprep.subr.mxu0 0.0
    %3673 = vmatpush1.msra.mxu0 0.0
    %3674 = vmatprep.subr.mxu0 0.0
    %3675 = vmatpush1.msra.mxu0 0.0
    %3676 = vmatprep.subr.mxu0 0.0
    %3677 = vmatpush1.msra.mxu0 0.0
    %3678 = vmatprep.subr.mxu0 0.0
    %3679 = vmatpush1.msra.mxu0 0.0
    %3680 = vmatprep.subr.mxu0 0.0
    %3681 = vmatpush1.msra.mxu0 0.0
    %3682 = vmatprep.subr.mxu0 0.0
    %3683 = vmatpush1.msra.mxu0 %v3647
    %3684 = vmatprep.subr.mxu0 0.0
    %3685 = vmatpush2.msra.mxu0 0.0
    %3686 = vmatprep.subr.mxu0 0.0
    %3687 = vmatpush2.msra.mxu0 0.0
    %3688 = vmatprep.subr.mxu0 0.0
    %3689 = vmatpush2.msra.mxu0 0.0
    %3690 = vmatprep.subr.mxu0 0.0
    %3691 = vmatpush2.msra.mxu0 0.0
    %3692 = vmatprep.subr.mxu0 0.0
    %3693 = vmatpush2.msra.mxu0 0.0
    %3694 = vmatprep.subr.mxu0 0.0
    %3695 = vmatpush2.msra.mxu0 0.0
    %3696 = vmatprep.subr.mxu0 0.0
    %3697 = vmatpush2.msra.mxu0 0.0
    %3698 = vmatprep.subr.mxu0 0.0
    %3699 = vmatpush2.msra.mxu0 0.0
    %3700 = vmatprep.subr.mxu0 0.0
    %3701 = vmatpush2.msra.mxu0 0.0
    %3702 = vmatprep.subr.mxu0 0.0
    %3703 = vmatpush2.msra.mxu0 0.0
    %3704 = vmatprep.subr.mxu0 0.0
    %3705 = vmatpush2.msra.mxu0 0.0
    %3706 = vmatprep.subr.mxu0 0.0
    %3707 = vmatpush2.msra.mxu0 0.0
    %3708 = vmatprep.subr.mxu0 0.0
    %3709 = vmatpush2.msra.mxu0 0.0
    %3710 = vmatprep.subr.mxu0 0.0
    %3711 = vmatpush2.msra.mxu0 0.0
    %3712 = vmatprep.subr.mxu0 0.0
    %3713 = vmatpush2.msra.mxu0 0.0
    %3714 = vmatprep.subr.mxu0 0.0
    %3715 = vmatpush2.msra.mxu0 0.0
    %3716 = vmatprep.mubr.f32.mxu0 0.0
    %3717 = vmatmul.mubr.f32.gmra.mxu0 %v3650
    %v3718 = vpop.f32.mrf.mxu0
    %v3719 = vadd.f32 0.0, %v3718
    %v3720 = vpop.f32.mrf.mxu0
    %3721 = vdwg.mxu0
    %3722 = vrot.lane.b32.xlu0 %v3145, 64
    %v3723 = vpop.permute.xlu0 %3722
    %v3726 = vsel %vm460, %v3493, 0
    %3728 = vmatprep.subr.mxu0 0.0
    %3729 = vmatpush1.msra.mxu0 0.0
    %3730 = vmatprep.subr.mxu0 0.0
    %3731 = vmatpush1.msra.mxu0 0.0
    %3732 = vmatprep.subr.mxu0 0.0
    %3733 = vmatpush1.msra.mxu0 0.0
    %3734 = vmatprep.subr.mxu0 0.0
    %3735 = vmatpush1.msra.mxu0 0.0
    %3736 = vmatprep.subr.mxu0 0.0
    %3737 = vmatpush1.msra.mxu0 0.0
    %3738 = vmatprep.subr.mxu0 0.0
    %3739 = vmatpush1.msra.mxu0 0.0
    %3740 = vmatprep.subr.mxu0 0.0
    %3741 = vmatpush1.msra.mxu0 0.0
    %3742 = vmatprep.subr.mxu0 0.0
    %3743 = vmatpush1.msra.mxu0 0.0
    %3744 = vmatprep.subr.mxu0 0.0
    %3745 = vmatpush1.msra.mxu0 0.0
    %3746 = vmatprep.subr.mxu0 0.0
    %3747 = vmatpush1.msra.mxu0 0.0
    %3748 = vmatprep.subr.mxu0 0.0
    %3749 = vmatpush1.msra.mxu0 0.0
    %3750 = vmatprep.subr.mxu0 0.0
    %3751 = vmatpush1.msra.mxu0 0.0
    %3752 = vmatprep.subr.mxu0 0.0
    %3753 = vmatpush1.msra.mxu0 0.0
    %3754 = vmatprep.subr.mxu0 0.0
    %3755 = vmatpush1.msra.mxu0 0.0
    %3756 = vmatprep.subr.mxu0 0.0
    %3757 = vmatpush1.msra.mxu0 0.0
    %3758 = vmatprep.subr.mxu0 0.0
    %3759 = vmatpush1.msra.mxu0 %v3723
    %3760 = vmatprep.subr.mxu0 0.0
    %3761 = vmatpush2.msra.mxu0 0.0
    %3762 = vmatprep.subr.mxu0 0.0
    %3763 = vmatpush2.msra.mxu0 0.0
    %3764 = vmatprep.subr.mxu0 0.0
    %3765 = vmatpush2.msra.mxu0 0.0
    %3766 = vmatprep.subr.mxu0 0.0
    %3767 = vmatpush2.msra.mxu0 0.0
    %3768 = vmatprep.subr.mxu0 0.0
    %3769 = vmatpush2.msra.mxu0 0.0
    %3770 = vmatprep.subr.mxu0 0.0
    %3771 = vmatpush2.msra.mxu0 0.0
    %3772 = vmatprep.subr.mxu0 0.0
    %3773 = vmatpush2.msra.mxu0 0.0
    %3774 = vmatprep.subr.mxu0 0.0
    %3775 = vmatpush2.msra.mxu0 0.0
    %3776 = vmatprep.subr.mxu0 0.0
    %3777 = vmatpush2.msra.mxu0 0.0
    %3778 = vmatprep.subr.mxu0 0.0
    %3779 = vmatpush2.msra.mxu0 0.0
    %3780 = vmatprep.subr.mxu0 0.0
    %3781 = vmatpush2.msra.mxu0 0.0
    %3782 = vmatprep.subr.mxu0 0.0
    %3783 = vmatpush2.msra.mxu0 0.0
    %3784 = vmatprep.subr.mxu0 0.0
    %3785 = vmatpush2.msra.mxu0 0.0
    %3786 = vmatprep.subr.mxu0 0.0
    %3787 = vmatpush2.msra.mxu0 0.0
    %3788 = vmatprep.subr.mxu0 0.0
    %3789 = vmatpush2.msra.mxu0 0.0
    %3790 = vmatprep.subr.mxu0 0.0
    %3791 = vmatpush2.msra.mxu0 0.0
    %3792 = vmatprep.mubr.f32.mxu0 0.0
    %3793 = vmatmul.mubr.f32.gmra.mxu0 %v3726
    %v3794 = vpop.f32.mrf.mxu0
    %v3795 = vadd.f32 0.0, %v3794
    %v3796 = vpop.f32.mrf.mxu0
    %3797 = vdwg.mxu0
    %3800 = vrot.lane.b32.xlu0 %v3719, 16
    %v3801 = vpop.permute.xlu0 %3800
    %3802 = vrot.lane.b32.xlu0 %v3795, 16
    %v3803 = vpop.permute.xlu0 %3802
    %v3806 = vsel %vm157, %v3567, %v3801
    %v3807 = vsel %vm157, %v3643, %v3803
    %3812 = vrot.lane.b32.xlu0 %v3035, 32
    %v3813 = vpop.permute.xlu0 %3812
    %3814 = vrot.lane.b32.xlu0 %v3036, 32
    %v3815 = vpop.permute.xlu0 %3814
    %3816 = vrot.lane.b32.xlu0 %v3037, 32
    %v3817 = vpop.permute.xlu0 %3816
    %3818 = vrot.lane.b32.xlu0 %v3038, 32
    %v3819 = vpop.permute.xlu0 %3818
    %3825 = vrot.lane.b32.xlu0 %v3042, 32
    %v3826 = vpop.permute.xlu0 %3825
    %v3829 = vsel %vm67, %v3806, 0
    %v3832 = vsel %vm67, %v3807, 0
    %3834 = vmatprep.subr.mxu0 0.0
    %3835 = vmatpush1.msra.mxu0 0.0
    %3836 = vmatprep.subr.mxu0 0.0
    %3837 = vmatpush1.msra.mxu0 0.0
    %3838 = vmatprep.subr.mxu0 0.0
    %3839 = vmatpush1.msra.mxu0 0.0
    %3840 = vmatprep.subr.mxu0 0.0
    %3841 = vmatpush1.msra.mxu0 0.0
    %3842 = vmatprep.subr.mxu0 0.0
    %3843 = vmatpush1.msra.mxu0 0.0
    %3844 = vmatprep.subr.mxu0 0.0
    %3845 = vmatpush1.msra.mxu0 0.0
    %3846 = vmatprep.subr.mxu0 0.0
    %3847 = vmatpush1.msra.mxu0 0.0
    %3848 = vmatprep.subr.mxu0 0.0
    %3849 = vmatpush1.msra.mxu0 0.0
    %3850 = vmatprep.subr.mxu0 0.0
    %3851 = vmatpush1.msra.mxu0 0.0
    %3852 = vmatprep.subr.mxu0 0.0
    %3853 = vmatpush1.msra.mxu0 0.0
    %3854 = vmatprep.subr.mxu0 0.0
    %3855 = vmatpush1.msra.mxu0 0.0
    %3856 = vmatprep.subr.mxu0 0.0
    %3857 = vmatpush1.msra.mxu0 0.0
    %3858 = vmatprep.subr.mxu0 0.0
    %3859 = vmatpush1.msra.mxu0 %v3819
    %3860 = vmatprep.subr.mxu0 0.0
    %3861 = vmatpush1.msra.mxu0 %v3817
    %3862 = vmatprep.subr.mxu0 0.0
    %3863 = vmatpush1.msra.mxu0 %v3815
    %3864 = vmatprep.subr.mxu0 0.0
    %3865 = vmatpush1.msra.mxu0 %v3813
    %3866 = vmatprep.subr.mxu0 0.0
    %3867 = vmatpush2.msra.mxu0 0.0
    %3868 = vmatprep.subr.mxu0 0.0
    %3869 = vmatpush2.msra.mxu0 0.0
    %3870 = vmatprep.subr.mxu0 0.0
    %3871 = vmatpush2.msra.mxu0 0.0
    %3872 = vmatprep.subr.mxu0 0.0
    %3873 = vmatpush2.msra.mxu0 0.0
    %3874 = vmatprep.subr.mxu0 0.0
    %3875 = vmatpush2.msra.mxu0 0.0
    %3876 = vmatprep.subr.mxu0 0.0
    %3877 = vmatpush2.msra.mxu0 0.0
    %3878 = vmatprep.subr.mxu0 0.0
    %3879 = vmatpush2.msra.mxu0 0.0
    %3880 = vmatprep.subr.mxu0 0.0
    %3881 = vmatpush2.msra.mxu0 0.0
    %3882 = vmatprep.subr.mxu0 0.0
    %3883 = vmatpush2.msra.mxu0 0.0
    %3884 = vmatprep.subr.mxu0 0.0
    %3885 = vmatpush2.msra.mxu0 0.0
    %3886 = vmatprep.subr.mxu0 0.0
    %3887 = vmatpush2.msra.mxu0 0.0
    %3888 = vmatprep.subr.mxu0 0.0
    %3889 = vmatpush2.msra.mxu0 0.0
    %3890 = vmatprep.subr.mxu0 0.0
    %3891 = vmatpush2.msra.mxu0 0.0
    %3892 = vmatprep.subr.mxu0 0.0
    %3893 = vmatpush2.msra.mxu0 0.0
    %3894 = vmatprep.subr.mxu0 0.0
    %3895 = vmatpush2.msra.mxu0 0.0
    %3896 = vmatprep.subr.mxu0 0.0
    %3897 = vmatpush2.msra.mxu0 0.0
    %3898 = vmatprep.mubr.f32.mxu0 0.0
    %3899 = vmatmul.mubr.f32.gmra.mxu0 %v3829
    %v3900 = vpop.f32.mrf.mxu0
    %v3901 = vadd.f32 %v3826, %v3900
    %v3902 = vpop.f32.mrf.mxu0
    %3903 = vmatprep.mubr.f32.mxu0 0.0
    %3904 = vmatmul.mubr.f32.gmra.mxu0 %v3832
    %v3905 = vpop.f32.mrf.mxu0
    %v3906 = vadd.f32 %v3826, %v3905
    %v3907 = vpop.f32.mrf.mxu0
    %3908 = vdwg.mxu0
    %v3909 = vadd.f32 %v3032, %v3901
    %v3910 = vadd.f32 %v3033, %v3906
    %v3911 = vld [vmem:[%s2101 + $0x4] sm:$0x1]
    %v3912 = vld [vmem:[%s2101 + $0x7] sm:$0x1]
    %v3913 = vsel %vm67, %v3909, 0.0
    %v3914 = vsel %vm67, %v3910, 0.0
    %v3915 = vadd.f32 %v3913, %v3914
    %3916 = vadd.xlane.f32.xlu0 %v3915
    %v3917 = vpop.xlane.xlu0 %3916
    %v3918 = vrot.slane %v3917, 4
    %v3919 = vadd.f32 %v3917, %v3918
    %v3920 = vrot.slane %v3919, 2
    %v3921 = vadd.f32 %v3919, %v3920
    %v3922 = vrot.slane %v3921, 1
    %v3923 = vadd.f32 %v3921, %v3922
    %s3924 = vtos %v3923
    %v3925 = vmul.f32 %v3909, %v3909
    %v3926 = vmul.f32 %v3910, %v3910
    %v3927 = vsel %vm67, %v3925, 0.0
    %v3928 = vsel %vm67, %v3926, 0.0
    %v3929 = vadd.f32 %v3927, %v3928
    %3930 = vadd.xlane.f32.xlu0 %v3929
    %v3931 = vpop.xlane.xlu0 %3930
    %v3932 = vrot.slane %v3931, 4
    %v3933 = vadd.f32 %v3931, %v3932
    %v3934 = vrot.slane %v3933, 2
    %v3935 = vadd.f32 %v3933, %v3934
    %v3936 = vrot.slane %v3935, 1
    %v3937 = vadd.f32 %v3935, %v3936
    %s3938 = vtos %v3937
    %v3939 = vrcp.pop 512.0
    %s3940 = vtos %v3939
    %s3941 = smul.f32 %s3924, %s3940
    %s3942 = smul.f32 %s3924, %s3941
    %s3943 = ssub.f32 %s3938, %s3942
    %v3944 = vrcp.pop 511.0
    %s3945 = vtos %v3944
    %s3946 = smul.f32 %s3943, %s3945
    %s3947 = smax.f32 %s3946, 0.0
    %v3948 = vstv %s3947
    %v3949 = vrsqrt.pop %v3948
    %v3950 = vmul.f32 %v3948, %v3949
    %vm3951 = vcmp.eq.f32.partialorder %v3948, inf
    %v3952 = vsel %vm3951, %v3948, %v3950
    %vm3953 = vcmp.eq.f32.partialorder %v3948, 0.0
    %v3954 = vand.u32 %v3948, 2147483648
    %v3955 = vsel %vm3953, %v3954, %v3952
    %s3956 = vtos %v3955
    %s3957 = sadd.f32 %s3956, 1e-06
    %v3958 = vstv %s3957
    %v3959 = vrcp.pop %v3958
    %s3960 = vtos %v3959
    %v3961 = vstv %s3941
    %v3962 = vsub.f32 %v3909, %v3961
    %v3963 = vsub.f32 %v3910, %v3961
    %v3964 = vstv %s3960
    %v3965 = vmul.f32 %v3962, %v3964
    %v3966 = vmul.f32 %v3963, %v3964
    %v3967 = vlaneseq
    %v3968 = vshrl.u32 %v3967, 7
    %v3969 = vsub.s32 0, %v3968
    %v3970 = vrot.slane %v3911, %v3969
    %v3971 = vmul.f32 %v3970, %v3965
    %v3972 = vmul.f32 %v3970, %v3966
    %v3973 = vlaneseq
    %v3974 = vshrl.u32 %v3973, 7
    %v3975 = vsub.s32 0, %v3974
    %v3976 = vrot.slane %v3912, %v3975
    %v3977 = vadd.f32 %v3971, %v3976
    %v3978 = vadd.f32 %v3972, %v3976
    %s3979 = scalar_lea.vmem [#allocation5], 160
    %v3980 = vld [vmem:[%s3979] sm:$0xff]
    %v3981 = vld [vmem:[%s3979 + $0x8] sm:$0xff]
    %v3982 = vld [vmem:[%s3979 + $0x10] sm:$0xff]
    %v3983 = vld [vmem:[%s3979 + $0x18] sm:$0xff]
    %v3984 = vlaneseq
    %v3985 = vshrl.u32 %v3984, 7
    %v3986 = vsub.s32 0, %v3985
    %v3987 = vrot.slane %v2104, %v3986
    %v3989 = vsel %vm67, %v3901, 0
    %v3992 = vsel %vm67, %v3906, 0
    %3994 = vmatprep.subr.mxu0 0.0
    %3995 = vmatpush1.msra.mxu0 0.0
    %3996 = vmatprep.subr.mxu0 0.0
    %3997 = vmatpush1.msra.mxu0 0.0
    %3998 = vmatprep.subr.mxu0 0.0
    %3999 = vmatpush1.msra.mxu0 0.0
    %4000 = vmatprep.subr.mxu0 0.0
    %4001 = vmatpush1.msra.mxu0 0.0
    %4002 = vmatprep.subr.mxu0 0.0
    %4003 = vmatpush1.msra.mxu0 0.0
    %4004 = vmatprep.subr.mxu0 0.0
    %4005 = vmatpush1.msra.mxu0 0.0
    %4006 = vmatprep.subr.mxu0 0.0
    %4007 = vmatpush1.msra.mxu0 0.0
    %4008 = vmatprep.subr.mxu0 0.0
    %4009 = vmatpush1.msra.mxu0 0.0
    %4010 = vmatprep.subr.mxu0 0.0
    %4011 = vmatpush1.msra.mxu0 0.0
    %4012 = vmatprep.subr.mxu0 0.0
    %4013 = vmatpush1.msra.mxu0 0.0
    %4014 = vmatprep.subr.mxu0 0.0
    %4015 = vmatpush1.msra.mxu0 0.0
    %4016 = vmatprep.subr.mxu0 0.0
    %4017 = vmatpush1.msra.mxu0 0.0
    %4018 = vmatprep.subr.mxu0 0.0
    %4019 = vmatpush1.msra.mxu0 %v3983
    %4020 = vmatprep.subr.mxu0 0.0
    %4021 = vmatpush1.msra.mxu0 %v3982
    %4022 = vmatprep.subr.mxu0 0.0
    %4023 = vmatpush1.msra.mxu0 %v3981
    %4024 = vmatprep.subr.mxu0 0.0
    %4025 = vmatpush1.msra.mxu0 %v3980
    %4026 = vmatprep.subr.mxu0 0.0
    %4027 = vmatpush2.msra.mxu0 0.0
    %4028 = vmatprep.subr.mxu0 0.0
    %4029 = vmatpush2.msra.mxu0 0.0
    %4030 = vmatprep.subr.mxu0 0.0
    %4031 = vmatpush2.msra.mxu0 0.0
    %4032 = vmatprep.subr.mxu0 0.0
    %4033 = vmatpush2.msra.mxu0 0.0
    %4034 = vmatprep.subr.mxu0 0.0
    %4035 = vmatpush2.msra.mxu0 0.0
    %4036 = vmatprep.subr.mxu0 0.0
    %4037 = vmatpush2.msra.mxu0 0.0
    %4038 = vmatprep.subr.mxu0 0.0
    %4039 = vmatpush2.msra.mxu0 0.0
    %4040 = vmatprep.subr.mxu0 0.0
    %4041 = vmatpush2.msra.mxu0 0.0
    %4042 = vmatprep.subr.mxu0 0.0
    %4043 = vmatpush2.msra.mxu0 0.0
    %4044 = vmatprep.subr.mxu0 0.0
    %4045 = vmatpush2.msra.mxu0 0.0
    %4046 = vmatprep.subr.mxu0 0.0
    %4047 = vmatpush2.msra.mxu0 0.0
    %4048 = vmatprep.subr.mxu0 0.0
    %4049 = vmatpush2.msra.mxu0 0.0
    %4050 = vmatprep.subr.mxu0 0.0
    %4051 = vmatpush2.msra.mxu0 0.0
    %4052 = vmatprep.subr.mxu0 0.0
    %4053 = vmatpush2.msra.mxu0 0.0
    %4054 = vmatprep.subr.mxu0 0.0
    %4055 = vmatpush2.msra.mxu0 0.0
    %4056 = vmatprep.subr.mxu0 0.0
    %4057 = vmatpush2.msra.mxu0 0.0
    %4058 = vmatprep.mubr.f32.mxu0 0.0
    %4059 = vmatmul.mubr.f32.gmra.mxu0 %v3989
    %v4060 = vpop.f32.mrf.mxu0
    %v4061 = vadd.f32 %v3987, %v4060
    %v4062 = vpop.f32.mrf.mxu0
    %4063 = vmatprep.mubr.f32.mxu0 0.0
    %4064 = vmatmul.mubr.f32.gmra.mxu0 %v3992
    %v4065 = vpop.f32.mrf.mxu0
    %v4066 = vadd.f32 %v3987, %v4065
    %v4067 = vpop.f32.mrf.mxu0
    %4068 = vdwg.mxu0
    %v4069 = vadd.f32 %v3977, %v4061
    %v4070 = vadd.f32 %v3978, %v4066
    %v4071 = vld [vmem:[%s2101 + $0x5] sm:$0x1]
    %v4072 = vld [vmem:[%s2101 + $0x8] sm:$0x1]
    %v4073 = vsel %vm67, %v4069, 0.0
    %v4074 = vsel %vm67, %v4070, 0.0
    %v4075 = vadd.f32 %v4073, %v4074
    %4076 = vadd.xlane.f32.xlu0 %v4075
    %v4077 = vpop.xlane.xlu0 %4076
    %v4078 = vrot.slane %v4077, 4
    %v4079 = vadd.f32 %v4077, %v4078
    %v4080 = vrot.slane %v4079, 2
    %v4081 = vadd.f32 %v4079, %v4080
    %v4082 = vrot.slane %v4081, 1
    %v4083 = vadd.f32 %v4081, %v4082
    %s4084 = vtos %v4083
    %v4085 = vmul.f32 %v4069, %v4069
    %v4086 = vmul.f32 %v4070, %v4070
    %v4087 = vsel %vm67, %v4085, 0.0
    %v4088 = vsel %vm67, %v4086, 0.0
    %v4089 = vadd.f32 %v4087, %v4088
    %4090 = vadd.xlane.f32.xlu0 %v4089
    %v4091 = vpop.xlane.xlu0 %4090
    %v4092 = vrot.slane %v4091, 4
    %v4093 = vadd.f32 %v4091, %v4092
    %v4094 = vrot.slane %v4093, 2
    %v4095 = vadd.f32 %v4093, %v4094
    %v4096 = vrot.slane %v4095, 1
    %v4097 = vadd.f32 %v4095, %v4096
    %s4098 = vtos %v4097
    %v4099 = vrcp.pop 512.0
    %s4100 = vtos %v4099
    %s4101 = smul.f32 %s4084, %s4100
    %s4102 = smul.f32 %s4084, %s4101
    %s4103 = ssub.f32 %s4098, %s4102
    %v4104 = vrcp.pop 511.0
    %s4105 = vtos %v4104
    %s4106 = smul.f32 %s4103, %s4105
    %s4107 = smax.f32 %s4106, 0.0
    %v4108 = vstv %s4107
    %v4109 = vrsqrt.pop %v4108
    %v4110 = vmul.f32 %v4108, %v4109
    %vm4111 = vcmp.eq.f32.partialorder %v4108, inf
    %v4112 = vsel %vm4111, %v4108, %v4110
    %vm4113 = vcmp.eq.f32.partialorder %v4108, 0.0
    %v4114 = vand.u32 %v4108, 2147483648
    %v4115 = vsel %vm4113, %v4114, %v4112
    %s4116 = vtos %v4115
    %s4117 = sadd.f32 %s4116, 1e-06
    %v4118 = vstv %s4117
    %v4119 = vrcp.pop %v4118
    %s4120 = vtos %v4119
    %v4121 = vstv %s4101
    %v4122 = vsub.f32 %v4069, %v4121
    %v4123 = vsub.f32 %v4070, %v4121
    %v4124 = vstv %s4120
    %v4125 = vmul.f32 %v4122, %v4124
    %v4126 = vmul.f32 %v4123, %v4124
    %v4127 = vlaneseq
    %v4128 = vshrl.u32 %v4127, 7
    %v4129 = vsub.s32 0, %v4128
    %v4130 = vrot.slane %v4071, %v4129
    %v4131 = vmul.f32 %v4130, %v4125
    %v4132 = vmul.f32 %v4130, %v4126
    %v4133 = vlaneseq
    %v4134 = vshrl.u32 %v4133, 7
    %v4135 = vsub.s32 0, %v4134
    %v4136 = vrot.slane %v4072, %v4135
    %v4137 = vadd.f32 %v4131, %v4136
    %v4138 = vadd.f32 %v4132, %v4136
    %4139 = vst.msk [vmem:[#allocation7] sm:$0xff] %vm67, %v4137
    %4140 = vst.msk [vmem:[#allocation7 + $0x8] sm:$0xff] %vm67, %v4138
    // Predicated region
    $region30: #{transformer_decoder_forward.1} parent=1 // pred_check
      _
    $region31: #{transformer_decoder_forward.1} parent=1 // pred_check_branch
      %4142 = sbr.rel (0) target = $region33
    $region32: #{transformer_decoder_forward.1} parent=1 // pred_region
      %s4144 = ssub.s32 256, 256
      %4145 = vsyncadd [#allocation4], %s4144
      %s4146 = sshll.u32 [#allocation7], 4
      %s4147 = int_to_ptr.vmem [resolvable:$true] %s4146
      %4152 = dma.vmem_to_hbm [thread:$0]  %s4147, 256, %s5, [#allocation4], 128, 128, 8
    $region33: #{transformer_decoder_forward.1} parent=1 // pred_fallthru
      _
    // Predicated region
    $region34: #{transformer_decoder_forward.1} parent=1 // pred_check
      _
    $region35: #{transformer_decoder_forward.1} parent=1 // pred_check_branch
      %4154 = sbr.rel (0) target = $region37
    $region36: #{transformer_decoder_forward.1} parent=1 // pred_region
      %4155 = dma.done [#allocation4], 256
    $region37: #{transformer_decoder_forward.1} parent=1 // pred_fallthru
      _
    %4156 = vsyncpa [#allocation3], 1
    %4157 = vsyncpa [#allocation6], 1
    %4158 = vsyncpa [#allocation4], 1

</llo_original>
